<compile_context>
chip_gen: v7x
topology: tpu7x:2x2x1
jax: 0.10.0
libtpu: 0.0.40
codegen_flags: <defaults>
</compile_context>

<pallas_src>
import functools

import jax
import jax.numpy as jnp
from jax.experimental import pallas as pl
from jax.experimental.pallas import tpu as pltpu

_VMEM_LIMIT = 48 * 1024 * 1024  # explicit scoped-VMEM budget, safe on v5e/v6e/v7x


def _pick_tile(n, preferred, mult=8):
    """Largest tile <= preferred that divides n and is a multiple of `mult` (else n)."""
    if n <= preferred:
        return n
    t = preferred - (preferred % mult)
    while t >= mult:
        if n % t == 0:
            return t
        t -= mult
    return n


# ----------------------------------------------------------------------------
# Fused multi-head attention + AddAndNorm kernel
# ----------------------------------------------------------------------------

def _mha_addnorm_kernel(*refs, n_head, d_qk, d_v, eps, need_attn, res_is_q):
    bf16 = jnp.bfloat16
    f32 = jnp.float32
    n_qk = n_head * d_qk

    idx = 0
    q_in_ref = refs[idx]; idx += 1
    kv_ref = refs[idx]; idx += 1
    mask_ref = refs[idx]; idx += 1
    if res_is_q:
        res_ref = q_in_ref
    else:
        res_ref = refs[idx]; idx += 1
    (wq_ref, bq_ref, wkv_ref, bkv_ref,
     wo_ref, bo_ref, g_ref, beta_ref) = refs[idx:idx + 8]
    idx += 8
    attn_ref = None
    if need_attn:
        attn_ref = refs[idx]; idx += 1
    aan_ref = refs[idx]; idx += 1
    k_scr, v_scr = refs[idx:idx + 2]

    # ---- K/V projection: once per batch row (qi == 0), cached in bf16 scratch.
    @pl.when(pl.program_id(1) == 0)
    def _():
        kv_in = kv_ref[0].astype(bf16)                               # (Lk, D)
        kvp = jnp.dot(kv_in, wkv_ref[...],
                      preferred_element_type=f32) + bkv_ref[...]     # (Lk, nqk+nv)
        k_scr[...] = kvp[:, :n_qk].astype(bf16)
        v_scr[...] = kvp[:, n_qk:].astype(bf16)

    # ---- Q projection for this query tile (scale already folded into wq/bq).
    x = q_in_ref[0]                                                  # (tq, D)
    q = jnp.dot(x.astype(bf16), wq_ref[...],
                preferred_element_type=f32) + bq_ref[...]            # (tq, nqk)

    keep = mask_ref[0] > 0.0                                         # (tq, Lk)
    k_all = k_scr[...]                                               # (Lk, nqk) bf16
    v_all = v_scr[...]                                               # (Lk, nv)  bf16
    wo_all = wo_ref[...]                                             # (nv, D)   bf16
    neg = jnp.float32(-1e9)

    # ---- Per-head attention with per-head output-projection accumulation
    # (no head concat -> no narrow masked stores / relayout).
    # TODO(synk): for long Lk on v7x, stream K/V tiles with flash-style online
    # softmax instead of holding the full projected K/V in scratch.
    acc = None
    for h in range(n_head):
        qh = q[:, h * d_qk:(h + 1) * d_qk].astype(bf16)              # (tq, dqk)
        kh = k_all[:, h * d_qk:(h + 1) * d_qk]                       # (Lk, dqk)
        vh = v_all[:, h * d_v:(h + 1) * d_v]                         # (Lk, dv)

        s = jax.lax.dot_general(qh, kh, (((1,), (1,)), ((), ())),
                                preferred_element_type=f32)          # (tq, Lk)
        s = jnp.where(keep, s, neg)
        s_max = jnp.max(s, axis=-1, keepdims=True)
        p = jnp.exp(s - s_max)
        denom = jnp.sum(p, axis=-1, keepdims=True)
        p = p * pl.reciprocal(denom, approx=True)                    # EUP divide

        ctx_h = jnp.dot(p.astype(bf16), vh,
                        preferred_element_type=f32)                  # (tq, dv)
        part = jnp.dot(ctx_h.astype(bf16),
                       wo_all[h * d_v:(h + 1) * d_v, :],
                       preferred_element_type=f32)                   # (tq, D)
        acc = part if acc is None else acc + part

    attn = acc + bo_ref[...]                                         # (tq, D) f32
    if attn_ref is not None:
        attn_ref[0] = attn.astype(jnp.bfloat16)

    # ---- AddAndNorm epilogue (dropout = identity, eval mode).
    z = res_ref[0].astype(f32) + attn
    mean = jnp.mean(z, axis=-1, keepdims=True)
    diff = z - mean
    var = jnp.mean(diff * diff, axis=-1, keepdims=True)
    aan_ref[0] = diff * jax.lax.rsqrt(var + eps) * g_ref[...] + beta_ref[...]


def fused_mha_addnorm(q_in, kv_in, mask, residual, p, gamma, beta,
                      n_head, d_qk, d_v, eps=1e-5, need_attn=True):
    """residual=None means residual == q_in (aliased, single DMA).

    Returns (attn_bf16, aan_f32) if need_attn else aan_f32."""
    B, Lq, D = q_in.shape
    Lk = kv_in.shape[1]
    tq = _pick_tile(Lq, 256)
    assert Lq % tq == 0

    n_qk = n_head * d_qk
    n_v = n_head * d_v
    res_is_q = residual is None

    # ---- specs / inputs -----------------------------------------------------
    in_specs = [
        pl.BlockSpec((1, tq, D), lambda b, qi: (b, qi, 0)),      # query input
        pl.BlockSpec((1, Lk, D), lambda b, qi: (b, 0, 0)),       # key/value input
        pl.BlockSpec((1, tq, Lk), lambda b, qi: (b, qi, 0)),     # mask (0/1)
    ]
    inputs = [q_in, kv_in, mask]
    if not res_is_q:
        in_specs.append(pl.BlockSpec((1, tq, D), lambda b, qi: (b, qi, 0)))
        inputs.append(residual)
    # TODO(synk): weight/bias blocks below are constant-index; single-buffering
    # them (pipeline_mode=pl.Buffered(1)) would reclaim their second VMEM buffer.
    in_specs += [
        pl.BlockSpec((D, n_qk), lambda b, qi: (0, 0)),           # wq (bf16, scaled)
        pl.BlockSpec((1, n_qk), lambda b, qi: (0, 0)),           # bq
        pl.BlockSpec((D, n_qk + n_v), lambda b, qi: (0, 0)),     # wkv (bf16)
        pl.BlockSpec((1, n_qk + n_v), lambda b, qi: (0, 0)),     # bkv
        pl.BlockSpec((n_v, D), lambda b, qi: (0, 0)),            # wo (bf16)
        pl.BlockSpec((1, D), lambda b, qi: (0, 0)),              # bo
        pl.BlockSpec((1, D), lambda b, qi: (0, 0)),              # gamma
        pl.BlockSpec((1, D), lambda b, qi: (0, 0)),              # beta
    ]
    inputs += [p["wq"], p["bq"], p["wkv"], p["bkv"], p["wo"], p["bo"],
               gamma, beta]

    out_shapes = []
    out_specs = []
    if need_attn:
        out_shapes.append(jax.ShapeDtypeStruct((B, Lq, D), jnp.bfloat16))
        out_specs.append(pl.BlockSpec((1, tq, D), lambda b, qi: (b, qi, 0)))
    out_shapes.append(jax.ShapeDtypeStruct((B, Lq, D), jnp.float32))
    out_specs.append(pl.BlockSpec((1, tq, D), lambda b, qi: (b, qi, 0)))

    flops = int(2 * B * (Lq * D * n_qk + Lk * D * (n_qk + n_v)
                         + n_head * Lq * Lk * (d_qk + d_v) + Lq * n_v * D))
    bytes_accessed = int(
        q_in.size * q_in.dtype.itemsize + kv_in.size * kv_in.dtype.itemsize
        + mask.size * mask.dtype.itemsize
        + (0 if res_is_q else residual.size * residual.dtype.itemsize)
        + 2 * (p["wq"].size + p["wkv"].size + p["wo"].size)
        + (2 * B * Lq * D if need_attn else 0) + 4 * B * Lq * D)

    kernel = functools.partial(_mha_addnorm_kernel, n_head=n_head, d_qk=d_qk,
                               d_v=d_v, eps=eps, need_attn=need_attn,
                               res_is_q=res_is_q)

    result = pl.pallas_call(
        kernel,
        out_shape=tuple(out_shapes),
        grid=(B, Lq // tq),
        in_specs=in_specs,
        out_specs=tuple(out_specs),
        scratch_shapes=[pltpu.VMEM((Lk, n_qk), jnp.bfloat16),   # projected K
                        pltpu.VMEM((Lk, n_v), jnp.bfloat16)],   # projected V
        compiler_params=pltpu.CompilerParams(
            dimension_semantics=("parallel", "arbitrary"),
            vmem_limit_bytes=_VMEM_LIMIT),
        cost_estimate=pl.CostEstimate(flops=flops,
                                      transcendentals=int(B * n_head * Lq * Lk),
                                      bytes_accessed=bytes_accessed),
    )(*inputs)

    if need_attn:
        attn, aan = result
        return attn, aan
    return result[0] if isinstance(result, (tuple, list)) else result


# ----------------------------------------------------------------------------
# Fused feed-forward + AddAndNorm kernel (d_inner contraction tiled)
# ----------------------------------------------------------------------------

def _ffn_addnorm_kernel(x_ref, w1_ref, b1_ref, w2_ref, b2_ref, g_ref, beta_ref,
                        o_ref, acc_ref, *, eps):
    bf16 = jnp.bfloat16
    f32 = jnp.float32
    ki = pl.program_id(1)

    @pl.when(ki == 0)
    def _():
        acc_ref[...] = jnp.zeros_like(acc_ref)

    x = x_ref[...]                                                   # (tm, D) f32
    h = jnp.dot(x.astype(bf16), w1_ref[...],
                preferred_element_type=f32) + b1_ref[...]            # (tm, tdh)
    h = jnp.maximum(h, 0.0)
    acc_ref[...] += jnp.dot(h.astype(bf16), w2_ref[...],
                            preferred_element_type=f32)              # (tm, D)

    @pl.when(ki == pl.num_programs(1) - 1)
    def _():
        z = x + acc_ref[...] + b2_ref[...]                           # residual add
        mean = jnp.mean(z, axis=-1, keepdims=True)
        diff = z - mean
        var = jnp.mean(diff * diff, axis=-1, keepdims=True)
        o_ref[...] = diff * jax.lax.rsqrt(var + eps) * g_ref[...] + beta_ref[...]


def fused_ffn_addnorm(x2d, w1, b1, w2, b2, gamma, beta, eps=1e-5):
    M, D = x2d.shape
    Dh = w1.shape[1]
    tm = _pick_tile(M, 512)
    tdh = _pick_tile(Dh, 512, mult=128)   # lane-dim tile: multiple of 128 or full
    assert M % tm == 0 and Dh % tdh == 0

    flops = int(4 * M * D * Dh)
    bytes_accessed = int(4 * (2 * M * D) + 2 * (w1.size + w2.size))

    return pl.pallas_call(
        functools.partial(_ffn_addnorm_kernel, eps=eps),
        out_shape=jax.ShapeDtypeStruct((M, D), jnp.float32),
        grid=(M // tm, Dh // tdh),
        in_specs=[
            pl.BlockSpec((tm, D), lambda i, k: (i, 0)),      # x (constant over k)
            pl.BlockSpec((D, tdh), lambda i, k: (0, k)),     # w1 k-tile (bf16)
            pl.BlockSpec((1, tdh), lambda i, k: (0, k)),     # b1 k-tile
            pl.BlockSpec((tdh, D), lambda i, k: (k, 0)),     # w2 k-tile (bf16)
            pl.BlockSpec((1, D), lambda i, k: (0, 0)),       # b2
            pl.BlockSpec((1, D), lambda i, k: (0, 0)),       # gamma
            pl.BlockSpec((1, D), lambda i, k: (0, 0)),       # beta
        ],
        out_specs=pl.BlockSpec((tm, D), lambda i, k: (i, 0)),
        scratch_shapes=[pltpu.VMEM((tm, D), jnp.float32)],
        compiler_params=pltpu.CompilerParams(
            dimension_semantics=("parallel", "arbitrary"),
            vmem_limit_bytes=_VMEM_LIMIT),
        cost_estimate=pl.CostEstimate(flops=flops, transcendentals=0,
                                      bytes_accessed=bytes_accessed),
    )(x2d, w1, b1, w2, b2, gamma, beta)


# ----------------------------------------------------------------------------
# Decoder layer forward (3 fused pallas_calls)
# ----------------------------------------------------------------------------

def decoder_layer_forward(params, x, encoder_output, encoder_mask, decoder_mask,
                          n_head, d_q, d_k, d_v):
    assert d_q == d_k, "query/key head dims must match for attention"
    B, Lq, D = x.shape

    # Masked self-attention + AddAndNorm_1.  query == kv == residual == x, so
    # the residual DMA is aliased onto the query input (residual=None).
    mmha, aan1 = fused_mha_addnorm(x, x, decoder_mask, None,
                                   params["attn1"], params["ln1_g"], params["ln1_b"],
                                   n_head, d_k, d_v, need_attn=True)

    # Cross-attention (query = PRE-norm masked attention output, exactly as in
    # the reference forward) + AddAndNorm_2 (residual = aan1).  The raw
    # cross-attention output is never consumed -> skip its HBM write.
    aan2 = fused_mha_addnorm(mmha, encoder_output, encoder_mask, aan1,
                             params["attn2"], params["ln2_g"], params["ln2_b"],
                             n_head, d_k, d_v, need_attn=False)

    # Position-wise feed forward + AddAndNorm_3.
    aan3 = fused_ffn_addnorm(aan2.reshape(B * Lq, D),
                             params["ff_w1"], params["ff_b1"],
                             params["ff_w2"], params["ff_b2"],
                             params["ln3_g"], params["ln3_b"]).reshape(B, Lq, D)
    return aan3


# ----------------------------------------------------------------------------
# Parameter init: matmul weights stored bf16 ONCE (no per-call converts),
# 1/sqrt(d_k) attention scale folded into wq/bq, biases/LN params f32.
# ----------------------------------------------------------------------------

def init_params(key, d_model, d_inner, n_head, d_q, d_k, d_v):
    def lin(k, fan_in, fan_out):
        kw, kb = jax.random.split(k)
        lim = 1.0 / float(fan_in) ** 0.5
        w = jax.random.uniform(kw, (fan_in, fan_out), jnp.float32, -lim, lim)
        b = jax.random.uniform(kb, (fan_out,), jnp.float32, -lim, lim)
        return w, b

    keys = jax.random.split(key, 10)
    scale = 1.0 / float(d_k) ** 0.5

    def attn_params(k0, k1, k2, k3):
        wq, bq = lin(k0, d_model, n_head * d_q)
        wk, bk = lin(k1, d_model, n_head * d_k)
        wv, bv = lin(k2, d_model, n_head * d_v)
        wo, bo = lin(k3, n_head * d_v, d_model)
        return dict(
            wq=(wq * scale).astype(jnp.bfloat16),
            bq=(bq * scale).reshape(1, -1),
            wkv=jnp.concatenate([wk, wv], axis=1).astype(jnp.bfloat16),
            bkv=jnp.concatenate([bk, bv], axis=0).reshape(1, -1),
            wo=wo.astype(jnp.bfloat16),
            bo=bo.reshape(1, -1))

    p = {
        "attn1": attn_params(*keys[0:4]),
        "attn2": attn_params(*keys[4:8]),
        "ln1_g": jnp.ones((1, d_model), jnp.float32),
        "ln1_b": jnp.zeros((1, d_model), jnp.float32),
        "ln2_g": jnp.ones((1, d_model), jnp.float32),
        "ln2_b": jnp.zeros((1, d_model), jnp.float32),
        "ln3_g": jnp.ones((1, d_model), jnp.float32),
        "ln3_b": jnp.zeros((1, d_model), jnp.float32),
    }
    w1, b1 = lin(keys[8], d_model, d_inner)
    w2, b2 = lin(keys[9], d_inner, d_model)
    p["ff_w1"] = w1.astype(jnp.bfloat16)
    p["ff_b1"] = b1.reshape(1, -1)
    p["ff_w2"] = w2.astype(jnp.bfloat16)
    p["ff_b2"] = b2.reshape(1, -1)
    return p


# ----------------------------------------------------------------------------
# Pure-JAX reference (mirrors the PyTorch module, eval-mode dropout)
# ----------------------------------------------------------------------------

def reference_forward(params, x, enc, enc_mask, dec_mask,
                      n_head, d_q, d_k, d_v, eps=1e-5):
    f32 = jnp.float32

    def mha(q_in, kv_in, mask, pa):
        B, Lq, D = q_in.shape
        Lk = kv_in.shape[1]
        q = q_in.astype(f32) @ pa["wq"].astype(f32) + pa["bq"]
        kv = kv_in.astype(f32) @ pa["wkv"].astype(f32) + pa["bkv"]
        k = kv[..., : n_head * d_k]
        v = kv[..., n_head * d_k:]
        q = q.reshape(B, Lq, n_head, d_k).transpose(0, 2, 1, 3)
        k = k.reshape(B, Lk, n_head, d_k).transpose(0, 2, 1, 3)
        v = v.reshape(B, Lk, n_head, d_v).transpose(0, 2, 1, 3)
        s = jnp.einsum("bhqd,bhkd->bhqk", q, k)      # scale folded into wq/bq
        s = jnp.where(mask[:, None] > 0, s, -1e9)
        p = jax.nn.softmax(s, axis=-1)
        ctx = jnp.einsum("bhqk,bhkd->bhqd", p, v)
        ctx = ctx.transpose(0, 2, 1, 3).reshape(B, Lq, n_head * d_v)
        return ctx @ pa["wo"].astype(f32) + pa["bo"]

    def ln(z, g, b):
        m = z.mean(-1, keepdims=True)
        var = ((z - m) ** 2).mean(-1, keepdims=True)
        return (z - m) * jax.lax.rsqrt(var + eps) * g + b

    mmha = mha(x, x, dec_mask, params["attn1"])
    aan1 = ln(x + mmha, params["ln1_g"], params["ln1_b"])
    cross = mha(mmha, enc, enc_mask, params["attn2"])
    aan2 = ln(aan1 + cross, params["ln2_g"], params["ln2_b"])
    h = jnp.maximum(aan2 @ params["ff_w1"].astype(f32) + params["ff_b1"], 0.0)
    ffn = h @ params["ff_w2"].astype(f32) + params["ff_b2"]
    return ln(aan2 + ffn, params["ln3_g"], params["ln3_b"])


# TODO(synk): dropout (P_drop) inside AddAndNorm is eval-mode identity here; a
# training-mode version would use pltpu.prng_seed / pltpu.stateful_bernoulli in
# the fused epilogues.

if __name__ == "__main__":
    d_model, d_inner, n_head = 32, 64, 4
    d_q = d_k = d_v = 8
    B, Lq, Lk = 2, 8, 16

    key = jax.random.PRNGKey(0)
    k_par, k_x, k_enc = jax.random.split(key, 3)

    params = init_params(k_par, d_model, d_inner, n_head, d_q, d_k, d_v)

    x = jax.random.normal(k_x, (B, Lq, d_model), jnp.float32)
    encoder_output = jax.random.normal(k_enc, (B, Lk, d_model), jnp.float32)

    # decoder mask: causal; encoder mask: all ones (1.0 keep, 0.0 masked)
    decoder_mask = jnp.broadcast_to(jnp.tril(jnp.ones((Lq, Lq), jnp.float32)),
                                    (B, Lq, Lq))
    encoder_mask = jnp.ones((B, Lq, Lk), jnp.float32)

    fwd = jax.jit(functools.partial(decoder_layer_forward,
                                    n_head=n_head, d_q=d_q, d_k=d_k, d_v=d_v))
    out = jax.block_until_ready(
        fwd(params, x, encoder_output, encoder_mask, decoder_mask))

    ref = reference_forward(params, x, encoder_output, encoder_mask, decoder_mask,
                            n_head, d_q, d_k, d_v)

    assert out.shape == (B, Lq, d_model)
    assert bool(jnp.all(jnp.isfinite(out)))
    max_err = float(jnp.max(jnp.abs(out - ref)))
    assert max_err < 0.3, f"max abs error vs reference: {max_err}"
    print("KERNEL_OK")
</pallas_src>

<mosaic_0001>
module attributes {stable_mosaic.version = 11 : i64} {
  func.func @_ffn_addnorm_kernel(%arg0: i32, %arg1: i32, %arg2: memref<16x32xf32, #tpu.memory_space<vmem>>, %arg3: memref<32x64xbf16, #tpu.memory_space<vmem>>, %arg4: memref<1x64xf32, #tpu.memory_space<vmem>>, %arg5: memref<64x32xbf16, #tpu.memory_space<vmem>>, %arg6: memref<1x32xf32, #tpu.memory_space<vmem>>, %arg7: memref<1x32xf32, #tpu.memory_space<vmem>>, %arg8: memref<1x32xf32, #tpu.memory_space<vmem>>, %arg9: memref<16x32xf32, #tpu.memory_space<vmem>>, %arg10: memref<16x32xf32, #tpu.memory_space<vmem>>) attributes {dimension_semantics = [#tpu.dimension_semantics<parallel>, #tpu.dimension_semantics<arbitrary>], iteration_bounds = array<i64: 1, 1>, scalar_prefetch = 0 : i64, scratch_operands = 1 : i64, tpu.core_type = #tpu.core_type<tc>, window_params = [{transform_indices = @transform_0, window_bounds = array<i64: 16, 32>}, {transform_indices = @transform_1, window_bounds = array<i64: 32, 64>}, {transform_indices = @transform_2, window_bounds = array<i64: 1, 64>}, {transform_indices = @transform_3, window_bounds = array<i64: 64, 32>}, {pipeline_mode = #tpu.pipeline_mode<synchronous>, transform_indices = @transform_4, window_bounds = array<i64: 1, 32>}, {pipeline_mode = #tpu.pipeline_mode<synchronous>, transform_indices = @transform_5, window_bounds = array<i64: 1, 32>}, {pipeline_mode = #tpu.pipeline_mode<synchronous>, transform_indices = @transform_6, window_bounds = array<i64: 1, 32>}, {transform_indices = @transform_7, window_bounds = array<i64: 16, 32>}]} {
    %c0_i32 = arith.constant 0 : i32
    %0 = arith.cmpi eq, %arg1, %c0_i32 : i32
    %1 = arith.extui %0 : i1 to i32
    %c0_i32_0 = arith.constant 0 : i32
    %2 = arith.cmpi ne, %1, %c0_i32_0 : i32
    scf.if %2 {
      %cst_16 = arith.constant 0.000000e+00 : f32
      %21 = vector.broadcast %cst_16 : f32 to vector<16x32xf32>
      %c0_17 = arith.constant 0 : index
      %c0_18 = arith.constant 0 : index
      %22 = vector.load %arg10[%c0_17, %c0_18] : memref<16x32xf32, #tpu.memory_space<vmem>>, vector<16x32xf32>
      tpu.vector_store %arg10[%c0_17, %c0_18], %21 {strides = array<i32>} : memref<16x32xf32, #tpu.memory_space<vmem>>, vector<16x32xf32>,
    } else {
    }
    %c0 = arith.constant 0 : index
    %c0_1 = arith.constant 0 : index
    %3 = vector.load %arg2[%c0, %c0_1] : memref<16x32xf32, #tpu.memory_space<vmem>>, vector<16x32xf32>
    %4 = arith.truncf %3 : vector<16x32xf32> to vector<16x32xbf16>
    %c0_2 = arith.constant 0 : index
    %c0_3 = arith.constant 0 : index
    %5 = vector.load %arg3[%c0_2, %c0_3] : memref<32x64xbf16, #tpu.memory_space<vmem>>, vector<32x64xbf16>
    %cst = arith.constant dense<0.000000e+00> : vector<16x64xf32>
    %6 = tpu.matmul %4, %5, %cst {dimension_numbers = #tpu.dot_dimension_numbers<[1], [0], [0], [1], [0, 0, 1, 1], [], []>} : vector<16x32xbf16>, vector<32x64xbf16>, vector<16x64xf32> -> vector<16x64xf32>
    %c0_4 = arith.constant 0 : index
    %c0_5 = arith.constant 0 : index
    %7 = vector.load %arg4[%c0_4, %c0_5] : memref<1x64xf32, #tpu.memory_space<vmem>>, vector<1x64xf32>
    %8 = vector.broadcast %7 : vector<1x64xf32> to vector<16x64xf32>
    %9 = arith.addf %6, %8 : vector<16x64xf32>
    %cst_6 = arith.constant 0.000000e+00 : f32
    %10 = vector.broadcast %cst_6 : f32 to vector<16x64xf32>
    %11 = arith.maximumf %9, %10 : vector<16x64xf32>
    %c0_7 = arith.constant 0 : index
    %c0_8 = arith.constant 0 : index
    %12 = vector.load %arg10[%c0_7, %c0_8] : memref<16x32xf32, #tpu.memory_space<vmem>>, vector<16x32xf32>
    %13 = arith.truncf %11 : vector<16x64xf32> to vector<16x64xbf16>
    %c0_9 = arith.constant 0 : index
    %c0_10 = arith.constant 0 : index
    %14 = vector.load %arg5[%c0_9, %c0_10] : memref<64x32xbf16, #tpu.memory_space<vmem>>, vector<64x32xbf16>
    %cst_11 = arith.constant dense<0.000000e+00> : vector<16x32xf32>
    %15 = tpu.matmul %13, %14, %cst_11 {dimension_numbers = #tpu.dot_dimension_numbers<[1], [0], [0], [1], [0, 0, 1, 1], [], []>} : vector<16x64xbf16>, vector<64x32xbf16>, vector<16x32xf32> -> vector<16x32xf32>
    %16 = arith.addf %12, %15 : vector<16x32xf32>
    %c0_12 = arith.constant 0 : index
    %c0_13 = arith.constant 0 : index
    %17 = vector.load %arg10[%c0_12, %c0_13] : memref<16x32xf32, #tpu.memory_space<vmem>>, vector<16x32xf32>
    tpu.vector_store %arg10[%c0_12, %c0_13], %16 {strides = array<i32>} : memref<16x32xf32, #tpu.memory_space<vmem>>, vector<16x32xf32>,
    %c0_i32_14 = arith.constant 0 : i32
    %18 = arith.cmpi eq, %arg1, %c0_i32_14 : i32
    %19 = arith.extui %18 : i1 to i32
    %c0_i32_15 = arith.constant 0 : i32
    %20 = arith.cmpi ne, %19, %c0_i32_15 : i32
    scf.if %20 {
      %c0_16 = arith.constant 0 : index
      %c0_17 = arith.constant 0 : index
      %21 = vector.load %arg10[%c0_16, %c0_17] : memref<16x32xf32, #tpu.memory_space<vmem>>, vector<16x32xf32>
      %22 = arith.addf %3, %21 : vector<16x32xf32>
      %c0_18 = arith.constant 0 : index
      %c0_19 = arith.constant 0 : index
      %23 = vector.load %arg6[%c0_18, %c0_19] : memref<1x32xf32, #tpu.memory_space<vmem>>, vector<1x32xf32>
      %24 = vector.broadcast %23 : vector<1x32xf32> to vector<16x32xf32>
      %25 = arith.addf %22, %24 : vector<16x32xf32>
      %cst_20 = arith.constant dense<0.000000e+00> : vector<16xf32>
      %26 = vector.multi_reduction <add>, %25, %cst_20 [1] : vector<16x32xf32> to vector<16xf32>
      %27 = vector.shape_cast %26 : vector<16xf32> to vector<16x1xf32>
      %cst_21 = arith.constant 3.200000e+01 : f32
      %28 = vector.broadcast %cst_21 : f32 to vector<16x1xf32>
      %29 = arith.divf %27, %28 : vector<16x1xf32>
      %30 = vector.broadcast %29 : vector<16x1xf32> to vector<16x32xf32>
      %31 = arith.subf %25, %30 : vector<16x32xf32>
      %32 = arith.mulf %31, %31 : vector<16x32xf32>
      %cst_22 = arith.constant dense<0.000000e+00> : vector<16xf32>
      %33 = vector.multi_reduction <add>, %32, %cst_22 [1] : vector<16x32xf32> to vector<16xf32>
      %34 = vector.shape_cast %33 : vector<16xf32> to vector<16x1xf32>
      %cst_23 = arith.constant 3.200000e+01 : f32
      %35 = vector.broadcast %cst_23 : f32 to vector<16x1xf32>
      %36 = arith.divf %34, %35 : vector<16x1xf32>
      %cst_24 = arith.constant 9.99999974E-6 : f32
      %37 = vector.broadcast %cst_24 : f32 to vector<16x1xf32>
      %38 = arith.addf %36, %37 : vector<16x1xf32>
      %39 = math.rsqrt %38 : vector<16x1xf32>
      %40 = vector.broadcast %39 : vector<16x1xf32> to vector<16x32xf32>
      %41 = arith.mulf %31, %40 : vector<16x32xf32>
      %c0_25 = arith.constant 0 : index
      %c0_26 = arith.constant 0 : index
      %42 = vector.load %arg7[%c0_25, %c0_26] : memref<1x32xf32, #tpu.memory_space<vmem>>, vector<1x32xf32>
      %43 = vector.broadcast %42 : vector<1x32xf32> to vector<16x32xf32>
      %44 = arith.mulf %41, %43 : vector<16x32xf32>
      %c0_27 = arith.constant 0 : index
      %c0_28 = arith.constant 0 : index
      %45 = vector.load %arg8[%c0_27, %c0_28] : memref<1x32xf32, #tpu.memory_space<vmem>>, vector<1x32xf32>
      %46 = vector.broadcast %45 : vector<1x32xf32> to vector<16x32xf32>
      %47 = arith.addf %44, %46 : vector<16x32xf32>
      %c0_29 = arith.constant 0 : index
      %c0_30 = arith.constant 0 : index
      %48 = vector.load %arg9[%c0_29, %c0_30] : memref<16x32xf32, #tpu.memory_space<vmem>>, vector<16x32xf32>
      tpu.vector_store %arg9[%c0_29, %c0_30], %47 {strides = array<i32>} : memref<16x32xf32, #tpu.memory_space<vmem>>, vector<16x32xf32>,
    } else {
    }
    return
  }
  func.func @transform_0(%arg0: i32, %arg1: i32) -> (i32, i32) {
    %c0_i32 = arith.constant 0 : i32
    %c0_i32_0 = arith.constant 0 : i32
    return %arg0, %c0_i32 : i32, i32
  }
  func.func @transform_1(%arg0: i32, %arg1: i32) -> (i32, i32) {
    %c0_i32 = arith.constant 0 : i32
    %c0_i32_0 = arith.constant 0 : i32
    return %c0_i32, %arg1 : i32, i32
  }
  func.func @transform_2(%arg0: i32, %arg1: i32) -> (i32, i32) {
    %c0_i32 = arith.constant 0 : i32
    %c0_i32_0 = arith.constant 0 : i32
    return %c0_i32, %arg1 : i32, i32
  }
  func.func @transform_3(%arg0: i32, %arg1: i32) -> (i32, i32) {
    %c0_i32 = arith.constant 0 : i32
    %c0_i32_0 = arith.constant 0 : i32
    return %arg1, %c0_i32 : i32, i32
  }
  func.func @transform_4(%arg0: i32, %arg1: i32) -> (i32, i32) {
    %c0_i32 = arith.constant 0 : i32
    %c0_i32_0 = arith.constant 0 : i32
    %c0_i32_1 = arith.constant 0 : i32
    return %c0_i32, %c0_i32_0 : i32, i32
  }
  func.func @transform_5(%arg0: i32, %arg1: i32) -> (i32, i32) {
    %c0_i32 = arith.constant 0 : i32
    %c0_i32_0 = arith.constant 0 : i32
    %c0_i32_1 = arith.constant 0 : i32
    return %c0_i32, %c0_i32_0 : i32, i32
  }
  func.func @transform_6(%arg0: i32, %arg1: i32) -> (i32, i32) {
    %c0_i32 = arith.constant 0 : i32
    %c0_i32_0 = arith.constant 0 : i32
    %c0_i32_1 = arith.constant 0 : i32
    return %c0_i32, %c0_i32_0 : i32, i32
  }
  func.func @transform_7(%arg0: i32, %arg1: i32) -> (i32, i32) {
    %c0_i32 = arith.constant 0 : i32
    %c0_i32_0 = arith.constant 0 : i32
    return %arg0, %c0_i32 : i32, i32
  }
}

module attributes {stable_mosaic.version = 11 : i64} {
  func.func @_mha_addnorm_kernel(%arg0: i32, %arg1: i32, %arg2: memref<1x8x32xbf16, #tpu.memory_space<vmem>>, %arg3: memref<1x16x32xf32, #tpu.memory_space<vmem>>, %arg4: memref<1x8x16xf32, #tpu.memory_space<vmem>>, %arg5: memref<1x8x32xf32, #tpu.memory_space<vmem>>, %arg6: memref<32x32xbf16, #tpu.memory_space<vmem>>, %arg7: memref<1x32xf32, #tpu.memory_space<vmem>>, %arg8: memref<32x64xbf16, #tpu.memory_space<vmem>>, %arg9: memref<1x64xf32, #tpu.memory_space<vmem>>, %arg10: memref<32x32xbf16, #tpu.memory_space<vmem>>, %arg11: memref<1x32xf32, #tpu.memory_space<vmem>>, %arg12: memref<1x32xf32, #tpu.memory_space<vmem>>, %arg13: memref<1x32xf32, #tpu.memory_space<vmem>>, %arg14: memref<1x8x32xf32, #tpu.memory_space<vmem>>, %arg15: memref<16x32xbf16, #tpu.memory_space<vmem>>, %arg16: memref<16x32xbf16, #tpu.memory_space<vmem>>) attributes {dimension_semantics = [#tpu.dimension_semantics<parallel>, #tpu.dimension_semantics<arbitrary>], iteration_bounds = array<i64: 2, 1>, scalar_prefetch = 0 : i64, scratch_operands = 2 : i64, tpu.core_type = #tpu.core_type<tc>, window_params = [{transform_indices = @transform_0, window_bounds = array<i64: 1, 8, 32>}, {transform_indices = @transform_1, window_bounds = array<i64: 1, 16, 32>}, {transform_indices = @transform_2, window_bounds = array<i64: 1, 8, 16>}, {transform_indices = @transform_3, window_bounds = array<i64: 1, 8, 32>}, {pipeline_mode = #tpu.pipeline_mode<synchronous>, transform_indices = @transform_4, window_bounds = array<i64: 32, 32>}, {pipeline_mode = #tpu.pipeline_mode<synchronous>, transform_indices = @transform_5, window_bounds = array<i64: 1, 32>}, {pipeline_mode = #tpu.pipeline_mode<synchronous>, transform_indices = @transform_6, window_bounds = array<i64: 32, 64>}, {pipeline_mode = #tpu.pipeline_mode<synchronous>, transform_indices = @transform_7, window_bounds = array<i64: 1, 64>}, {pipeline_mode = #tpu.pipeline_mode<synchronous>, transform_indices = @transform_8, window_bounds = array<i64: 32, 32>}, {pipeline_mode = #tpu.pipeline_mode<synchronous>, transform_indices = @transform_9, window_bounds = array<i64: 1, 32>}, {pipeline_mode = #tpu.pipeline_mode<synchronous>, transform_indices = @transform_10, window_bounds = array<i64: 1, 32>}, {pipeline_mode = #tpu.pipeline_mode<synchronous>, transform_indices = @transform_11, window_bounds = array<i64: 1, 32>}, {transform_indices = @transform_12, window_bounds = array<i64: 1, 8, 32>}]} {
    %c0_i32 = arith.constant 0 : i32
    %0 = arith.cmpi eq, %arg1, %c0_i32 : i32
    %1 = arith.extui %0 : i1 to i32
    %c0_i32_0 = arith.constant 0 : i32
    %2 = arith.cmpi ne, %1, %c0_i32_0 : i32
    scf.if %2 {
      %c0_58 = arith.constant 0 : index
      %c0_59 = arith.constant 0 : index
      %c0_60 = arith.constant 0 : index
      %139 = vector.load %arg3[%c0_58, %c0_59, %c0_60] : memref<1x16x32xf32, #tpu.memory_space<vmem>>, vector<1x16x32xf32>
      %140 = vector.shape_cast %139 : vector<1x16x32xf32> to vector<16x32xf32>
      %141 = arith.truncf %140 : vector<16x32xf32> to vector<16x32xbf16>
      %c0_61 = arith.constant 0 : index
      %c0_62 = arith.constant 0 : index
      %142 = vector.load %arg8[%c0_61, %c0_62] : memref<32x64xbf16, #tpu.memory_space<vmem>>, vector<32x64xbf16>
      %cst_63 = arith.constant dense<0.000000e+00> : vector<16x64xf32>
      %143 = tpu.matmul %141, %142, %cst_63 {dimension_numbers = #tpu.dot_dimension_numbers<[1], [0], [0], [1], [0, 0, 1, 1], [], []>} : vector<16x32xbf16>, vector<32x64xbf16>, vector<16x64xf32> -> vector<16x64xf32>
      %c0_64 = arith.constant 0 : index
      %c0_65 = arith.constant 0 : index
      %144 = vector.load %arg9[%c0_64, %c0_65] : memref<1x64xf32, #tpu.memory_space<vmem>>, vector<1x64xf32>
      %145 = vector.broadcast %144 : vector<1x64xf32> to vector<16x64xf32>
      %146 = arith.addf %143, %145 : vector<16x64xf32>
      %147 = vector.extract_strided_slice %146 {offsets = [0, 0], sizes = [16, 32], strides = [1, 1]} : vector<16x64xf32> to vector<16x32xf32>
      %148 = arith.truncf %147 : vector<16x32xf32> to vector<16x32xbf16>
      %c0_66 = arith.constant 0 : index
      %c0_67 = arith.constant 0 : index
      %149 = vector.load %arg15[%c0_66, %c0_67] : memref<16x32xbf16, #tpu.memory_space<vmem>>, vector<16x32xbf16>
      tpu.vector_store %arg15[%c0_66, %c0_67], %148 {strides = array<i32>} : memref<16x32xbf16, #tpu.memory_space<vmem>>, vector<16x32xbf16>,
      %150 = vector.extract_strided_slice %146 {offsets = [0, 32], sizes = [16, 32], strides = [1, 1]} : vector<16x64xf32> to vector<16x32xf32>
      %151 = arith.truncf %150 : vector<16x32xf32> to vector<16x32xbf16>
      %c0_68 = arith.constant 0 : index
      %c0_69 = arith.constant 0 : index
      %152 = vector.load %arg16[%c0_68, %c0_69] : memref<16x32xbf16, #tpu.memory_space<vmem>>, vector<16x32xbf16>
      tpu.vector_store %arg16[%c0_68, %c0_69], %151 {strides = array<i32>} : memref<16x32xbf16, #tpu.memory_space<vmem>>, vector<16x32xbf16>,
    } else {
    }
    %c0 = arith.constant 0 : index
    %c0_1 = arith.constant 0 : index
    %c0_2 = arith.constant 0 : index
    %3 = vector.load %arg2[%c0, %c0_1, %c0_2] : memref<1x8x32xbf16, #tpu.memory_space<vmem>>, vector<1x8x32xbf16>
    %4 = vector.shape_cast %3 : vector<1x8x32xbf16> to vector<8x32xbf16>
    %c0_3 = arith.constant 0 : index
    %c0_4 = arith.constant 0 : index
    %5 = vector.load %arg6[%c0_3, %c0_4] : memref<32x32xbf16, #tpu.memory_space<vmem>>, vector<32x32xbf16>
    %cst = arith.constant dense<0.000000e+00> : vector<8x32xf32>
    %6 = tpu.matmul %4, %5, %cst {dimension_numbers = #tpu.dot_dimension_numbers<[1], [0], [0], [1], [0, 0, 1, 1], [], []>} : vector<8x32xbf16>, vector<32x32xbf16>, vector<8x32xf32> -> vector<8x32xf32>
    %c0_5 = arith.constant 0 : index
    %c0_6 = arith.constant 0 : index
    %7 = vector.load %arg7[%c0_5, %c0_6] : memref<1x32xf32, #tpu.memory_space<vmem>>, vector<1x32xf32>
    %8 = vector.broadcast %7 : vector<1x32xf32> to vector<8x32xf32>
    %9 = arith.addf %6, %8 : vector<8x32xf32>
    %c0_7 = arith.constant 0 : index
    %c0_8 = arith.constant 0 : index
    %c0_9 = arith.constant 0 : index
    %10 = vector.load %arg4[%c0_7, %c0_8, %c0_9] : memref<1x8x16xf32, #tpu.memory_space<vmem>>, vector<1x8x16xf32>
    %11 = vector.shape_cast %10 : vector<1x8x16xf32> to vector<8x16xf32>
    %cst_10 = arith.constant 0.000000e+00 : f32
    %12 = vector.broadcast %cst_10 : f32 to vector<8x16xf32>
    %13 = arith.cmpf ogt, %11, %12 : vector<8x16xf32>
    %c0_11 = arith.constant 0 : index
    %c0_12 = arith.constant 0 : index
    %14 = vector.load %arg15[%c0_11, %c0_12] : memref<16x32xbf16, #tpu.memory_space<vmem>>, vector<16x32xbf16>
    %c0_13 = arith.constant 0 : index
    %c0_14 = arith.constant 0 : index
    %15 = vector.load %arg16[%c0_13, %c0_14] : memref<16x32xbf16, #tpu.memory_space<vmem>>, vector<16x32xbf16>
    %c0_15 = arith.constant 0 : index
    %c0_16 = arith.constant 0 : index
    %16 = vector.load %arg10[%c0_15, %c0_16] : memref<32x32xbf16, #tpu.memory_space<vmem>>, vector<32x32xbf16>
    %17 = vector.extract_strided_slice %9 {offsets = [0, 0], sizes = [8, 8], strides = [1, 1]} : vector<8x32xf32> to vector<8x8xf32>
    %18 = arith.truncf %17 : vector<8x8xf32> to vector<8x8xbf16>
    %19 = vector.extract_strided_slice %14 {offsets = [0, 0], sizes = [16, 8], strides = [1, 1]} : vector<16x32xbf16> to vector<16x8xbf16>
    %20 = vector.extract_strided_slice %15 {offsets = [0, 0], sizes = [16, 8], strides = [1, 1]} : vector<16x32xbf16> to vector<16x8xbf16>
    %cst_17 = arith.constant dense<0.000000e+00> : vector<8x16xf32>
    %21 = tpu.matmul %18, %19, %cst_17 {dimension_numbers = #tpu.dot_dimension_numbers<[1], [1], [0], [0], [0, 0, 1, 0], [], []>} : vector<8x8xbf16>, vector<16x8xbf16>, vector<8x16xf32> -> vector<8x16xf32>
    %cst_18 = arith.constant -1.000000e+09 : f32
    %22 = vector.broadcast %cst_18 : f32 to vector<8x16xf32>
    %23 = arith.select %13, %21, %22 : vector<8x16xi1>, vector<8x16xf32>
    %cst_19 = arith.constant dense<0xFF800000> : vector<8xf32>
    %24 = vector.multi_reduction <maximumf>, %23, %cst_19 [1] : vector<8x16xf32> to vector<8xf32>
    %25 = vector.shape_cast %24 : vector<8xf32> to vector<8x1xf32>
    %26 = vector.broadcast %25 : vector<8x1xf32> to vector<8x16xf32>
    %27 = arith.subf %23, %26 : vector<8x16xf32>
    %28 = math.exp %27 : vector<8x16xf32>
    %cst_20 = arith.constant dense<0.000000e+00> : vector<8xf32>
    %29 = vector.multi_reduction <add>, %28, %cst_20 [1] : vector<8x16xf32> to vector<8xf32>
    %30 = vector.shape_cast %29 : vector<8xf32> to vector<8x1xf32>
    %31 = tpu.reciprocal %30 {approx = true} : vector<8x1xf32> -> vector<8x1xf32>
    %32 = vector.broadcast %31 : vector<8x1xf32> to vector<8x16xf32>
    %33 = arith.mulf %28, %32 : vector<8x16xf32>
    %34 = arith.truncf %33 : vector<8x16xf32> to vector<8x16xbf16>
    %cst_21 = arith.constant dense<0.000000e+00> : vector<8x8xf32>
    %35 = tpu.matmul %34, %20, %cst_21 {dimension_numbers = #tpu.dot_dimension_numbers<[1], [0], [0], [1], [0, 0, 1, 1], [], []>} : vector<8x16xbf16>, vector<16x8xbf16>, vector<8x8xf32> -> vector<8x8xf32>
    %36 = arith.truncf %35 : vector<8x8xf32> to vector<8x8xbf16>
    %37 = vector.extract_strided_slice %16 {offsets = [0, 0], sizes = [8, 32], strides = [1, 1]} : vector<32x32xbf16> to vector<8x32xbf16>
    %cst_22 = arith.constant dense<0.000000e+00> : vector<8x32xf32>
    %38 = tpu.matmul %36, %37, %cst_22 {dimension_numbers = #tpu.dot_dimension_numbers<[1], [0], [0], [1], [0, 0, 1, 1], [], []>} : vector<8x8xbf16>, vector<8x32xbf16>, vector<8x32xf32> -> vector<8x32xf32>
    %39 = vector.extract_strided_slice %9 {offsets = [0, 8], sizes = [8, 8], strides = [1, 1]} : vector<8x32xf32> to vector<8x8xf32>
    %40 = arith.truncf %39 : vector<8x8xf32> to vector<8x8xbf16>
    %41 = vector.extract_strided_slice %14 {offsets = [0, 8], sizes = [16, 8], strides = [1, 1]} : vector<16x32xbf16> to vector<16x8xbf16>
    %42 = vector.extract_strided_slice %15 {offsets = [0, 8], sizes = [16, 8], strides = [1, 1]} : vector<16x32xbf16> to vector<16x8xbf16>
    %cst_23 = arith.constant dense<0.000000e+00> : vector<8x16xf32>
    %43 = tpu.matmul %40, %41, %cst_23 {dimension_numbers = #tpu.dot_dimension_numbers<[1], [1], [0], [0], [0, 0, 1, 0], [], []>} : vector<8x8xbf16>, vector<16x8xbf16>, vector<8x16xf32> -> vector<8x16xf32>
    %cst_24 = arith.constant -1.000000e+09 : f32
    %44 = vector.broadcast %cst_24 : f32 to vector<8x16xf32>
    %45 = arith.select %13, %43, %44 : vector<8x16xi1>, vector<8x16xf32>
    %cst_25 = arith.constant dense<0xFF800000> : vector<8xf32>
    %46 = vector.multi_reduction <maximumf>, %45, %cst_25 [1] : vector<8x16xf32> to vector<8xf32>
    %47 = vector.shape_cast %46 : vector<8xf32> to vector<8x1xf32>
    %48 = vector.broadcast %47 : vector<8x1xf32> to vector<8x16xf32>
    %49 = arith.subf %45, %48 : vector<8x16xf32>
    %50 = math.exp %49 : vector<8x16xf32>
    %cst_26 = arith.constant dense<0.000000e+00> : vector<8xf32>
    %51 = vector.multi_reduction <add>, %50, %cst_26 [1] : vector<8x16xf32> to vector<8xf32>
    %52 = vector.shape_cast %51 : vector<8xf32> to vector<8x1xf32>
    %53 = tpu.reciprocal %52 {approx = true} : vector<8x1xf32> -> vector<8x1xf32>
    %54 = vector.broadcast %53 : vector<8x1xf32> to vector<8x16xf32>
    %55 = arith.mulf %50, %54 : vector<8x16xf32>
    %56 = arith.truncf %55 : vector<8x16xf32> to vector<8x16xbf16>
    %cst_27 = arith.constant dense<0.000000e+00> : vector<8x8xf32>
    %57 = tpu.matmul %56, %42, %cst_27 {dimension_numbers = #tpu.dot_dimension_numbers<[1], [0], [0], [1], [0, 0, 1, 1], [], []>} : vector<8x16xbf16>, vector<16x8xbf16>, vector<8x8xf32> -> vector<8x8xf32>
    %58 = arith.truncf %57 : vector<8x8xf32> to vector<8x8xbf16>
    %59 = vector.extract_strided_slice %16 {offsets = [8, 0], sizes = [8, 32], strides = [1, 1]} : vector<32x32xbf16> to vector<8x32xbf16>
    %cst_28 = arith.constant dense<0.000000e+00> : vector<8x32xf32>
    %60 = tpu.matmul %58, %59, %cst_28 {dimension_numbers = #tpu.dot_dimension_numbers<[1], [0], [0], [1], [0, 0, 1, 1], [], []>} : vector<8x8xbf16>, vector<8x32xbf16>, vector<8x32xf32> -> vector<8x32xf32>
    %61 = arith.addf %38, %60 : vector<8x32xf32>
    %62 = vector.extract_strided_slice %9 {offsets = [0, 16], sizes = [8, 8], strides = [1, 1]} : vector<8x32xf32> to vector<8x8xf32>
    %63 = arith.truncf %62 : vector<8x8xf32> to vector<8x8xbf16>
    %64 = vector.extract_strided_slice %14 {offsets = [0, 16], sizes = [16, 8], strides = [1, 1]} : vector<16x32xbf16> to vector<16x8xbf16>
    %65 = vector.extract_strided_slice %15 {offsets = [0, 16], sizes = [16, 8], strides = [1, 1]} : vector<16x32xbf16> to vector<16x8xbf16>
    %cst_29 = arith.constant dense<0.000000e+00> : vector<8x16xf32>
    %66 = tpu.matmul %63, %64, %cst_29 {dimension_numbers = #tpu.dot_dimension_numbers<[1], [1], [0], [0], [0, 0, 1, 0], [], []>} : vector<8x8xbf16>, vector<16x8xbf16>, vector<8x16xf32> -> vector<8x16xf32>
    %cst_30 = arith.constant -1.000000e+09 : f32
    %67 = vector.broadcast %cst_30 : f32 to vector<8x16xf32>
    %68 = arith.select %13, %66, %67 : vector<8x16xi1>, vector<8x16xf32>
    %cst_31 = arith.constant dense<0xFF800000> : vector<8xf32>
    %69 = vector.multi_reduction <maximumf>, %68, %cst_31 [1] : vector<8x16xf32> to vector<8xf32>
    %70 = vector.shape_cast %69 : vector<8xf32> to vector<8x1xf32>
    %71 = vector.broadcast %70 : vector<8x1xf32> to vector<8x16xf32>
    %72 = arith.subf %68, %71 : vector<8x16xf32>
    %73 = math.exp %72 : vector<8x16xf32>
    %cst_32 = arith.constant dense<0.000000e+00> : vector<8xf32>
    %74 = vector.multi_reduction <add>, %73, %cst_32 [1] : vector<8x16xf32> to vector<8xf32>
    %75 = vector.shape_cast %74 : vector<8xf32> to vector<8x1xf32>
    %76 = tpu.reciprocal %75 {approx = true} : vector<8x1xf32> -> vector<8x1xf32>
    %77 = vector.broadcast %76 : vector<8x1xf32> to vector<8x16xf32>
    %78 = arith.mulf %73, %77 : vector<8x16xf32>
    %79 = arith.truncf %78 : vector<8x16xf32> to vector<8x16xbf16>
    %cst_33 = arith.constant dense<0.000000e+00> : vector<8x8xf32>
    %80 = tpu.matmul %79, %65, %cst_33 {dimension_numbers = #tpu.dot_dimension_numbers<[1], [0], [0], [1], [0, 0, 1, 1], [], []>} : vector<8x16xbf16>, vector<16x8xbf16>, vector<8x8xf32> -> vector<8x8xf32>
    %81 = arith.truncf %80 : vector<8x8xf32> to vector<8x8xbf16>
    %82 = vector.extract_strided_slice %16 {offsets = [16, 0], sizes = [8, 32], strides = [1, 1]} : vector<32x32xbf16> to vector<8x32xbf16>
    %cst_34 = arith.constant dense<0.000000e+00> : vector<8x32xf32>
    %83 = tpu.matmul %81, %82, %cst_34 {dimension_numbers = #tpu.dot_dimension_numbers<[1], [0], [0], [1], [0, 0, 1, 1], [], []>} : vector<8x8xbf16>, vector<8x32xbf16>, vector<8x32xf32> -> vector<8x32xf32>
    %84 = arith.addf %61, %83 : vector<8x32xf32>
    %85 = vector.extract_strided_slice %9 {offsets = [0, 24], sizes = [8, 8], strides = [1, 1]} : vector<8x32xf32> to vector<8x8xf32>
    %86 = arith.truncf %85 : vector<8x8xf32> to vector<8x8xbf16>
    %87 = vector.extract_strided_slice %14 {offsets = [0, 24], sizes = [16, 8], strides = [1, 1]} : vector<16x32xbf16> to vector<16x8xbf16>
    %88 = vector.extract_strided_slice %15 {offsets = [0, 24], sizes = [16, 8], strides = [1, 1]} : vector<16x32xbf16> to vector<16x8xbf16>
    %cst_35 = arith.constant dense<0.000000e+00> : vector<8x16xf32>
    %89 = tpu.matmul %86, %87, %cst_35 {dimension_numbers = #tpu.dot_dimension_numbers<[1], [1], [0], [0], [0, 0, 1, 0], [], []>} : vector<8x8xbf16>, vector<16x8xbf16>, vector<8x16xf32> -> vector<8x16xf32>
    %cst_36 = arith.constant -1.000000e+09 : f32
    %90 = vector.broadcast %cst_36 : f32 to vector<8x16xf32>
    %91 = arith.select %13, %89, %90 : vector<8x16xi1>, vector<8x16xf32>
    %cst_37 = arith.constant dense<0xFF800000> : vector<8xf32>
    %92 = vector.multi_reduction <maximumf>, %91, %cst_37 [1] : vector<8x16xf32> to vector<8xf32>
    %93 = vector.shape_cast %92 : vector<8xf32> to vector<8x1xf32>
    %94 = vector.broadcast %93 : vector<8x1xf32> to vector<8x16xf32>
    %95 = arith.subf %91, %94 : vector<8x16xf32>
    %96 = math.exp %95 : vector<8x16xf32>
    %cst_38 = arith.constant dense<0.000000e+00> : vector<8xf32>
    %97 = vector.multi_reduction <add>, %96, %cst_38 [1] : vector<8x16xf32> to vector<8xf32>
    %98 = vector.shape_cast %97 : vector<8xf32> to vector<8x1xf32>
    %99 = tpu.reciprocal %98 {approx = true} : vector<8x1xf32> -> vector<8x1xf32>
    %100 = vector.broadcast %99 : vector<8x1xf32> to vector<8x16xf32>
    %101 = arith.mulf %96, %100 : vector<8x16xf32>
    %102 = arith.truncf %101 : vector<8x16xf32> to vector<8x16xbf16>
    %cst_39 = arith.constant dense<0.000000e+00> : vector<8x8xf32>
    %103 = tpu.matmul %102, %88, %cst_39 {dimension_numbers = #tpu.dot_dimension_numbers<[1], [0], [0], [1], [0, 0, 1, 1], [], []>} : vector<8x16xbf16>, vector<16x8xbf16>, vector<8x8xf32> -> vector<8x8xf32>
    %104 = arith.truncf %103 : vector<8x8xf32> to vector<8x8xbf16>
    %105 = vector.extract_strided_slice %16 {offsets = [24, 0], sizes = [8, 32], strides = [1, 1]} : vector<32x32xbf16> to vector<8x32xbf16>
    %cst_40 = arith.constant dense<0.000000e+00> : vector<8x32xf32>
    %106 = tpu.matmul %104, %105, %cst_40 {dimension_numbers = #tpu.dot_dimension_numbers<[1], [0], [0], [1], [0, 0, 1, 1], [], []>} : vector<8x8xbf16>, vector<8x32xbf16>, vector<8x32xf32> -> vector<8x32xf32>
    %107 = arith.addf %84, %106 : vector<8x32xf32>
    %c0_41 = arith.constant 0 : index
    %c0_42 = arith.constant 0 : index
    %108 = vector.load %arg11[%c0_41, %c0_42] : memref<1x32xf32, #tpu.memory_space<vmem>>, vector<1x32xf32>
    %109 = vector.broadcast %108 : vector<1x32xf32> to vector<8x32xf32>
    %110 = arith.addf %107, %109 : vector<8x32xf32>
    %c0_43 = arith.constant 0 : index
    %c0_44 = arith.constant 0 : index
    %c0_45 = arith.constant 0 : index
    %111 = vector.load %arg5[%c0_43, %c0_44, %c0_45] : memref<1x8x32xf32, #tpu.memory_space<vmem>>, vector<1x8x32xf32>
    %112 = vector.shape_cast %111 : vector<1x8x32xf32> to vector<8x32xf32>
    %113 = arith.addf %112, %110 : vector<8x32xf32>
    %cst_46 = arith.constant dense<0.000000e+00> : vector<8xf32>
    %114 = vector.multi_reduction <add>, %113, %cst_46 [1] : vector<8x32xf32> to vector<8xf32>
    %115 = vector.shape_cast %114 : vector<8xf32> to vector<8x1xf32>
    %cst_47 = arith.constant 3.200000e+01 : f32
    %116 = vector.broadcast %cst_47 : f32 to vector<8x1xf32>
    %117 = arith.divf %115, %116 : vector<8x1xf32>
    %118 = vector.broadcast %117 : vector<8x1xf32> to vector<8x32xf32>
    %119 = arith.subf %113, %118 : vector<8x32xf32>
    %120 = arith.mulf %119, %119 : vector<8x32xf32>
    %cst_48 = arith.constant dense<0.000000e+00> : vector<8xf32>
    %121 = vector.multi_reduction <add>, %120, %cst_48 [1] : vector<8x32xf32> to vector<8xf32>
    %122 = vector.shape_cast %121 : vector<8xf32> to vector<8x1xf32>
    %cst_49 = arith.constant 3.200000e+01 : f32
    %123 = vector.broadcast %cst_49 : f32 to vector<8x1xf32>
    %124 = arith.divf %122, %123 : vector<8x1xf32>
    %cst_50 = arith.constant 9.99999974E-6 : f32
    %125 = vector.broadcast %cst_50 : f32 to vector<8x1xf32>
    %126 = arith.addf %124, %125 : vector<8x1xf32>
    %127 = math.rsqrt %126 : vector<8x1xf32>
    %128 = vector.broadcast %127 : vector<8x1xf32> to vector<8x32xf32>
    %129 = arith.mulf %119, %128 : vector<8x32xf32>
    %c0_51 = arith.constant 0 : index
    %c0_52 = arith.constant 0 : index
    %130 = vector.load %arg12[%c0_51, %c0_52] : memref<1x32xf32, #tpu.memory_space<vmem>>, vector<1x32xf32>
    %131 = vector.broadcast %130 : vector<1x32xf32> to vector<8x32xf32>
    %132 = arith.mulf %129, %131 : vector<8x32xf32>
    %c0_53 = arith.constant 0 : index
    %c0_54 = arith.constant 0 : index
    %133 = vector.load %arg13[%c0_53, %c0_54] : memref<1x32xf32, #tpu.memory_space<vmem>>, vector<1x32xf32>
    %134 = vector.broadcast %133 : vector<1x32xf32> to vector<8x32xf32>
    %135 = arith.addf %132, %134 : vector<8x32xf32>
    %c0_55 = arith.constant 0 : index
    %c0_56 = arith.constant 0 : index
    %c0_57 = arith.constant 0 : index
    %136 = vector.load %arg14[%c0_55, %c0_56, %c0_57] : memref<1x8x32xf32, #tpu.memory_space<vmem>>, vector<1x8x32xf32>
    %137 = vector.shape_cast %136 : vector<1x8x32xf32> to vector<8x32xf32>
    %138 = vector.shape_cast %135 : vector<8x32xf32> to vector<1x8x32xf32>
    tpu.vector_store %arg14[%c0_55, %c0_56, %c0_57], %138 {strides = array<i32>} : memref<1x8x32xf32, #tpu.memory_space<vmem>>, vector<1x8x32xf32>,
    return
  }
  func.func @transform_0(%arg0: i32, %arg1: i32) -> (i32, i32, i32) {
    %c0_i32 = arith.constant 0 : i32
    %c0_i32_0 = arith.constant 0 : i32
    return %arg0, %arg1, %c0_i32 : i32, i32, i32
  }
  func.func @transform_1(%arg0: i32, %arg1: i32) -> (i32, i32, i32) {
    %c0_i32 = arith.constant 0 : i32
    %c0_i32_0 = arith.constant 0 : i32
    %c0_i32_1 = arith.constant 0 : i32
    return %arg0, %c0_i32, %c0_i32_0 : i32, i32, i32
  }
  func.func @transform_2(%arg0: i32, %arg1: i32) -> (i32, i32, i32) {
    %c0_i32 = arith.constant 0 : i32
    %c0_i32_0 = arith.constant 0 : i32
    return %arg0, %arg1, %c0_i32 : i32, i32, i32
  }
  func.func @transform_3(%arg0: i32, %arg1: i32) -> (i32, i32, i32) {
    %c0_i32 = arith.constant 0 : i32
    %c0_i32_0 = arith.constant 0 : i32
    return %arg0, %arg1, %c0_i32 : i32, i32, i32
  }
  func.func @transform_4(%arg0: i32, %arg1: i32) -> (i32, i32) {
    %c0_i32 = arith.constant 0 : i32
    %c0_i32_0 = arith.constant 0 : i32
    %c0_i32_1 = arith.constant 0 : i32
    return %c0_i32, %c0_i32_0 : i32, i32
  }
  func.func @transform_5(%arg0: i32, %arg1: i32) -> (i32, i32) {
    %c0_i32 = arith.constant 0 : i32
    %c0_i32_0 = arith.constant 0 : i32
    %c0_i32_1 = arith.constant 0 : i32
    return %c0_i32, %c0_i32_0 : i32, i32
  }
  func.func @transform_6(%arg0: i32, %arg1: i32) -> (i32, i32) {
    %c0_i32 = arith.constant 0 : i32
    %c0_i32_0 = arith.constant 0 : i32
    %c0_i32_1 = arith.constant 0 : i32
    return %c0_i32, %c0_i32_0 : i32, i32
  }
  func.func @transform_7(%arg0: i32, %arg1: i32) -> (i32, i32) {
    %c0_i32 = arith.constant 0 : i32
    %c0_i32_0 = arith.constant 0 : i32
    %c0_i32_1 = arith.constant 0 : i32
    return %c0_i32, %c0_i32_0 : i32, i32
  }
  func.func @transform_8(%arg0: i32, %arg1: i32) -> (i32, i32) {
    %c0_i32 = arith.constant 0 : i32
    %c0_i32_0 = arith.constant 0 : i32
    %c0_i32_1 = arith.constant 0 : i32
    return %c0_i32, %c0_i32_0 : i32, i32
  }
  func.func @transform_9(%arg0: i32, %arg1: i32) -> (i32, i32) {
    %c0_i32 = arith.constant 0 : i32
    %c0_i32_0 = arith.constant 0 : i32
    %c0_i32_1 = arith.constant 0 : i32
    return %c0_i32, %c0_i32_0 : i32, i32
  }
  func.func @transform_10(%arg0: i32, %arg1: i32) -> (i32, i32) {
    %c0_i32 = arith.constant 0 : i32
    %c0_i32_0 = arith.constant 0 : i32
    %c0_i32_1 = arith.constant 0 : i32
    return %c0_i32, %c0_i32_0 : i32, i32
  }
  func.func @transform_11(%arg0: i32, %arg1: i32) -> (i32, i32) {
    %c0_i32 = arith.constant 0 : i32
    %c0_i32_0 = arith.constant 0 : i32
    %c0_i32_1 = arith.constant 0 : i32
    return %c0_i32, %c0_i32_0 : i32, i32
  }
  func.func @transform_12(%arg0: i32, %arg1: i32) -> (i32, i32, i32) {
    %c0_i32 = arith.constant 0 : i32
    %c0_i32_0 = arith.constant 0 : i32
    return %arg0, %arg1, %c0_i32 : i32, i32, i32
  }
}

module attributes {stable_mosaic.version = 11 : i64} {
  func.func @_mha_addnorm_kernel(%arg0: i32, %arg1: i32, %arg2: memref<1x8x32xf32, #tpu.memory_space<vmem>>, %arg3: memref<1x8x32xf32, #tpu.memory_space<vmem>>, %arg4: memref<1x8x8xf32, #tpu.memory_space<vmem>>, %arg5: memref<32x32xbf16, #tpu.memory_space<vmem>>, %arg6: memref<1x32xf32, #tpu.memory_space<vmem>>, %arg7: memref<32x64xbf16, #tpu.memory_space<vmem>>, %arg8: memref<1x64xf32, #tpu.memory_space<vmem>>, %arg9: memref<32x32xbf16, #tpu.memory_space<vmem>>, %arg10: memref<1x32xf32, #tpu.memory_space<vmem>>, %arg11: memref<1x32xf32, #tpu.memory_space<vmem>>, %arg12: memref<1x32xf32, #tpu.memory_space<vmem>>, %arg13: memref<1x8x32xbf16, #tpu.memory_space<vmem>>, %arg14: memref<1x8x32xf32, #tpu.memory_space<vmem>>, %arg15: memref<8x32xbf16, #tpu.memory_space<vmem>>, %arg16: memref<8x32xbf16, #tpu.memory_space<vmem>>) attributes {dimension_semantics = [#tpu.dimension_semantics<parallel>, #tpu.dimension_semantics<arbitrary>], iteration_bounds = array<i64: 2, 1>, scalar_prefetch = 0 : i64, scratch_operands = 2 : i64, tpu.core_type = #tpu.core_type<tc>, window_params = [{transform_indices = @transform_0, window_bounds = array<i64: 1, 8, 32>}, {transform_indices = @transform_1, window_bounds = array<i64: 1, 8, 32>}, {transform_indices = @transform_2, window_bounds = array<i64: 1, 8, 8>}, {pipeline_mode = #tpu.pipeline_mode<synchronous>, transform_indices = @transform_3, window_bounds = array<i64: 32, 32>}, {pipeline_mode = #tpu.pipeline_mode<synchronous>, transform_indices = @transform_4, window_bounds = array<i64: 1, 32>}, {pipeline_mode = #tpu.pipeline_mode<synchronous>, transform_indices = @transform_5, window_bounds = array<i64: 32, 64>}, {pipeline_mode = #tpu.pipeline_mode<synchronous>, transform_indices = @transform_6, window_bounds = array<i64: 1, 64>}, {pipeline_mode = #tpu.pipeline_mode<synchronous>, transform_indices = @transform_7, window_bounds = array<i64: 32, 32>}, {pipeline_mode = #tpu.pipeline_mode<synchronous>, transform_indices = @transform_8, window_bounds = array<i64: 1, 32>}, {pipeline_mode = #tpu.pipeline_mode<synchronous>, transform_indices = @transform_9, window_bounds = array<i64: 1, 32>}, {pipeline_mode = #tpu.pipeline_mode<synchronous>, transform_indices = @transform_10, window_bounds = array<i64: 1, 32>}, {transform_indices = @transform_11, window_bounds = array<i64: 1, 8, 32>}, {transform_indices = @transform_12, window_bounds = array<i64: 1, 8, 32>}]} {
    %c0_i32 = arith.constant 0 : i32
    %0 = arith.cmpi eq, %arg1, %c0_i32 : i32
    %1 = arith.extui %0 : i1 to i32
    %c0_i32_0 = arith.constant 0 : i32
    %2 = arith.cmpi ne, %1, %c0_i32_0 : i32
    scf.if %2 {
      %c0_61 = arith.constant 0 : index
      %c0_62 = arith.constant 0 : index
      %c0_63 = arith.constant 0 : index
      %144 = vector.load %arg3[%c0_61, %c0_62, %c0_63] : memref<1x8x32xf32, #tpu.memory_space<vmem>>, vector<1x8x32xf32>
      %145 = vector.shape_cast %144 : vector<1x8x32xf32> to vector<8x32xf32>
      %146 = arith.truncf %145 : vector<8x32xf32> to vector<8x32xbf16>
      %c0_64 = arith.constant 0 : index
      %c0_65 = arith.constant 0 : index
      %147 = vector.load %arg7[%c0_64, %c0_65] : memref<32x64xbf16, #tpu.memory_space<vmem>>, vector<32x64xbf16>
      %cst_66 = arith.constant dense<0.000000e+00> : vector<8x64xf32>
      %148 = tpu.matmul %146, %147, %cst_66 {dimension_numbers = #tpu.dot_dimension_numbers<[1], [0], [0], [1], [0, 0, 1, 1], [], []>} : vector<8x32xbf16>, vector<32x64xbf16>, vector<8x64xf32> -> vector<8x64xf32>
      %c0_67 = arith.constant 0 : index
      %c0_68 = arith.constant 0 : index
      %149 = vector.load %arg8[%c0_67, %c0_68] : memref<1x64xf32, #tpu.memory_space<vmem>>, vector<1x64xf32>
      %150 = vector.broadcast %149 : vector<1x64xf32> to vector<8x64xf32>
      %151 = arith.addf %148, %150 : vector<8x64xf32>
      %152 = vector.extract_strided_slice %151 {offsets = [0, 0], sizes = [8, 32], strides = [1, 1]} : vector<8x64xf32> to vector<8x32xf32>
      %153 = arith.truncf %152 : vector<8x32xf32> to vector<8x32xbf16>
      %c0_69 = arith.constant 0 : index
      %c0_70 = arith.constant 0 : index
      %154 = vector.load %arg15[%c0_69, %c0_70] : memref<8x32xbf16, #tpu.memory_space<vmem>>, vector<8x32xbf16>
      tpu.vector_store %arg15[%c0_69, %c0_70], %153 {strides = array<i32>} : memref<8x32xbf16, #tpu.memory_space<vmem>>, vector<8x32xbf16>,
      %155 = vector.extract_strided_slice %151 {offsets = [0, 32], sizes = [8, 32], strides = [1, 1]} : vector<8x64xf32> to vector<8x32xf32>
      %156 = arith.truncf %155 : vector<8x32xf32> to vector<8x32xbf16>
      %c0_71 = arith.constant 0 : index
      %c0_72 = arith.constant 0 : index
      %157 = vector.load %arg16[%c0_71, %c0_72] : memref<8x32xbf16, #tpu.memory_space<vmem>>, vector<8x32xbf16>
      tpu.vector_store %arg16[%c0_71, %c0_72], %156 {strides = array<i32>} : memref<8x32xbf16, #tpu.memory_space<vmem>>, vector<8x32xbf16>,
    } else {
    }
    %c0 = arith.constant 0 : index
    %c0_1 = arith.constant 0 : index
    %c0_2 = arith.constant 0 : index
    %3 = vector.load %arg2[%c0, %c0_1, %c0_2] : memref<1x8x32xf32, #tpu.memory_space<vmem>>, vector<1x8x32xf32>
    %4 = vector.shape_cast %3 : vector<1x8x32xf32> to vector<8x32xf32>
    %5 = arith.truncf %4 : vector<8x32xf32> to vector<8x32xbf16>
    %c0_3 = arith.constant 0 : index
    %c0_4 = arith.constant 0 : index
    %6 = vector.load %arg5[%c0_3, %c0_4] : memref<32x32xbf16, #tpu.memory_space<vmem>>, vector<32x32xbf16>
    %cst = arith.constant dense<0.000000e+00> : vector<8x32xf32>
    %7 = tpu.matmul %5, %6, %cst {dimension_numbers = #tpu.dot_dimension_numbers<[1], [0], [0], [1], [0, 0, 1, 1], [], []>} : vector<8x32xbf16>, vector<32x32xbf16>, vector<8x32xf32> -> vector<8x32xf32>
    %c0_5 = arith.constant 0 : index
    %c0_6 = arith.constant 0 : index
    %8 = vector.load %arg6[%c0_5, %c0_6] : memref<1x32xf32, #tpu.memory_space<vmem>>, vector<1x32xf32>
    %9 = vector.broadcast %8 : vector<1x32xf32> to vector<8x32xf32>
    %10 = arith.addf %7, %9 : vector<8x32xf32>
    %c0_7 = arith.constant 0 : index
    %c0_8 = arith.constant 0 : index
    %c0_9 = arith.constant 0 : index
    %11 = vector.load %arg4[%c0_7, %c0_8, %c0_9] : memref<1x8x8xf32, #tpu.memory_space<vmem>>, vector<1x8x8xf32>
    %12 = vector.shape_cast %11 : vector<1x8x8xf32> to vector<8x8xf32>
    %cst_10 = arith.constant 0.000000e+00 : f32
    %13 = vector.broadcast %cst_10 : f32 to vector<8x8xf32>
    %14 = arith.cmpf ogt, %12, %13 : vector<8x8xf32>
    %c0_11 = arith.constant 0 : index
    %c0_12 = arith.constant 0 : index
    %15 = vector.load %arg15[%c0_11, %c0_12] : memref<8x32xbf16, #tpu.memory_space<vmem>>, vector<8x32xbf16>
    %c0_13 = arith.constant 0 : index
    %c0_14 = arith.constant 0 : index
    %16 = vector.load %arg16[%c0_13, %c0_14] : memref<8x32xbf16, #tpu.memory_space<vmem>>, vector<8x32xbf16>
    %c0_15 = arith.constant 0 : index
    %c0_16 = arith.constant 0 : index
    %17 = vector.load %arg9[%c0_15, %c0_16] : memref<32x32xbf16, #tpu.memory_space<vmem>>, vector<32x32xbf16>
    %18 = vector.extract_strided_slice %10 {offsets = [0, 0], sizes = [8, 8], strides = [1, 1]} : vector<8x32xf32> to vector<8x8xf32>
    %19 = arith.truncf %18 : vector<8x8xf32> to vector<8x8xbf16>
    %20 = vector.extract_strided_slice %15 {offsets = [0, 0], sizes = [8, 8], strides = [1, 1]} : vector<8x32xbf16> to vector<8x8xbf16>
    %21 = vector.extract_strided_slice %16 {offsets = [0, 0], sizes = [8, 8], strides = [1, 1]} : vector<8x32xbf16> to vector<8x8xbf16>
    %cst_17 = arith.constant dense<0.000000e+00> : vector<8x8xf32>
    %22 = tpu.matmul %19, %20, %cst_17 {dimension_numbers = #tpu.dot_dimension_numbers<[1], [1], [0], [0], [0, 0, 1, 0], [], []>} : vector<8x8xbf16>, vector<8x8xbf16>, vector<8x8xf32> -> vector<8x8xf32>
    %cst_18 = arith.constant -1.000000e+09 : f32
    %23 = vector.broadcast %cst_18 : f32 to vector<8x8xf32>
    %24 = arith.select %14, %22, %23 : vector<8x8xi1>, vector<8x8xf32>
    %cst_19 = arith.constant dense<0xFF800000> : vector<8xf32>
    %25 = vector.multi_reduction <maximumf>, %24, %cst_19 [1] : vector<8x8xf32> to vector<8xf32>
    %26 = vector.shape_cast %25 : vector<8xf32> to vector<8x1xf32>
    %27 = vector.broadcast %26 : vector<8x1xf32> to vector<8x8xf32>
    %28 = arith.subf %24, %27 : vector<8x8xf32>
    %29 = math.exp %28 : vector<8x8xf32>
    %cst_20 = arith.constant dense<0.000000e+00> : vector<8xf32>
    %30 = vector.multi_reduction <add>, %29, %cst_20 [1] : vector<8x8xf32> to vector<8xf32>
    %31 = vector.shape_cast %30 : vector<8xf32> to vector<8x1xf32>
    %32 = tpu.reciprocal %31 {approx = true} : vector<8x1xf32> -> vector<8x1xf32>
    %33 = vector.broadcast %32 : vector<8x1xf32> to vector<8x8xf32>
    %34 = arith.mulf %29, %33 : vector<8x8xf32>
    %35 = arith.truncf %34 : vector<8x8xf32> to vector<8x8xbf16>
    %cst_21 = arith.constant dense<0.000000e+00> : vector<8x8xf32>
    %36 = tpu.matmul %35, %21, %cst_21 {dimension_numbers = #tpu.dot_dimension_numbers<[1], [0], [0], [1], [0, 0, 1, 1], [], []>} : vector<8x8xbf16>, vector<8x8xbf16>, vector<8x8xf32> -> vector<8x8xf32>
    %37 = arith.truncf %36 : vector<8x8xf32> to vector<8x8xbf16>
    %38 = vector.extract_strided_slice %17 {offsets = [0, 0], sizes = [8, 32], strides = [1, 1]} : vector<32x32xbf16> to vector<8x32xbf16>
    %cst_22 = arith.constant dense<0.000000e+00> : vector<8x32xf32>
    %39 = tpu.matmul %37, %38, %cst_22 {dimension_numbers = #tpu.dot_dimension_numbers<[1], [0], [0], [1], [0, 0, 1, 1], [], []>} : vector<8x8xbf16>, vector<8x32xbf16>, vector<8x32xf32> -> vector<8x32xf32>
    %40 = vector.extract_strided_slice %10 {offsets = [0, 8], sizes = [8, 8], strides = [1, 1]} : vector<8x32xf32> to vector<8x8xf32>
    %41 = arith.truncf %40 : vector<8x8xf32> to vector<8x8xbf16>
    %42 = vector.extract_strided_slice %15 {offsets = [0, 8], sizes = [8, 8], strides = [1, 1]} : vector<8x32xbf16> to vector<8x8xbf16>
    %43 = vector.extract_strided_slice %16 {offsets = [0, 8], sizes = [8, 8], strides = [1, 1]} : vector<8x32xbf16> to vector<8x8xbf16>
    %cst_23 = arith.constant dense<0.000000e+00> : vector<8x8xf32>
    %44 = tpu.matmul %41, %42, %cst_23 {dimension_numbers = #tpu.dot_dimension_numbers<[1], [1], [0], [0], [0, 0, 1, 0], [], []>} : vector<8x8xbf16>, vector<8x8xbf16>, vector<8x8xf32> -> vector<8x8xf32>
    %cst_24 = arith.constant -1.000000e+09 : f32
    %45 = vector.broadcast %cst_24 : f32 to vector<8x8xf32>
    %46 = arith.select %14, %44, %45 : vector<8x8xi1>, vector<8x8xf32>
    %cst_25 = arith.constant dense<0xFF800000> : vector<8xf32>
    %47 = vector.multi_reduction <maximumf>, %46, %cst_25 [1] : vector<8x8xf32> to vector<8xf32>
    %48 = vector.shape_cast %47 : vector<8xf32> to vector<8x1xf32>
    %49 = vector.broadcast %48 : vector<8x1xf32> to vector<8x8xf32>
    %50 = arith.subf %46, %49 : vector<8x8xf32>
    %51 = math.exp %50 : vector<8x8xf32>
    %cst_26 = arith.constant dense<0.000000e+00> : vector<8xf32>
    %52 = vector.multi_reduction <add>, %51, %cst_26 [1] : vector<8x8xf32> to vector<8xf32>
    %53 = vector.shape_cast %52 : vector<8xf32> to vector<8x1xf32>
    %54 = tpu.reciprocal %53 {approx = true} : vector<8x1xf32> -> vector<8x1xf32>
    %55 = vector.broadcast %54 : vector<8x1xf32> to vector<8x8xf32>
    %56 = arith.mulf %51, %55 : vector<8x8xf32>
    %57 = arith.truncf %56 : vector<8x8xf32> to vector<8x8xbf16>
    %cst_27 = arith.constant dense<0.000000e+00> : vector<8x8xf32>
    %58 = tpu.matmul %57, %43, %cst_27 {dimension_numbers = #tpu.dot_dimension_numbers<[1], [0], [0], [1], [0, 0, 1, 1], [], []>} : vector<8x8xbf16>, vector<8x8xbf16>, vector<8x8xf32> -> vector<8x8xf32>
    %59 = arith.truncf %58 : vector<8x8xf32> to vector<8x8xbf16>
    %60 = vector.extract_strided_slice %17 {offsets = [8, 0], sizes = [8, 32], strides = [1, 1]} : vector<32x32xbf16> to vector<8x32xbf16>
    %cst_28 = arith.constant dense<0.000000e+00> : vector<8x32xf32>
    %61 = tpu.matmul %59, %60, %cst_28 {dimension_numbers = #tpu.dot_dimension_numbers<[1], [0], [0], [1], [0, 0, 1, 1], [], []>} : vector<8x8xbf16>, vector<8x32xbf16>, vector<8x32xf32> -> vector<8x32xf32>
    %62 = arith.addf %39, %61 : vector<8x32xf32>
    %63 = vector.extract_strided_slice %10 {offsets = [0, 16], sizes = [8, 8], strides = [1, 1]} : vector<8x32xf32> to vector<8x8xf32>
    %64 = arith.truncf %63 : vector<8x8xf32> to vector<8x8xbf16>
    %65 = vector.extract_strided_slice %15 {offsets = [0, 16], sizes = [8, 8], strides = [1, 1]} : vector<8x32xbf16> to vector<8x8xbf16>
    %66 = vector.extract_strided_slice %16 {offsets = [0, 16], sizes = [8, 8], strides = [1, 1]} : vector<8x32xbf16> to vector<8x8xbf16>
    %cst_29 = arith.constant dense<0.000000e+00> : vector<8x8xf32>
    %67 = tpu.matmul %64, %65, %cst_29 {dimension_numbers = #tpu.dot_dimension_numbers<[1], [1], [0], [0], [0, 0, 1, 0], [], []>} : vector<8x8xbf16>, vector<8x8xbf16>, vector<8x8xf32> -> vector<8x8xf32>
    %cst_30 = arith.constant -1.000000e+09 : f32
    %68 = vector.broadcast %cst_30 : f32 to vector<8x8xf32>
    %69 = arith.select %14, %67, %68 : vector<8x8xi1>, vector<8x8xf32>
    %cst_31 = arith.constant dense<0xFF800000> : vector<8xf32>
    %70 = vector.multi_reduction <maximumf>, %69, %cst_31 [1] : vector<8x8xf32> to vector<8xf32>
    %71 = vector.shape_cast %70 : vector<8xf32> to vector<8x1xf32>
    %72 = vector.broadcast %71 : vector<8x1xf32> to vector<8x8xf32>
    %73 = arith.subf %69, %72 : vector<8x8xf32>
    %74 = math.exp %73 : vector<8x8xf32>
    %cst_32 = arith.constant dense<0.000000e+00> : vector<8xf32>
    %75 = vector.multi_reduction <add>, %74, %cst_32 [1] : vector<8x8xf32> to vector<8xf32>
    %76 = vector.shape_cast %75 : vector<8xf32> to vector<8x1xf32>
    %77 = tpu.reciprocal %76 {approx = true} : vector<8x1xf32> -> vector<8x1xf32>
    %78 = vector.broadcast %77 : vector<8x1xf32> to vector<8x8xf32>
    %79 = arith.mulf %74, %78 : vector<8x8xf32>
    %80 = arith.truncf %79 : vector<8x8xf32> to vector<8x8xbf16>
    %cst_33 = arith.constant dense<0.000000e+00> : vector<8x8xf32>
    %81 = tpu.matmul %80, %66, %cst_33 {dimension_numbers = #tpu.dot_dimension_numbers<[1], [0], [0], [1], [0, 0, 1, 1], [], []>} : vector<8x8xbf16>, vector<8x8xbf16>, vector<8x8xf32> -> vector<8x8xf32>
    %82 = arith.truncf %81 : vector<8x8xf32> to vector<8x8xbf16>
    %83 = vector.extract_strided_slice %17 {offsets = [16, 0], sizes = [8, 32], strides = [1, 1]} : vector<32x32xbf16> to vector<8x32xbf16>
    %cst_34 = arith.constant dense<0.000000e+00> : vector<8x32xf32>
    %84 = tpu.matmul %82, %83, %cst_34 {dimension_numbers = #tpu.dot_dimension_numbers<[1], [0], [0], [1], [0, 0, 1, 1], [], []>} : vector<8x8xbf16>, vector<8x32xbf16>, vector<8x32xf32> -> vector<8x32xf32>
    %85 = arith.addf %62, %84 : vector<8x32xf32>
    %86 = vector.extract_strided_slice %10 {offsets = [0, 24], sizes = [8, 8], strides = [1, 1]} : vector<8x32xf32> to vector<8x8xf32>
    %87 = arith.truncf %86 : vector<8x8xf32> to vector<8x8xbf16>
    %88 = vector.extract_strided_slice %15 {offsets = [0, 24], sizes = [8, 8], strides = [1, 1]} : vector<8x32xbf16> to vector<8x8xbf16>
    %89 = vector.extract_strided_slice %16 {offsets = [0, 24], sizes = [8, 8], strides = [1, 1]} : vector<8x32xbf16> to vector<8x8xbf16>
    %cst_35 = arith.constant dense<0.000000e+00> : vector<8x8xf32>
    %90 = tpu.matmul %87, %88, %cst_35 {dimension_numbers = #tpu.dot_dimension_numbers<[1], [1], [0], [0], [0, 0, 1, 0], [], []>} : vector<8x8xbf16>, vector<8x8xbf16>, vector<8x8xf32> -> vector<8x8xf32>
    %cst_36 = arith.constant -1.000000e+09 : f32
    %91 = vector.broadcast %cst_36 : f32 to vector<8x8xf32>
    %92 = arith.select %14, %90, %91 : vector<8x8xi1>, vector<8x8xf32>
    %cst_37 = arith.constant dense<0xFF800000> : vector<8xf32>
    %93 = vector.multi_reduction <maximumf>, %92, %cst_37 [1] : vector<8x8xf32> to vector<8xf32>
    %94 = vector.shape_cast %93 : vector<8xf32> to vector<8x1xf32>
    %95 = vector.broadcast %94 : vector<8x1xf32> to vector<8x8xf32>
    %96 = arith.subf %92, %95 : vector<8x8xf32>
    %97 = math.exp %96 : vector<8x8xf32>
    %cst_38 = arith.constant dense<0.000000e+00> : vector<8xf32>
    %98 = vector.multi_reduction <add>, %97, %cst_38 [1] : vector<8x8xf32> to vector<8xf32>
    %99 = vector.shape_cast %98 : vector<8xf32> to vector<8x1xf32>
    %100 = tpu.reciprocal %99 {approx = true} : vector<8x1xf32> -> vector<8x1xf32>
    %101 = vector.broadcast %100 : vector<8x1xf32> to vector<8x8xf32>
    %102 = arith.mulf %97, %101 : vector<8x8xf32>
    %103 = arith.truncf %102 : vector<8x8xf32> to vector<8x8xbf16>
    %cst_39 = arith.constant dense<0.000000e+00> : vector<8x8xf32>
    %104 = tpu.matmul %103, %89, %cst_39 {dimension_numbers = #tpu.dot_dimension_numbers<[1], [0], [0], [1], [0, 0, 1, 1], [], []>} : vector<8x8xbf16>, vector<8x8xbf16>, vector<8x8xf32> -> vector<8x8xf32>
    %105 = arith.truncf %104 : vector<8x8xf32> to vector<8x8xbf16>
    %106 = vector.extract_strided_slice %17 {offsets = [24, 0], sizes = [8, 32], strides = [1, 1]} : vector<32x32xbf16> to vector<8x32xbf16>
    %cst_40 = arith.constant dense<0.000000e+00> : vector<8x32xf32>
    %107 = tpu.matmul %105, %106, %cst_40 {dimension_numbers = #tpu.dot_dimension_numbers<[1], [0], [0], [1], [0, 0, 1, 1], [], []>} : vector<8x8xbf16>, vector<8x32xbf16>, vector<8x32xf32> -> vector<8x32xf32>
    %108 = arith.addf %85, %107 : vector<8x32xf32>
    %c0_41 = arith.constant 0 : index
    %c0_42 = arith.constant 0 : index
    %109 = vector.load %arg10[%c0_41, %c0_42] : memref<1x32xf32, #tpu.memory_space<vmem>>, vector<1x32xf32>
    %110 = vector.broadcast %109 : vector<1x32xf32> to vector<8x32xf32>
    %111 = arith.addf %108, %110 : vector<8x32xf32>
    %112 = arith.truncf %111 : vector<8x32xf32> to vector<8x32xbf16>
    %c0_43 = arith.constant 0 : index
    %c0_44 = arith.constant 0 : index
    %c0_45 = arith.constant 0 : index
    %113 = vector.load %arg13[%c0_43, %c0_44, %c0_45] : memref<1x8x32xbf16, #tpu.memory_space<vmem>>, vector<1x8x32xbf16>
    %114 = vector.shape_cast %113 : vector<1x8x32xbf16> to vector<8x32xbf16>
    %115 = vector.shape_cast %112 : vector<8x32xbf16> to vector<1x8x32xbf16>
    tpu.vector_store %arg13[%c0_43, %c0_44, %c0_45], %115 {strides = array<i32>} : memref<1x8x32xbf16, #tpu.memory_space<vmem>>, vector<1x8x32xbf16>,
    %c0_46 = arith.constant 0 : index
    %c0_47 = arith.constant 0 : index
    %c0_48 = arith.constant 0 : index
    %116 = vector.load %arg2[%c0_46, %c0_47, %c0_48] : memref<1x8x32xf32, #tpu.memory_space<vmem>>, vector<1x8x32xf32>
    %117 = vector.shape_cast %116 : vector<1x8x32xf32> to vector<8x32xf32>
    %118 = arith.addf %117, %111 : vector<8x32xf32>
    %cst_49 = arith.constant dense<0.000000e+00> : vector<8xf32>
    %119 = vector.multi_reduction <add>, %118, %cst_49 [1] : vector<8x32xf32> to vector<8xf32>
    %120 = vector.shape_cast %119 : vector<8xf32> to vector<8x1xf32>
    %cst_50 = arith.constant 3.200000e+01 : f32
    %121 = vector.broadcast %cst_50 : f32 to vector<8x1xf32>
    %122 = arith.divf %120, %121 : vector<8x1xf32>
    %123 = vector.broadcast %122 : vector<8x1xf32> to vector<8x32xf32>
    %124 = arith.subf %118, %123 : vector<8x32xf32>
    %125 = arith.mulf %124, %124 : vector<8x32xf32>
    %cst_51 = arith.constant dense<0.000000e+00> : vector<8xf32>
    %126 = vector.multi_reduction <add>, %125, %cst_51 [1] : vector<8x32xf32> to vector<8xf32>
    %127 = vector.shape_cast %126 : vector<8xf32> to vector<8x1xf32>
    %cst_52 = arith.constant 3.200000e+01 : f32
    %128 = vector.broadcast %cst_52 : f32 to vector<8x1xf32>
    %129 = arith.divf %127, %128 : vector<8x1xf32>
    %cst_53 = arith.constant 9.99999974E-6 : f32
    %130 = vector.broadcast %cst_53 : f32 to vector<8x1xf32>
    %131 = arith.addf %129, %130 : vector<8x1xf32>
    %132 = math.rsqrt %131 : vector<8x1xf32>
    %133 = vector.broadcast %132 : vector<8x1xf32> to vector<8x32xf32>
    %134 = arith.mulf %124, %133 : vector<8x32xf32>
    %c0_54 = arith.constant 0 : index
    %c0_55 = arith.constant 0 : index
    %135 = vector.load %arg11[%c0_54, %c0_55] : memref<1x32xf32, #tpu.memory_space<vmem>>, vector<1x32xf32>
    %136 = vector.broadcast %135 : vector<1x32xf32> to vector<8x32xf32>
    %137 = arith.mulf %134, %136 : vector<8x32xf32>
    %c0_56 = arith.constant 0 : index
    %c0_57 = arith.constant 0 : index
    %138 = vector.load %arg12[%c0_56, %c0_57] : memref<1x32xf32, #tpu.memory_space<vmem>>, vector<1x32xf32>
    %139 = vector.broadcast %138 : vector<1x32xf32> to vector<8x32xf32>
    %140 = arith.addf %137, %139 : vector<8x32xf32>
    %c0_58 = arith.constant 0 : index
    %c0_59 = arith.constant 0 : index
    %c0_60 = arith.constant 0 : index
    %141 = vector.load %arg14[%c0_58, %c0_59, %c0_60] : memref<1x8x32xf32, #tpu.memory_space<vmem>>, vector<1x8x32xf32>
    %142 = vector.shape_cast %141 : vector<1x8x32xf32> to vector<8x32xf32>
    %143 = vector.shape_cast %140 : vector<8x32xf32> to vector<1x8x32xf32>
    tpu.vector_store %arg14[%c0_58, %c0_59, %c0_60], %143 {strides = array<i32>} : memref<1x8x32xf32, #tpu.memory_space<vmem>>, vector<1x8x32xf32>,
    return
  }
  func.func @transform_0(%arg0: i32, %arg1: i32) -> (i32, i32, i32) {
    %c0_i32 = arith.constant 0 : i32
    %c0_i32_0 = arith.constant 0 : i32
    return %arg0, %arg1, %c0_i32 : i32, i32, i32
  }
  func.func @transform_1(%arg0: i32, %arg1: i32) -> (i32, i32, i32) {
    %c0_i32 = arith.constant 0 : i32
    %c0_i32_0 = arith.constant 0 : i32
    %c0_i32_1 = arith.constant 0 : i32
    return %arg0, %c0_i32, %c0_i32_0 : i32, i32, i32
  }
  func.func @transform_2(%arg0: i32, %arg1: i32) -> (i32, i32, i32) {
    %c0_i32 = arith.constant 0 : i32
    %c0_i32_0 = arith.constant 0 : i32
    return %arg0, %arg1, %c0_i32 : i32, i32, i32
  }
  func.func @transform_3(%arg0: i32, %arg1: i32) -> (i32, i32) {
    %c0_i32 = arith.constant 0 : i32
    %c0_i32_0 = arith.constant 0 : i32
    %c0_i32_1 = arith.constant 0 : i32
    return %c0_i32, %c0_i32_0 : i32, i32
  }
  func.func @transform_4(%arg0: i32, %arg1: i32) -> (i32, i32) {
    %c0_i32 = arith.constant 0 : i32
    %c0_i32_0 = arith.constant 0 : i32
    %c0_i32_1 = arith.constant 0 : i32
    return %c0_i32, %c0_i32_0 : i32, i32
  }
  func.func @transform_5(%arg0: i32, %arg1: i32) -> (i32, i32) {
    %c0_i32 = arith.constant 0 : i32
    %c0_i32_0 = arith.constant 0 : i32
    %c0_i32_1 = arith.constant 0 : i32
    return %c0_i32, %c0_i32_0 : i32, i32
  }
  func.func @transform_6(%arg0: i32, %arg1: i32) -> (i32, i32) {
    %c0_i32 = arith.constant 0 : i32
    %c0_i32_0 = arith.constant 0 : i32
    %c0_i32_1 = arith.constant 0 : i32
    return %c0_i32, %c0_i32_0 : i32, i32
  }
  func.func @transform_7(%arg0: i32, %arg1: i32) -> (i32, i32) {
    %c0_i32 = arith.constant 0 : i32
    %c0_i32_0 = arith.constant 0 : i32
    %c0_i32_1 = arith.constant 0 : i32
    return %c0_i32, %c0_i32_0 : i32, i32
  }
  func.func @transform_8(%arg0: i32, %arg1: i32) -> (i32, i32) {
    %c0_i32 = arith.constant 0 : i32
    %c0_i32_0 = arith.constant 0 : i32
    %c0_i32_1 = arith.constant 0 : i32
    return %c0_i32, %c0_i32_0 : i32, i32
  }
  func.func @transform_9(%arg0: i32, %arg1: i32) -> (i32, i32) {
    %c0_i32 = arith.constant 0 : i32
    %c0_i32_0 = arith.constant 0 : i32
    %c0_i32_1 = arith.constant 0 : i32
    return %c0_i32, %c0_i32_0 : i32, i32
  }
  func.func @transform_10(%arg0: i32, %arg1: i32) -> (i32, i32) {
    %c0_i32 = arith.constant 0 : i32
    %c0_i32_0 = arith.constant 0 : i32
    %c0_i32_1 = arith.constant 0 : i32
    return %c0_i32, %c0_i32_0 : i32, i32
  }
  func.func @transform_11(%arg0: i32, %arg1: i32) -> (i32, i32, i32) {
    %c0_i32 = arith.constant 0 : i32
    %c0_i32_0 = arith.constant 0 : i32
    return %arg0, %arg1, %c0_i32 : i32, i32, i32
  }
  func.func @transform_12(%arg0: i32, %arg1: i32) -> (i32, i32, i32) {
    %c0_i32 = arith.constant 0 : i32
    %c0_i32_0 = arith.constant 0 : i32
    return %arg0, %arg1, %c0_i32 : i32, i32, i32
  }
}

</mosaic_0001>

<llo_original>
// kernel: decoder_layer_forward.5
$region0: #{decoder_layer_forward.5}
  #allocation0 [shape = 'u32[]', space=smem, size = 0x4, offset = 0x4, fixed_abs, tag = 'smem constant byte address 0x4 - core index']
  #allocation1 [shape = 'u32[144,128]{1,0:T(1,128)}', space=vmem, size = 0x12000, scoped, tag = 'internal scratch']
  #allocation2 [shape = 'f32[16,32]{1,0:T(8,128)}', space=vmem, size = 0x2000, scoped, tag = 'scratch operand']
  %s0 = inlined_call_operand.vmem [shape: f32[16,32], index: 0, kind: input, shape index: {}]
  %s1 = inlined_call_operand.vmem [shape: bf16[32,64], index: 1, kind: input, shape index: {}]
  %s2 = inlined_call_operand.vmem [shape: f32[1,64], index: 2, kind: input, shape index: {}]
  %s3 = inlined_call_operand.vmem [shape: bf16[64,32], index: 3, kind: input, shape index: {}]
  %s4 = inlined_call_operand.vmem [shape: f32[1,32], index: 4, kind: input, shape index: {}]
  %s5 = inlined_call_operand.vmem [shape: f32[1,32], index: 5, kind: input, shape index: {}]
  %s6 = inlined_call_operand.vmem [shape: f32[1,32], index: 6, kind: input, shape index: {}]
  %s7 = inlined_call_operand.hbm [shape: f32[16,32], index: 7, kind: output, shape index: {}]
  %s8 = sld [smem:[#allocation0]]
  $region46: #{decoder_layer_forward.5} parent=0
    _
  %s10 = ssub.s32 1, %s8
  %s11 = scalar_select 0, %s10, %s8
  $region1: #{decoder_layer_forward.5} parent=0
    #allocation3 [shape = 'u8[8192]{0}', space=vmem, size = 0x2000, scoped, tag = 'output window, operand 0, single buffered']
    #allocation4 [shape = 's32[1]{0}', space=sflag, size = 0x4, scoped, tag = 'scoped memory for decoder_layer_forward.5']
    %12 = vsyncpa [#allocation4], 0
    // Predicated region
    $region2: #{decoder_layer_forward.5} parent=1 // pred_check
      _
    $region3: #{decoder_layer_forward.5} parent=1 // pred_check_branch
      %14 = sbr.rel (0) target = $region5
    $region4: #{decoder_layer_forward.5} parent=1 // pred_region
      _
    $region5: #{decoder_layer_forward.5} parent=1 // pred_fallthru
      _
    // Predicated region
    $region6: #{decoder_layer_forward.5} parent=1 // pred_check
      _
    $region7: #{decoder_layer_forward.5} parent=1 // pred_check_branch
      %16 = sbr.rel (0) target = $region9
    $region8: #{decoder_layer_forward.5} parent=1 // pred_region
      _
    $region9: #{decoder_layer_forward.5} parent=1 // pred_fallthru
      _
    // Predicated region
    $region10: #{decoder_layer_forward.5} parent=1 // pred_check
      _
    $region11: #{decoder_layer_forward.5} parent=1 // pred_check_branch
      %18 = sbr.rel (0) target = $region13
    $region12: #{decoder_layer_forward.5} parent=1 // pred_region
      _
    $region13: #{decoder_layer_forward.5} parent=1 // pred_fallthru
      _
    // Predicated region
    $region14: #{decoder_layer_forward.5} parent=1 // pred_check
      _
    $region15: #{decoder_layer_forward.5} parent=1 // pred_check_branch
      %20 = sbr.rel (0) target = $region17
    $region16: #{decoder_layer_forward.5} parent=1 // pred_region
      _
    $region17: #{decoder_layer_forward.5} parent=1 // pred_fallthru
      _
    // Predicated region
    $region18: #{decoder_layer_forward.5} parent=1 // pred_check
      _
    $region19: #{decoder_layer_forward.5} parent=1 // pred_check_branch
      %22 = sbr.rel (0) target = $region21
    $region20: #{decoder_layer_forward.5} parent=1 // pred_region
      _
    $region21: #{decoder_layer_forward.5} parent=1 // pred_fallthru
      _
    // Predicated region
    $region22: #{decoder_layer_forward.5} parent=1 // pred_check
      _
    $region23: #{decoder_layer_forward.5} parent=1 // pred_check_branch
      %24 = sbr.rel (0) target = $region25
    $region24: #{decoder_layer_forward.5} parent=1 // pred_region
      _
    $region25: #{decoder_layer_forward.5} parent=1 // pred_fallthru
      _
    // Predicated region
    $region26: #{decoder_layer_forward.5} parent=1 // pred_check
      _
    $region27: #{decoder_layer_forward.5} parent=1 // pred_check_branch
      %26 = sbr.rel (0) target = $region29
    $region28: #{decoder_layer_forward.5} parent=1 // pred_region
      _
    $region29: #{decoder_layer_forward.5} parent=1 // pred_fallthru
      _
    %p28 = scmp.eq.s32.totalorder 0, 0
    // Predicated region
    $region30: #{decoder_layer_forward.5} parent=1 // pred_check
      %p29 = pneg %p28
    $region31: #{decoder_layer_forward.5} parent=1 // pred_check_branch
      %31 = sbr.rel (%p29) target = $region33
    $region32: #{decoder_layer_forward.5} parent=1 // pred_region
      %vm32 = vcmask 261120
      %33 = vst.msk [vmem:[#allocation2] sm:$0xff] %vm32, 0.0
      %34 = vst.msk [vmem:[#allocation2 + $0x8] sm:$0xff] %vm32, 0.0
    $region33: #{decoder_layer_forward.5} parent=1 // pred_fallthru
      _
    %v35 = vld [vmem:[%s0] sm:$0xff]
    %v36 = vld [vmem:[%s0 + $0x8] sm:$0xff]
    %v37 = vpack.c.bf16 %v36, %v35
    %v38 = vld [vmem:[%s1] sm:$0xf]
    %v39 = vld [vmem:[%s1 + $0x4] sm:$0xf]
    %v40 = vld [vmem:[%s1 + $0x8] sm:$0xf]
    %v41 = vld [vmem:[%s1 + $0xc] sm:$0xf]
    %v42 = vld [vmem:[%s2] sm:$0x1]
    %v44 = vlaneseq
    %v45 = vshrl.u32 %v44, 7
    %v46 = vsub.s32 0, %v45
    %v47 = vrot.slane %v42, %v46
    %v53 = vunpack.c.l.b16 %v38
    %v54 = vunpack.c.l.b16 %v39
    %v55 = vunpack.c.l.b16 %v40
    %v56 = vunpack.c.l.b16 %v41
    %v57 = vpack.c.b16 %v54, %v53
    %v58 = vpack.c.b16 %v56, %v55
    %vm61 = vcmask 261120
    %v63 = vsel %vm61, %v37, 0
    %65 = vmatprep.subr.bf16.mxu0 0
    %66 = vmatpush1.bf16.msra.mxu0 %v57
    %67 = vmatprep.subr.bf16.mxu0 0
    %68 = vmatpush1.bf16.msra.mxu0 %v58
    %69 = vmatprep.subr.bf16.mxu0 0
    %70 = vmatpush1.bf16.msra.mxu0 0
    %71 = vmatprep.subr.bf16.mxu0 0
    %72 = vmatpush1.bf16.msra.mxu0 0
    %73 = vmatprep.subr.bf16.mxu0 0
    %74 = vmatpush1.bf16.msra.mxu0 0
    %75 = vmatprep.subr.bf16.mxu0 0
    %76 = vmatpush1.bf16.msra.mxu0 0
    %77 = vmatprep.subr.bf16.mxu0 0
    %78 = vmatpush1.bf16.msra.mxu0 0
    %79 = vmatprep.subr.bf16.mxu0 0
    %80 = vmatpush1.bf16.msra.mxu0 0
    %81 = vmatprep.subr.bf16.mxu0 0
    %82 = vmatpush1.bf16.msra.mxu0 0
    %83 = vmatprep.subr.bf16.mxu0 0
    %84 = vmatpush1.bf16.msra.mxu0 0
    %85 = vmatprep.subr.bf16.mxu0 0
    %86 = vmatpush1.bf16.msra.mxu0 0
    %87 = vmatprep.subr.bf16.mxu0 0
    %88 = vmatpush1.bf16.msra.mxu0 0
    %89 = vmatprep.subr.bf16.mxu0 0
    %90 = vmatpush1.bf16.msra.mxu0 0
    %91 = vmatprep.subr.bf16.mxu0 0
    %92 = vmatpush1.bf16.msra.mxu0 0
    %93 = vmatprep.subr.bf16.mxu0 0
    %94 = vmatpush1.bf16.msra.mxu0 0
    %95 = vmatprep.subr.bf16.mxu0 0
    %96 = vmatpush1.bf16.msra.mxu0 0
    %97 = vmatprep.mubr.bf16.mxu0 0
    %98 = vmatmul.mubr.bf16.gmra.mrb[0].mxu0 %v63
    %v99 = vpop.f32.mrb[0].mxu0
    %v100 = vadd.f32 %v47, %v99
    %v101 = vpop.f32.mrb[0].mxu0
    %v102 = vpop.f32.mrb[0].mxu0
    %v103 = vadd.f32 %v47, %v102
    %v104 = vpop.f32.mrb[0].mxu0
    %105 = vdwg.mxu0
    %v106 = vmax.f32 %v100, 0.0
    %v107 = vmax.f32 %v103, 0.0
    %v108 = vld [vmem:[#allocation2] sm:$0xff]
    %v109 = vld [vmem:[#allocation2 + $0x8] sm:$0xff]
    %v110 = vpack.c.bf16 %v107, %v106
    %v111 = vld [vmem:[%s3] sm:$0xf]
    %v112 = vld [vmem:[%s3 + $0x4] sm:$0xf]
    %v113 = vld [vmem:[%s3 + $0x8] sm:$0xf]
    %v114 = vld [vmem:[%s3 + $0xc] sm:$0xf]
    %v115 = vld [vmem:[%s3 + $0x10] sm:$0xf]
    %v116 = vld [vmem:[%s3 + $0x14] sm:$0xf]
    %v117 = vld [vmem:[%s3 + $0x18] sm:$0xf]
    %v118 = vld [vmem:[%s3 + $0x1c] sm:$0xf]
    %v127 = vunpack.c.l.b16 %v111
    %v128 = vunpack.c.l.b16 %v112
    %v129 = vunpack.c.l.b16 %v113
    %v130 = vunpack.c.l.b16 %v114
    %v131 = vunpack.c.l.b16 %v115
    %v132 = vunpack.c.l.b16 %v116
    %v133 = vunpack.c.l.b16 %v117
    %v134 = vunpack.c.l.b16 %v118
    %v135 = vpack.c.b16 %v128, %v127
    %v136 = vpack.c.b16 %v130, %v129
    %v137 = vpack.c.b16 %v132, %v131
    %v138 = vpack.c.b16 %v134, %v133
    %vm143 = vcmask 523264
    %v145 = vsel %vm143, %v110, 0
    %147 = vmatprep.subr.bf16.mxu0 0
    %148 = vmatpush1.bf16.msra.mxu0 %v135
    %149 = vmatprep.subr.bf16.mxu0 0
    %150 = vmatpush1.bf16.msra.mxu0 %v136
    %151 = vmatprep.subr.bf16.mxu0 0
    %152 = vmatpush1.bf16.msra.mxu0 %v137
    %153 = vmatprep.subr.bf16.mxu0 0
    %154 = vmatpush1.bf16.msra.mxu0 %v138
    %155 = vmatprep.subr.bf16.mxu0 0
    %156 = vmatpush1.bf16.msra.mxu0 0
    %157 = vmatprep.subr.bf16.mxu0 0
    %158 = vmatpush1.bf16.msra.mxu0 0
    %159 = vmatprep.subr.bf16.mxu0 0
    %160 = vmatpush1.bf16.msra.mxu0 0
    %161 = vmatprep.subr.bf16.mxu0 0
    %162 = vmatpush1.bf16.msra.mxu0 0
    %163 = vmatprep.subr.bf16.mxu0 0
    %164 = vmatpush1.bf16.msra.mxu0 0
    %165 = vmatprep.subr.bf16.mxu0 0
    %166 = vmatpush1.bf16.msra.mxu0 0
    %167 = vmatprep.subr.bf16.mxu0 0
    %168 = vmatpush1.bf16.msra.mxu0 0
    %169 = vmatprep.subr.bf16.mxu0 0
    %170 = vmatpush1.bf16.msra.mxu0 0
    %171 = vmatprep.subr.bf16.mxu0 0
    %172 = vmatpush1.bf16.msra.mxu0 0
    %173 = vmatprep.subr.bf16.mxu0 0
    %174 = vmatpush1.bf16.msra.mxu0 0
    %175 = vmatprep.subr.bf16.mxu0 0
    %176 = vmatpush1.bf16.msra.mxu0 0
    %177 = vmatprep.subr.bf16.mxu0 0
    %178 = vmatpush1.bf16.msra.mxu0 0
    %179 = vmatprep.mubr.bf16.mxu0 0
    %180 = vmatmul.mubr.bf16.gmra.mrb[0].mxu0 %v145
    %v181 = vpop.f32.mrb[0].mxu0
    %v182 = vadd.f32 0.0, %v181
    %v183 = vpop.f32.mrb[0].mxu0
    %v184 = vpop.f32.mrb[0].mxu0
    %v185 = vadd.f32 0.0, %v184
    %v186 = vpop.f32.mrb[0].mxu0
    %187 = vdwg.mxu0
    %v188 = vadd.f32 %v108, %v182
    %v189 = vadd.f32 %v109, %v185
    %190 = vst.msk [vmem:[#allocation2] sm:$0xff] %vm61, %v188
    %191 = vst.msk [vmem:[#allocation2 + $0x8] sm:$0xff] %vm61, %v189
    // Predicated region
    $region34: #{decoder_layer_forward.5} parent=1 // pred_check
      %p192 = pneg %p28
    $region35: #{decoder_layer_forward.5} parent=1 // pred_check_branch
      %194 = sbr.rel (%p192) target = $region37
    $region36: #{decoder_layer_forward.5} parent=1 // pred_region
      %v195 = vld [vmem:[#allocation2] sm:$0xff]
      %v196 = vld [vmem:[#allocation2 + $0x8] sm:$0xff]
      %v197 = vadd.f32 %v35, %v195
      %v198 = vadd.f32 %v36, %v196
      %v199 = vld [vmem:[%s4] sm:$0x1]
      %v201 = vlaneseq
      %v202 = vshrl.u32 %v201, 7
      %v203 = vsub.s32 0, %v202
      %v204 = vrot.slane %v199, %v203
      %v206 = vadd.f32 %v197, %v204
      %v207 = vadd.f32 %v198, %v204
      %v208 = vsel %vm61, %v206, 0.0
      %209 = vadd.xlane.f32.xlu0 %v208
      %v210 = vpop.xlane.xlu0 %209
      %v211 = vsel %vm61, %v207, 0.0
      %212 = vadd.xlane.f32.xlu0 %v211
      %v213 = vpop.xlane.xlu0 %212
      %v214 = vrcp.pop 32.0
      %v215 = vmul.f32 %v210, %v214
      %v216 = vmul.f32 %v213, %v214
      %v217 = vsub.f32 %v206, %v215
      %v218 = vsub.f32 %v207, %v216
      %v219 = vmul.f32 %v217, %v217
      %v220 = vmul.f32 %v218, %v218
      %v221 = vsel %vm61, %v219, 0.0
      %222 = vadd.xlane.f32.xlu0 %v221
      %v223 = vpop.xlane.xlu0 %222
      %v224 = vsel %vm61, %v220, 0.0
      %225 = vadd.xlane.f32.xlu0 %v224
      %v226 = vpop.xlane.xlu0 %225
      %v227 = vmul.f32 %v223, %v214
      %v228 = vmul.f32 %v226, %v214
      %v229 = vadd.f32 %v227, 1e-05
      %v230 = vadd.f32 %v228, 1e-05
      %v231 = vrsqrt.pop %v229
      %v232 = vrsqrt.pop %v230
      %v233 = vmul.f32 %v217, %v231
      %v234 = vmul.f32 %v218, %v232
      %v235 = vld [vmem:[%s5] sm:$0x1]
      %v237 = vlaneseq
      %v238 = vshrl.u32 %v237, 7
      %v239 = vsub.s32 0, %v238
      %v240 = vrot.slane %v235, %v239
      %v242 = vmul.f32 %v233, %v240
      %v243 = vmul.f32 %v234, %v240
      %v244 = vld [vmem:[%s6] sm:$0x1]
      %v246 = vlaneseq
      %v247 = vshrl.u32 %v246, 7
      %v248 = vsub.s32 0, %v247
      %v249 = vrot.slane %v244, %v248
      %v251 = vadd.f32 %v242, %v249
      %v252 = vadd.f32 %v243, %v249
      %253 = vst.msk [vmem:[#allocation3] sm:$0xff] %vm61, %v251
      %254 = vst.msk [vmem:[#allocation3 + $0x8] sm:$0xff] %vm61, %v252
    $region37: #{decoder_layer_forward.5} parent=1 // pred_fallthru
      _
    // Predicated region
    $region38: #{decoder_layer_forward.5} parent=1 // pred_check
      _
    $region39: #{decoder_layer_forward.5} parent=1 // pred_check_branch
      %256 = sbr.rel (0) target = $region41
    $region40: #{decoder_layer_forward.5} parent=1 // pred_region
      %s258 = ssub.s32 256, 256
      %259 = vsyncadd [#allocation4], %s258
      %s260 = sshll.u32 [#allocation3], 4
      %s261 = int_to_ptr.vmem [resolvable:$true] %s260
      %266 = dma.vmem_to_hbm [thread:$0]  %s261, 256, %s7, [#allocation4], 128, 128, 8
    $region41: #{decoder_layer_forward.5} parent=1 // pred_fallthru
      _
    // Predicated region
    $region42: #{decoder_layer_forward.5} parent=1 // pred_check
      _
    $region43: #{decoder_layer_forward.5} parent=1 // pred_check_branch
      %268 = sbr.rel (0) target = $region45
    $region44: #{decoder_layer_forward.5} parent=1 // pred_region
      %269 = dma.done [#allocation4], 256
    $region45: #{decoder_layer_forward.5} parent=1 // pred_fallthru
      _
    %270 = vsyncpa [#allocation4], 1

// kernel: decoder_layer_forward.4
$region0: #{decoder_layer_forward.4}
  #allocation0 [shape = 'u32[]', space=smem, size = 0x4, offset = 0x4, fixed_abs, tag = 'smem constant byte address 0x4 - core index']
  #allocation1 [shape = 'u32[144,128]{1,0:T(1,128)}', space=vmem, size = 0x12000, scoped, tag = 'internal scratch']
  #allocation2 [shape = 'bf16[16,32]{1,0:T(16,128)(2,1)}', space=vmem, size = 0x1000, scoped, tag = 'scratch operand']
  #allocation3 [shape = 'bf16[16,32]{1,0:T(16,128)(2,1)}', space=vmem, size = 0x1000, scoped, tag = 'scratch operand']
  %s0 = inlined_call_operand.vmem [shape: bf16[2,8,32], index: 0, kind: input, shape index: {}]
  %s1 = inlined_call_operand.vmem [shape: f32[2,16,32], index: 1, kind: input, shape index: {}]
  %s2 = inlined_call_operand.vmem [shape: f32[2,8,16], index: 2, kind: input, shape index: {}]
  %s3 = inlined_call_operand.vmem [shape: f32[2,8,32], index: 3, kind: input, shape index: {}]
  %s4 = inlined_call_operand.vmem [shape: bf16[32,32], index: 4, kind: input, shape index: {}]
  %s5 = inlined_call_operand.vmem [shape: f32[1,32], index: 5, kind: input, shape index: {}]
  %s6 = inlined_call_operand.vmem [shape: bf16[32,64], index: 6, kind: input, shape index: {}]
  %s7 = inlined_call_operand.vmem [shape: f32[1,64], index: 7, kind: input, shape index: {}]
  %s8 = inlined_call_operand.vmem [shape: bf16[32,32], index: 8, kind: input, shape index: {}]
  %s9 = inlined_call_operand.vmem [shape: f32[1,32], index: 9, kind: input, shape index: {}]
  %s10 = inlined_call_operand.vmem [shape: f32[1,32], index: 10, kind: input, shape index: {}]
  %s11 = inlined_call_operand.vmem [shape: f32[1,32], index: 11, kind: input, shape index: {}]
  %s12 = inlined_call_operand.vmem [shape: f32[2,8,32], index: 12, kind: output, shape index: {}]
  %s13 = sld [smem:[#allocation0]]
  $region85: #{decoder_layer_forward.4} parent=0
    _
  %s15 = ssub.s32 1, %s13
  %s16 = scalar_select 0, %s15, %s13
  loop: start=0, step=1, limit=4
  $region2: #{decoder_layer_forward.4} parent=0 // loop_pre_header
    _
  $region3: #{decoder_layer_forward.4} parent=0 // loop_header
    %s18 = sphi 0, %s22
    %p19 = scmp.ge.s32.totalorder %s18, 4
    %s25 = sphi 0, %s37
    %s26 = sphi 0, %s33
    %s27 = sphi 0, %s25
    %s28 = sphi 0, %s26
    %s29 = sphi 0, %s27
    %s30 = sphi 0, %s28
    %s42 = sphi 0, %s44
    %s45 = sphi 0, %s42
    %s46 = sphi 0, %s45
    %s62 = sphi 0, %s46
    %s68 = sphi 0, %s70
    %s71 = sphi 0, %s68
    %s72 = sphi 0, %s71
    %s88 = sphi 0, %s72
    %s96 = sphi 0, %s98
    %s99 = sphi 0, %s96
    %s100 = sphi 0, %s99
    %s116 = sphi 0, %s100
    %s124 = sphi 0, %s126
    %s127 = sphi 0, %s124
    %s128 = sphi 0, %s127
    %s144 = sphi 0, %s128
    %s148 = sphi 0, %s148
    %s150 = sphi 0, %s148
    %s151 = sphi 0, %s150
    %s165 = sphi 0, %s151
    %s169 = sphi 0, %s169
    %s171 = sphi 0, %s169
    %s172 = sphi 0, %s171
    %s186 = sphi 0, %s172
    %s190 = sphi 0, %s190
    %s192 = sphi 0, %s190
    %s193 = sphi 0, %s192
    %s207 = sphi 0, %s193
    %s211 = sphi 0, %s211
    %s213 = sphi 0, %s211
    %s214 = sphi 0, %s213
    %s228 = sphi 0, %s214
    %s232 = sphi 0, %s232
    %s234 = sphi 0, %s232
    %s235 = sphi 0, %s234
    %s249 = sphi 0, %s235
    %s253 = sphi 0, %s253
    %s255 = sphi 0, %s253
    %s256 = sphi 0, %s255
    %s270 = sphi 0, %s256
    %s274 = sphi 0, %s274
    %s276 = sphi 0, %s274
    %s277 = sphi 0, %s276
    %s291 = sphi 0, %s277
    %s295 = sphi 0, %s295
    %s297 = sphi 0, %s295
    %s298 = sphi 0, %s297
    %s312 = sphi 0, %s298
    %s320 = sphi 0, %s322
    %s323 = sphi 0, %s320
    %s324 = sphi 0, %s323
    %s340 = sphi 0, %s324
  $region4: #{decoder_layer_forward.4} parent=0 // loop_header_branch
    %21 = sbr.rel (%p19) target = $region8
  $region5: #{decoder_layer_forward.4} parent=0 // loop_body
    %s23 = ssub.s32 %s18, 1
    %s24 = ssub.s32 %s18, 2
    %s31 = sadd.s32 1, %s26
    %p32 = scmp.ge.s32.totalorder %s31, 1
    %s33 = scalar_select %p32, 0, %s31
    %s34 = sadd.s32 1, %s25
    %s35 = scalar_select %p32, %s34, %s25
    %p36 = scmp.ge.s32.totalorder %s35, 2
    %s37 = scalar_select %p36, 0, %s35
    %s38 = ssub.s32 %s25, %s37
    %s39 = ssub.s32 %s26, %s33
    %s40 = sor.u32 %s38, %s39
    %p41 = scmp.eq.s32.totalorder %s40, 0
    %s43 = sadd.s32 %s42, 1
    %s44 = scalar_select %p41, %s42, %s43
    %p47 = pneg %p41
    %p48 = scmp.eq.s32.totalorder %s18, 1
    %p49 = por %p47, %p48
    %p50 = scmp.ne.s32.totalorder %s42, %s45
    %p51 = scmp.eq.s32.totalorder %s18, 0
    %p52 = por %p50, %p51
    %p53 = scmp.ne.s32.totalorder %s42, %s45
    %p54 = scmp.eq.s32.totalorder %s23, 1
    %p55 = por %p53, %p54
    %p56 = scmp.ne.s32.totalorder %s45, %s46
    %p57 = scmp.eq.s32.totalorder %s23, 0
    %p58 = por %p56, %p57
    %p59 = scmp.ne.s32.totalorder %s45, %s46
    %p60 = scmp.eq.s32.totalorder %s24, 1
    %p61 = por %p59, %p60
    %p63 = scmp.ne.s32.totalorder %s46, %s62
    %p64 = scmp.eq.s32.totalorder %s24, 0
    %p65 = por %p63, %p64
    %s66 = ssub.s32 %s25, %s37
    %p67 = scmp.eq.s32.totalorder %s66, 0
    %s69 = sadd.s32 %s68, 1
    %s70 = scalar_select %p67, %s68, %s69
    %p73 = pneg %p67
    %p74 = scmp.eq.s32.totalorder %s18, 1
    %p75 = por %p73, %p74
    %p76 = scmp.ne.s32.totalorder %s68, %s71
    %p77 = scmp.eq.s32.totalorder %s18, 0
    %p78 = por %p76, %p77
    %p79 = scmp.ne.s32.totalorder %s68, %s71
    %p80 = scmp.eq.s32.totalorder %s23, 1
    %p81 = por %p79, %p80
    %p82 = scmp.ne.s32.totalorder %s71, %s72
    %p83 = scmp.eq.s32.totalorder %s23, 0
    %p84 = por %p82, %p83
    %p85 = scmp.ne.s32.totalorder %s71, %s72
    %p86 = scmp.eq.s32.totalorder %s24, 1
    %p87 = por %p85, %p86
    %p89 = scmp.ne.s32.totalorder %s72, %s88
    %p90 = scmp.eq.s32.totalorder %s24, 0
    %p91 = por %p89, %p90
    %s92 = ssub.s32 %s25, %s37
    %s93 = ssub.s32 %s26, %s33
    %s94 = sor.u32 %s92, %s93
    %p95 = scmp.eq.s32.totalorder %s94, 0
    %s97 = sadd.s32 %s96, 1
    %s98 = scalar_select %p95, %s96, %s97
    %p101 = pneg %p95
    %p102 = scmp.eq.s32.totalorder %s18, 1
    %p103 = por %p101, %p102
    %p104 = scmp.ne.s32.totalorder %s96, %s99
    %p105 = scmp.eq.s32.totalorder %s18, 0
    %p106 = por %p104, %p105
    %p107 = scmp.ne.s32.totalorder %s96, %s99
    %p108 = scmp.eq.s32.totalorder %s23, 1
    %p109 = por %p107, %p108
    %p110 = scmp.ne.s32.totalorder %s99, %s100
    %p111 = scmp.eq.s32.totalorder %s23, 0
    %p112 = por %p110, %p111
    %p113 = scmp.ne.s32.totalorder %s99, %s100
    %p114 = scmp.eq.s32.totalorder %s24, 1
    %p115 = por %p113, %p114
    %p117 = scmp.ne.s32.totalorder %s100, %s116
    %p118 = scmp.eq.s32.totalorder %s24, 0
    %p119 = por %p117, %p118
    %s120 = ssub.s32 %s25, %s37
    %s121 = ssub.s32 %s26, %s33
    %s122 = sor.u32 %s120, %s121
    %p123 = scmp.eq.s32.totalorder %s122, 0
    %s125 = sadd.s32 %s124, 1
    %s126 = scalar_select %p123, %s124, %s125
    %p129 = pneg %p123
    %p130 = scmp.eq.s32.totalorder %s18, 1
    %p131 = por %p129, %p130
    %p132 = scmp.ne.s32.totalorder %s124, %s127
    %p133 = scmp.eq.s32.totalorder %s18, 0
    %p134 = por %p132, %p133
    %p135 = scmp.ne.s32.totalorder %s124, %s127
    %p136 = scmp.eq.s32.totalorder %s23, 1
    %p137 = por %p135, %p136
    %p138 = scmp.ne.s32.totalorder %s127, %s128
    %p139 = scmp.eq.s32.totalorder %s23, 0
    %p140 = por %p138, %p139
    %p141 = scmp.ne.s32.totalorder %s127, %s128
    %p142 = scmp.eq.s32.totalorder %s24, 1
    %p143 = por %p141, %p142
    %p145 = scmp.ne.s32.totalorder %s128, %s144
    %p146 = scmp.eq.s32.totalorder %s24, 0
    %p147 = por %p145, %p146
    %s149 = sadd.s32 %s148, 1
    %p152 = scmp.eq.s32.totalorder %s18, 1
    %p153 = scmp.ne.s32.totalorder %s148, %s150
    %p154 = scmp.eq.s32.totalorder %s18, 0
    %p155 = por %p153, %p154
    %p156 = scmp.ne.s32.totalorder %s148, %s150
    %p157 = scmp.eq.s32.totalorder %s23, 1
    %p158 = por %p156, %p157
    %p159 = scmp.ne.s32.totalorder %s150, %s151
    %p160 = scmp.eq.s32.totalorder %s23, 0
    %p161 = por %p159, %p160
    %p162 = scmp.ne.s32.totalorder %s150, %s151
    %p163 = scmp.eq.s32.totalorder %s24, 1
    %p164 = por %p162, %p163
    %p166 = scmp.ne.s32.totalorder %s151, %s165
    %p167 = scmp.eq.s32.totalorder %s24, 0
    %p168 = por %p166, %p167
    %s170 = sadd.s32 %s169, 1
    %p173 = scmp.eq.s32.totalorder %s18, 1
    %p174 = scmp.ne.s32.totalorder %s169, %s171
    %p175 = scmp.eq.s32.totalorder %s18, 0
    %p176 = por %p174, %p175
    %p177 = scmp.ne.s32.totalorder %s169, %s171
    %p178 = scmp.eq.s32.totalorder %s23, 1
    %p179 = por %p177, %p178
    %p180 = scmp.ne.s32.totalorder %s171, %s172
    %p181 = scmp.eq.s32.totalorder %s23, 0
    %p182 = por %p180, %p181
    %p183 = scmp.ne.s32.totalorder %s171, %s172
    %p184 = scmp.eq.s32.totalorder %s24, 1
    %p185 = por %p183, %p184
    %p187 = scmp.ne.s32.totalorder %s172, %s186
    %p188 = scmp.eq.s32.totalorder %s24, 0
    %p189 = por %p187, %p188
    %s191 = sadd.s32 %s190, 1
    %p194 = scmp.eq.s32.totalorder %s18, 1
    %p195 = scmp.ne.s32.totalorder %s190, %s192
    %p196 = scmp.eq.s32.totalorder %s18, 0
    %p197 = por %p195, %p196
    %p198 = scmp.ne.s32.totalorder %s190, %s192
    %p199 = scmp.eq.s32.totalorder %s23, 1
    %p200 = por %p198, %p199
    %p201 = scmp.ne.s32.totalorder %s192, %s193
    %p202 = scmp.eq.s32.totalorder %s23, 0
    %p203 = por %p201, %p202
    %p204 = scmp.ne.s32.totalorder %s192, %s193
    %p205 = scmp.eq.s32.totalorder %s24, 1
    %p206 = por %p204, %p205
    %p208 = scmp.ne.s32.totalorder %s193, %s207
    %p209 = scmp.eq.s32.totalorder %s24, 0
    %p210 = por %p208, %p209
    %s212 = sadd.s32 %s211, 1
    %p215 = scmp.eq.s32.totalorder %s18, 1
    %p216 = scmp.ne.s32.totalorder %s211, %s213
    %p217 = scmp.eq.s32.totalorder %s18, 0
    %p218 = por %p216, %p217
    %p219 = scmp.ne.s32.totalorder %s211, %s213
    %p220 = scmp.eq.s32.totalorder %s23, 1
    %p221 = por %p219, %p220
    %p222 = scmp.ne.s32.totalorder %s213, %s214
    %p223 = scmp.eq.s32.totalorder %s23, 0
    %p224 = por %p222, %p223
    %p225 = scmp.ne.s32.totalorder %s213, %s214
    %p226 = scmp.eq.s32.totalorder %s24, 1
    %p227 = por %p225, %p226
    %p229 = scmp.ne.s32.totalorder %s214, %s228
    %p230 = scmp.eq.s32.totalorder %s24, 0
    %p231 = por %p229, %p230
    %s233 = sadd.s32 %s232, 1
    %p236 = scmp.eq.s32.totalorder %s18, 1
    %p237 = scmp.ne.s32.totalorder %s232, %s234
    %p238 = scmp.eq.s32.totalorder %s18, 0
    %p239 = por %p237, %p238
    %p240 = scmp.ne.s32.totalorder %s232, %s234
    %p241 = scmp.eq.s32.totalorder %s23, 1
    %p242 = por %p240, %p241
    %p243 = scmp.ne.s32.totalorder %s234, %s235
    %p244 = scmp.eq.s32.totalorder %s23, 0
    %p245 = por %p243, %p244
    %p246 = scmp.ne.s32.totalorder %s234, %s235
    %p247 = scmp.eq.s32.totalorder %s24, 1
    %p248 = por %p246, %p247
    %p250 = scmp.ne.s32.totalorder %s235, %s249
    %p251 = scmp.eq.s32.totalorder %s24, 0
    %p252 = por %p250, %p251
    %s254 = sadd.s32 %s253, 1
    %p257 = scmp.eq.s32.totalorder %s18, 1
    %p258 = scmp.ne.s32.totalorder %s253, %s255
    %p259 = scmp.eq.s32.totalorder %s18, 0
    %p260 = por %p258, %p259
    %p261 = scmp.ne.s32.totalorder %s253, %s255
    %p262 = scmp.eq.s32.totalorder %s23, 1
    %p263 = por %p261, %p262
    %p264 = scmp.ne.s32.totalorder %s255, %s256
    %p265 = scmp.eq.s32.totalorder %s23, 0
    %p266 = por %p264, %p265
    %p267 = scmp.ne.s32.totalorder %s255, %s256
    %p268 = scmp.eq.s32.totalorder %s24, 1
    %p269 = por %p267, %p268
    %p271 = scmp.ne.s32.totalorder %s256, %s270
    %p272 = scmp.eq.s32.totalorder %s24, 0
    %p273 = por %p271, %p272
    %s275 = sadd.s32 %s274, 1
    %p278 = scmp.eq.s32.totalorder %s18, 1
    %p279 = scmp.ne.s32.totalorder %s274, %s276
    %p280 = scmp.eq.s32.totalorder %s18, 0
    %p281 = por %p279, %p280
    %p282 = scmp.ne.s32.totalorder %s274, %s276
    %p283 = scmp.eq.s32.totalorder %s23, 1
    %p284 = por %p282, %p283
    %p285 = scmp.ne.s32.totalorder %s276, %s277
    %p286 = scmp.eq.s32.totalorder %s23, 0
    %p287 = por %p285, %p286
    %p288 = scmp.ne.s32.totalorder %s276, %s277
    %p289 = scmp.eq.s32.totalorder %s24, 1
    %p290 = por %p288, %p289
    %p292 = scmp.ne.s32.totalorder %s277, %s291
    %p293 = scmp.eq.s32.totalorder %s24, 0
    %p294 = por %p292, %p293
    %s296 = sadd.s32 %s295, 1
    %p299 = scmp.eq.s32.totalorder %s18, 1
    %p300 = scmp.ne.s32.totalorder %s295, %s297
    %p301 = scmp.eq.s32.totalorder %s18, 0
    %p302 = por %p300, %p301
    %p303 = scmp.ne.s32.totalorder %s295, %s297
    %p304 = scmp.eq.s32.totalorder %s23, 1
    %p305 = por %p303, %p304
    %p306 = scmp.ne.s32.totalorder %s297, %s298
    %p307 = scmp.eq.s32.totalorder %s23, 0
    %p308 = por %p306, %p307
    %p309 = scmp.ne.s32.totalorder %s297, %s298
    %p310 = scmp.eq.s32.totalorder %s24, 1
    %p311 = por %p309, %p310
    %p313 = scmp.ne.s32.totalorder %s298, %s312
    %p314 = scmp.eq.s32.totalorder %s24, 0
    %p315 = por %p313, %p314
    %s316 = ssub.s32 %s25, %s37
    %s317 = ssub.s32 %s26, %s33
    %s318 = sor.u32 %s316, %s317
    %p319 = scmp.eq.s32.totalorder %s318, 0
    %s321 = sadd.s32 %s320, 1
    %s322 = scalar_select %p319, %s320, %s321
    %p325 = pneg %p319
    %p326 = scmp.eq.s32.totalorder %s18, 1
    %p327 = por %p325, %p326
    %p328 = scmp.ne.s32.totalorder %s320, %s323
    %p329 = scmp.eq.s32.totalorder %s18, 0
    %p330 = por %p328, %p329
    %p331 = scmp.ne.s32.totalorder %s320, %s323
    %p332 = scmp.eq.s32.totalorder %s23, 1
    %p333 = por %p331, %p332
    %p334 = scmp.ne.s32.totalorder %s323, %s324
    %p335 = scmp.eq.s32.totalorder %s23, 0
    %p336 = por %p334, %p335
    %p337 = scmp.ne.s32.totalorder %s323, %s324
    %p338 = scmp.eq.s32.totalorder %s24, 1
    %p339 = por %p337, %p338
    %p341 = scmp.ne.s32.totalorder %s324, %s340
    %p342 = scmp.eq.s32.totalorder %s24, 0
    %p343 = por %p341, %p342
    %p344 = scmp.le.s32.totalorder 1, %s18
    %p345 = scmp.lt.s32.totalorder %s18, 3
    %p346 = pnand %p344, %p345
    %p347 = pneg %p346
    // Predicated region
    $region9: #{decoder_layer_forward.4} parent=5 // pred_check
      _
    $region10: #{decoder_layer_forward.4} parent=5 // pred_check_branch
      %349 = sbr.rel (%p346) target = $region12
    $region11: #{decoder_layer_forward.4} parent=5 // pred_region
      %s350 = ssub.s32 %s18, 1
      // Predicated region
      $region13: #{decoder_layer_forward.4} parent=11 // pred_check
        %p351 = pneg %p161
      $region14: #{decoder_layer_forward.4} parent=11 // pred_check_branch
        %353 = sbr.rel (%p351) target = $region16
      $region15: #{decoder_layer_forward.4} parent=11 // pred_region
        _
      $region16: #{decoder_layer_forward.4} parent=11 // pred_fallthru
        _
      // Predicated region
      $region17: #{decoder_layer_forward.4} parent=11 // pred_check
        %p354 = pneg %p182
      $region18: #{decoder_layer_forward.4} parent=11 // pred_check_branch
        %356 = sbr.rel (%p354) target = $region20
      $region19: #{decoder_layer_forward.4} parent=11 // pred_region
        _
      $region20: #{decoder_layer_forward.4} parent=11 // pred_fallthru
        _
      // Predicated region
      $region21: #{decoder_layer_forward.4} parent=11 // pred_check
        %p357 = pneg %p203
      $region22: #{decoder_layer_forward.4} parent=11 // pred_check_branch
        %359 = sbr.rel (%p357) target = $region24
      $region23: #{decoder_layer_forward.4} parent=11 // pred_region
        _
      $region24: #{decoder_layer_forward.4} parent=11 // pred_fallthru
        _
      // Predicated region
      $region25: #{decoder_layer_forward.4} parent=11 // pred_check
        %p360 = pneg %p224
      $region26: #{decoder_layer_forward.4} parent=11 // pred_check_branch
        %362 = sbr.rel (%p360) target = $region28
      $region27: #{decoder_layer_forward.4} parent=11 // pred_region
        _
      $region28: #{decoder_layer_forward.4} parent=11 // pred_fallthru
        _
      // Predicated region
      $region29: #{decoder_layer_forward.4} parent=11 // pred_check
        %p363 = pneg %p245
      $region30: #{decoder_layer_forward.4} parent=11 // pred_check_branch
        %365 = sbr.rel (%p363) target = $region32
      $region31: #{decoder_layer_forward.4} parent=11 // pred_region
        _
      $region32: #{decoder_layer_forward.4} parent=11 // pred_fallthru
        _
      // Predicated region
      $region33: #{decoder_layer_forward.4} parent=11 // pred_check
        %p366 = pneg %p266
      $region34: #{decoder_layer_forward.4} parent=11 // pred_check_branch
        %368 = sbr.rel (%p366) target = $region36
      $region35: #{decoder_layer_forward.4} parent=11 // pred_region
        _
      $region36: #{decoder_layer_forward.4} parent=11 // pred_fallthru
        _
      // Predicated region
      $region37: #{decoder_layer_forward.4} parent=11 // pred_check
        %p369 = pneg %p287
      $region38: #{decoder_layer_forward.4} parent=11 // pred_check_branch
        %371 = sbr.rel (%p369) target = $region40
      $region39: #{decoder_layer_forward.4} parent=11 // pred_region
        _
      $region40: #{decoder_layer_forward.4} parent=11 // pred_fallthru
        _
      // Predicated region
      $region41: #{decoder_layer_forward.4} parent=11 // pred_check
        %p372 = pneg %p308
      $region42: #{decoder_layer_forward.4} parent=11 // pred_check_branch
        %374 = sbr.rel (%p372) target = $region44
      $region43: #{decoder_layer_forward.4} parent=11 // pred_region
        _
      $region44: #{decoder_layer_forward.4} parent=11 // pred_fallthru
        _
    $region12: #{decoder_layer_forward.4} parent=5 // pred_fallthru
      _
    %p375 = scmp.lt.s32.totalorder %s18, 2
    // Predicated region
    $region45: #{decoder_layer_forward.4} parent=5 // pred_check
      %p376 = pneg %p375
    $region46: #{decoder_layer_forward.4} parent=5 // pred_check_branch
      %378 = sbr.rel (%p376) target = $region48
    $region47: #{decoder_layer_forward.4} parent=5 // pred_region
      // Predicated region
      $region49: #{decoder_layer_forward.4} parent=47 // pred_check
        %p379 = pneg %p52
      $region50: #{decoder_layer_forward.4} parent=47 // pred_check_branch
        %381 = sbr.rel (%p379) target = $region52
      $region51: #{decoder_layer_forward.4} parent=47 // pred_region
        %p382 = scmp.lt.s32.totalorder %s25, 1
        %s383 = scalar_select %p382, %s25, 1
        %p384 = scmp.lt.s32.totalorder %s26, 0
        %s385 = scalar_select %p384, %s26, 0
        %s386 = sadd.s32 %s385, %s383
        %s387 = smul.addr %s386, 4
        %s388 = scalar_lea.vmem %s0, %s387
      $region52: #{decoder_layer_forward.4} parent=47 // pred_fallthru
        _
      // Predicated region
      $region53: #{decoder_layer_forward.4} parent=47 // pred_check
        %p389 = pneg %p78
      $region54: #{decoder_layer_forward.4} parent=47 // pred_check_branch
        %391 = sbr.rel (%p389) target = $region56
      $region55: #{decoder_layer_forward.4} parent=47 // pred_region
        %p392 = scmp.lt.s32.totalorder %s25, 1
        %s393 = scalar_select %p392, %s25, 1
        %s394 = smul.addr %s393, 2
        %s395 = smul.addr %s394, 8
        %s396 = scalar_lea.vmem %s1, %s395
      $region56: #{decoder_layer_forward.4} parent=47 // pred_fallthru
        _
      // Predicated region
      $region57: #{decoder_layer_forward.4} parent=47 // pred_check
        %p397 = pneg %p106
      $region58: #{decoder_layer_forward.4} parent=47 // pred_check_branch
        %399 = sbr.rel (%p397) target = $region60
      $region59: #{decoder_layer_forward.4} parent=47 // pred_region
        %p400 = scmp.lt.s32.totalorder %s25, 1
        %s401 = scalar_select %p400, %s25, 1
        %p402 = scmp.lt.s32.totalorder %s26, 0
        %s403 = scalar_select %p402, %s26, 0
        %s404 = sadd.s32 %s403, %s401
        %s405 = smul.addr %s404, 8
        %s406 = scalar_lea.vmem %s2, %s405
      $region60: #{decoder_layer_forward.4} parent=47 // pred_fallthru
        _
      // Predicated region
      $region61: #{decoder_layer_forward.4} parent=47 // pred_check
        %p407 = pneg %p134
      $region62: #{decoder_layer_forward.4} parent=47 // pred_check_branch
        %409 = sbr.rel (%p407) target = $region64
      $region63: #{decoder_layer_forward.4} parent=47 // pred_region
        %p410 = scmp.lt.s32.totalorder %s25, 1
        %s411 = scalar_select %p410, %s25, 1
        %p412 = scmp.lt.s32.totalorder %s26, 0
        %s413 = scalar_select %p412, %s26, 0
        %s414 = sadd.s32 %s413, %s411
        %s415 = smul.addr %s414, 8
        %s416 = scalar_lea.vmem %s3, %s415
      $region64: #{decoder_layer_forward.4} parent=47 // pred_fallthru
        _
    $region48: #{decoder_layer_forward.4} parent=5 // pred_fallthru
      _
    %p417 = scmp.le.s32.totalorder 1, %s18
    %p418 = scmp.lt.s32.totalorder %s18, 3
    %p419 = pnand %p417, %p418
    %p420 = pneg %p419
    // Predicated region
    $region65: #{decoder_layer_forward.4} parent=5 // pred_check
      _
    $region66: #{decoder_layer_forward.4} parent=5 // pred_check_branch
      %422 = sbr.rel (%p419) target = $region68
    $region67: #{decoder_layer_forward.4} parent=5 // pred_region
      %s423 = ssub.s32 %s18, 1
      %p424 = scmp.lt.s32.totalorder %s27, 1
      %s425 = scalar_select %p424, %s27, 1
      %p426 = scmp.lt.s32.totalorder %s28, 0
      %s427 = scalar_select %p426, %s28, 0
      %s428 = sadd.s32 %s427, %s425
      %s429 = smul.addr %s428, 4
      %s430 = scalar_lea.vmem %s0, %s429
      %p431 = pneg %p58
      %p432 = pneg %p55
      %p433 = scmp.lt.s32.totalorder %s27, 1
      %s434 = scalar_select %p433, %s27, 1
      %s435 = smul.addr %s434, 2
      %s436 = smul.addr %s435, 8
      %s437 = scalar_lea.vmem %s1, %s436
      %p438 = pneg %p84
      %p439 = pneg %p81
      %p440 = scmp.lt.s32.totalorder %s27, 1
      %s441 = scalar_select %p440, %s27, 1
      %p442 = scmp.lt.s32.totalorder %s28, 0
      %s443 = scalar_select %p442, %s28, 0
      %s444 = sadd.s32 %s443, %s441
      %s445 = smul.addr %s444, 8
      %s446 = scalar_lea.vmem %s2, %s445
      %p447 = pneg %p112
      %p448 = pneg %p109
      %p449 = scmp.lt.s32.totalorder %s27, 1
      %s450 = scalar_select %p449, %s27, 1
      %p451 = scmp.lt.s32.totalorder %s28, 0
      %s452 = scalar_select %p451, %s28, 0
      %s453 = sadd.s32 %s452, %s450
      %s454 = smul.addr %s453, 8
      %s455 = scalar_lea.vmem %s3, %s454
      %p456 = pneg %p140
      %p457 = pneg %p137
      %p458 = pneg %p161
      %p459 = pneg %p158
      %p460 = pneg %p182
      %p461 = pneg %p179
      %p462 = pneg %p203
      %p463 = pneg %p200
      %p464 = pneg %p224
      %p465 = pneg %p221
      %p466 = pneg %p245
      %p467 = pneg %p242
      %p468 = pneg %p266
      %p469 = pneg %p263
      %p470 = pneg %p287
      %p471 = pneg %p284
      %p472 = pneg %p308
      %p473 = pneg %p305
      %p474 = pneg %p336
      %p475 = pneg %p333
      %p476 = scmp.lt.s32.totalorder %s27, 1
      %s477 = scalar_select %p476, %s27, 1
      %p478 = scmp.lt.s32.totalorder %s28, 0
      %s479 = scalar_select %p478, %s28, 0
      %s480 = sadd.s32 %s479, %s477
      %s481 = smul.addr %s480, 8
      %s482 = scalar_lea.vmem %s12, %s481
      %p483 = scmp.lt.s32.totalorder %s27, 1
      %s484 = scalar_select %p483, %s27, 1
      %p485 = scmp.lt.s32.totalorder %s28, 0
      %s486 = scalar_select %p485, %s28, 0
      %s487 = sadd.s32 %s486, %s484
      %s488 = smul.addr %s487, 4
      %s489 = scalar_lea.vmem %s0, %s488
      %p490 = scmp.lt.s32.totalorder %s27, 1
      %s491 = scalar_select %p490, %s27, 1
      %s492 = smul.addr %s491, 2
      %s493 = smul.addr %s492, 8
      %s494 = scalar_lea.vmem %s1, %s493
      %p495 = scmp.lt.s32.totalorder %s27, 1
      %s496 = scalar_select %p495, %s27, 1
      %p497 = scmp.lt.s32.totalorder %s28, 0
      %s498 = scalar_select %p497, %s28, 0
      %s499 = sadd.s32 %s498, %s496
      %s500 = smul.addr %s499, 8
      %s501 = scalar_lea.vmem %s2, %s500
      %p502 = scmp.lt.s32.totalorder %s27, 1
      %s503 = scalar_select %p502, %s27, 1
      %p504 = scmp.lt.s32.totalorder %s28, 0
      %s505 = scalar_select %p504, %s28, 0
      %s506 = sadd.s32 %s505, %s503
      %s507 = smul.addr %s506, 8
      %s508 = scalar_lea.vmem %s3, %s507
      %p509 = scmp.lt.s32.totalorder %s27, 1
      %s510 = scalar_select %p509, %s27, 1
      %p511 = scmp.lt.s32.totalorder %s28, 0
      %s512 = scalar_select %p511, %s28, 0
      %s513 = sadd.s32 %s512, %s510
      %s514 = smul.addr %s513, 8
      %s515 = scalar_lea.vmem %s12, %s514
      %p517 = scmp.eq.s32.totalorder %s28, 0
      // Predicated region
      $region69: #{decoder_layer_forward.4} parent=67 // pred_check
        %p518 = pneg %p517
      $region70: #{decoder_layer_forward.4} parent=67 // pred_check_branch
        %520 = sbr.rel (%p518) target = $region72
      $region71: #{decoder_layer_forward.4} parent=67 // pred_region
        %v521 = vld [vmem:[%s494] sm:$0xff]
        %v522 = vld [vmem:[%s494 + $0x8] sm:$0xff]
        %v523 = vpack.c.bf16 %v522, %v521
        %v524 = vld [vmem:[%s6] sm:$0xf]
        %v525 = vld [vmem:[%s6 + $0x4] sm:$0xf]
        %v526 = vld [vmem:[%s6 + $0x8] sm:$0xf]
        %v527 = vld [vmem:[%s6 + $0xc] sm:$0xf]
        %v528 = vld [vmem:[%s7] sm:$0x1]
        %v530 = vlaneseq
        %v531 = vshrl.u32 %v530, 7
        %v532 = vsub.s32 0, %v531
        %v533 = vrot.slane %v528, %v532
        %v539 = vunpack.c.l.b16 %v524
        %v540 = vunpack.c.l.b16 %v525
        %v541 = vunpack.c.l.b16 %v526
        %v542 = vunpack.c.l.b16 %v527
        %v543 = vpack.c.b16 %v540, %v539
        %v544 = vpack.c.b16 %v542, %v541
        %vm547 = vcmask 261120
        %v549 = vsel %vm547, %v523, 0
        %551 = vmatprep.subr.bf16.mxu0 0
        %552 = vmatpush1.bf16.msra.mxu0 %v543
        %553 = vmatprep.subr.bf16.mxu0 0
        %554 = vmatpush1.bf16.msra.mxu0 %v544
        %555 = vmatprep.subr.bf16.mxu0 0
        %556 = vmatpush1.bf16.msra.mxu0 0
        %557 = vmatprep.subr.bf16.mxu0 0
        %558 = vmatpush1.bf16.msra.mxu0 0
        %559 = vmatprep.subr.bf16.mxu0 0
        %560 = vmatpush1.bf16.msra.mxu0 0
        %561 = vmatprep.subr.bf16.mxu0 0
        %562 = vmatpush1.bf16.msra.mxu0 0
        %563 = vmatprep.subr.bf16.mxu0 0
        %564 = vmatpush1.bf16.msra.mxu0 0
        %565 = vmatprep.subr.bf16.mxu0 0
        %566 = vmatpush1.bf16.msra.mxu0 0
        %567 = vmatprep.subr.bf16.mxu0 0
        %568 = vmatpush1.bf16.msra.mxu0 0
        %569 = vmatprep.subr.bf16.mxu0 0
        %570 = vmatpush1.bf16.msra.mxu0 0
        %571 = vmatprep.subr.bf16.mxu0 0
        %572 = vmatpush1.bf16.msra.mxu0 0
        %573 = vmatprep.subr.bf16.mxu0 0
        %574 = vmatpush1.bf16.msra.mxu0 0
        %575 = vmatprep.subr.bf16.mxu0 0
        %576 = vmatpush1.bf16.msra.mxu0 0
        %577 = vmatprep.subr.bf16.mxu0 0
        %578 = vmatpush1.bf16.msra.mxu0 0
        %579 = vmatprep.subr.bf16.mxu0 0
        %580 = vmatpush1.bf16.msra.mxu0 0
        %581 = vmatprep.subr.bf16.mxu0 0
        %582 = vmatpush1.bf16.msra.mxu0 0
        %583 = vmatprep.mubr.bf16.mxu0 0
        %584 = vmatmul.mubr.bf16.gmra.mrb[0].mxu0 %v549
        %v585 = vpop.f32.mrb[0].mxu0
        %v586 = vadd.f32 %v533, %v585
        %v587 = vpop.f32.mrb[0].mxu0
        %v588 = vpop.f32.mrb[0].mxu0
        %v589 = vadd.f32 %v533, %v588
        %v590 = vpop.f32.mrb[0].mxu0
        %591 = vdwg.mxu0
        %v592 = vpack.c.bf16 %v589, %v586
        %593 = vst.msk [vmem:[#allocation2] sm:$0xff] %vm547, %v592
        %595 = vrot.lane.b32.xlu0 %v592, 96
        %v596 = vpop.permute.xlu0 %595
        %598 = vst.msk [vmem:[#allocation3] sm:$0xff] %vm547, %v596
      $region72: #{decoder_layer_forward.4} parent=67 // pred_fallthru
        _
      %v599 = vld [vmem:[%s489] sm:$0xf]
      %v600 = vld [vmem:[%s4] sm:$0xf]
      %v601 = vld [vmem:[%s4 + $0x4] sm:$0xf]
      %v602 = vld [vmem:[%s4 + $0x8] sm:$0xf]
      %v603 = vld [vmem:[%s4 + $0xc] sm:$0xf]
      %v604 = vld [vmem:[%s5] sm:$0x1]
      %v606 = vlaneseq
      %v607 = vshrl.u32 %v606, 7
      %v608 = vsub.s32 0, %v607
      %v609 = vrot.slane %v604, %v608
      %v615 = vunpack.c.l.b16 %v600
      %v616 = vunpack.c.l.b16 %v601
      %v617 = vunpack.c.l.b16 %v602
      %v618 = vunpack.c.l.b16 %v603
      %v619 = vpack.c.b16 %v616, %v615
      %v620 = vpack.c.b16 %v618, %v617
      %vm623 = vcmask 261120
      %v625 = vsel %vm623, %v599, 0
      %627 = vmatprep.subr.bf16.mxu0 0
      %628 = vmatpush1.bf16.msra.mxu0 %v619
      %629 = vmatprep.subr.bf16.mxu0 0
      %630 = vmatpush1.bf16.msra.mxu0 %v620
      %631 = vmatprep.subr.bf16.mxu0 0
      %632 = vmatpush1.bf16.msra.mxu0 0
      %633 = vmatprep.subr.bf16.mxu0 0
      %634 = vmatpush1.bf16.msra.mxu0 0
      %635 = vmatprep.subr.bf16.mxu0 0
      %636 = vmatpush1.bf16.msra.mxu0 0
      %637 = vmatprep.subr.bf16.mxu0 0
      %638 = vmatpush1.bf16.msra.mxu0 0
      %639 = vmatprep.subr.bf16.mxu0 0
      %640 = vmatpush1.bf16.msra.mxu0 0
      %641 = vmatprep.subr.bf16.mxu0 0
      %642 = vmatpush1.bf16.msra.mxu0 0
      %643 = vmatprep.subr.bf16.mxu0 0
      %644 = vmatpush1.bf16.msra.mxu0 0
      %645 = vmatprep.subr.bf16.mxu0 0
      %646 = vmatpush1.bf16.msra.mxu0 0
      %647 = vmatprep.subr.bf16.mxu0 0
      %648 = vmatpush1.bf16.msra.mxu0 0
      %649 = vmatprep.subr.bf16.mxu0 0
      %650 = vmatpush1.bf16.msra.mxu0 0
      %651 = vmatprep.subr.bf16.mxu0 0
      %652 = vmatpush1.bf16.msra.mxu0 0
      %653 = vmatprep.subr.bf16.mxu0 0
      %654 = vmatpush1.bf16.msra.mxu0 0
      %655 = vmatprep.subr.bf16.mxu0 0
      %656 = vmatpush1.bf16.msra.mxu0 0
      %657 = vmatprep.subr.bf16.mxu0 0
      %658 = vmatpush1.bf16.msra.mxu0 0
      %659 = vmatprep.mubr.bf16.mxu0 0
      %660 = vmatmul.mubr.bf16.gmra.mrb[0].mxu0 %v625
      %v661 = vpop.f32.mrb[0].mxu0
      %v662 = vadd.f32 %v609, %v661
      %v663 = vpop.f32.mrb[0].mxu0
      %v664 = vpop.f32.mrb[0].mxu0
      %v665 = vpop.f32.mrb[0].mxu0
      %666 = vdwg.mxu0
      %v667 = vld [vmem:[%s501] sm:$0xff]
      %vm668 = vcmp.gt.f32.partialorder %v667, 0.0
      %v669 = vld [vmem:[#allocation2] sm:$0xff]
      %v670 = vld [vmem:[#allocation3] sm:$0xff]
      %v671 = vld [vmem:[%s8] sm:$0xf]
      %v672 = vld [vmem:[%s8 + $0x4] sm:$0xf]
      %v673 = vld [vmem:[%s8 + $0x8] sm:$0xf]
      %v674 = vld [vmem:[%s8 + $0xc] sm:$0xf]
      %v675 = vpack.c.bf16 %v662, %v662
      %vm676 = vcmask 64512
      %v678 = vsel %vm676, %v675, 0
      %v681 = vsel %vm676, %v669, 0
      %683 = vmatprep.subr.bf16.mxu0 0
      %684 = vmatpush1.bf16.xpose.msra.mxu0 %v681
      %685 = vmatprep.subr.bf16.mxu0 0
      %686 = vmatpush1.bf16.xpose.msra.mxu0 0
      %687 = vmatprep.subr.bf16.mxu0 0
      %688 = vmatpush1.bf16.xpose.msra.mxu0 0
      %689 = vmatprep.subr.bf16.mxu0 0
      %690 = vmatpush1.bf16.xpose.msra.mxu0 0
      %691 = vmatprep.subr.bf16.mxu0 0
      %692 = vmatpush1.bf16.xpose.msra.mxu0 0
      %693 = vmatprep.subr.bf16.mxu0 0
      %694 = vmatpush1.bf16.xpose.msra.mxu0 0
      %695 = vmatprep.subr.bf16.mxu0 0
      %696 = vmatpush1.bf16.xpose.msra.mxu0 0
      %697 = vmatprep.subr.bf16.mxu0 0
      %698 = vmatpush1.bf16.xpose.msra.mxu0 0
      %699 = vmatprep.subr.bf16.mxu0 0
      %700 = vmatpush1.bf16.xpose.msra.mxu0 0
      %701 = vmatprep.subr.bf16.mxu0 0
      %702 = vmatpush1.bf16.xpose.msra.mxu0 0
      %703 = vmatprep.subr.bf16.mxu0 0
      %704 = vmatpush1.bf16.xpose.msra.mxu0 0
      %705 = vmatprep.subr.bf16.mxu0 0
      %706 = vmatpush1.bf16.xpose.msra.mxu0 0
      %707 = vmatprep.subr.bf16.mxu0 0
      %708 = vmatpush1.bf16.xpose.msra.mxu0 0
      %709 = vmatprep.subr.bf16.mxu0 0
      %710 = vmatpush1.bf16.xpose.msra.mxu0 0
      %711 = vmatprep.subr.bf16.mxu0 0
      %712 = vmatpush1.bf16.xpose.msra.mxu0 0
      %713 = vmatprep.subr.bf16.mxu0 0
      %714 = vmatpush1.bf16.xpose.msra.mxu0 0
      %715 = vmatprep.mubr.bf16.mxu0 0
      %716 = vmatmul.mubr.bf16.gmra.mrb[0].mxu0 %v678
      %v717 = vpop.f32.mrb[0].mxu0
      %v718 = vadd.f32 0.0, %v717
      %v719 = vpop.f32.mrb[0].mxu0
      %v720 = vpop.f32.mrb[0].mxu0
      %v721 = vpop.f32.mrb[0].mxu0
      %722 = vdwg.mxu0
      %v723 = vsel %vm668, %v718, -1e+09
      %vm724 = vcmask 130048
      %v725 = vsel %vm724, %v723, -inf
      %726 = vmax.xlane.f32.xlu0 %v725
      %v727 = vpop.xlane.xlu0 %726
      %v728 = vsub.f32 %v723, %v727
      %v729 = vmul.f32 %v728, 1.442695
      %v730 = vpow.pop %v729
      %v731 = vsel %vm724, %v730, 0.0
      %732 = vadd.xlane.f32.xlu0 %v731
      %v733 = vpop.xlane.xlu0 %732
      %v734 = vrcp.pop %v733
      %v735 = vmul.f32 %v730, %v734
      %v736 = vpack.c.bf16 %v735, %v735
      %v738 = vsel %vm724, %v736, 0
      %740 = vmatprep.subr.bf16.mxu0 0
      %741 = vmatpush1.bf16.msra.mxu0 %v670
      %742 = vmatprep.subr.bf16.mxu0 0
      %743 = vmatpush1.bf16.msra.mxu0 0
      %744 = vmatprep.subr.bf16.mxu0 0
      %745 = vmatpush1.bf16.msra.mxu0 0
      %746 = vmatprep.subr.bf16.mxu0 0
      %747 = vmatpush1.bf16.msra.mxu0 0
      %748 = vmatprep.subr.bf16.mxu0 0
      %749 = vmatpush1.bf16.msra.mxu0 0
      %750 = vmatprep.subr.bf16.mxu0 0
      %751 = vmatpush1.bf16.msra.mxu0 0
      %752 = vmatprep.subr.bf16.mxu0 0
      %753 = vmatpush1.bf16.msra.mxu0 0
      %754 = vmatprep.subr.bf16.mxu0 0
      %755 = vmatpush1.bf16.msra.mxu0 0
      %756 = vmatprep.subr.bf16.mxu0 0
      %757 = vmatpush1.bf16.msra.mxu0 0
      %758 = vmatprep.subr.bf16.mxu0 0
      %759 = vmatpush1.bf16.msra.mxu0 0
      %760 = vmatprep.subr.bf16.mxu0 0
      %761 = vmatpush1.bf16.msra.mxu0 0
      %762 = vmatprep.subr.bf16.mxu0 0
      %763 = vmatpush1.bf16.msra.mxu0 0
      %764 = vmatprep.subr.bf16.mxu0 0
      %765 = vmatpush1.bf16.msra.mxu0 0
      %766 = vmatprep.subr.bf16.mxu0 0
      %767 = vmatpush1.bf16.msra.mxu0 0
      %768 = vmatprep.subr.bf16.mxu0 0
      %769 = vmatpush1.bf16.msra.mxu0 0
      %770 = vmatprep.subr.bf16.mxu0 0
      %771 = vmatpush1.bf16.msra.mxu0 0
      %772 = vmatprep.mubr.bf16.mxu0 0
      %773 = vmatmul.mubr.bf16.gmra.mrb[0].mxu0 %v738
      %v774 = vpop.f32.mrb[0].mxu0
      %v775 = vadd.f32 0.0, %v774
      %v776 = vpop.f32.mrb[0].mxu0
      %v777 = vpop.f32.mrb[0].mxu0
      %v778 = vpop.f32.mrb[0].mxu0
      %779 = vdwg.mxu0
      %v780 = vpack.c.bf16 %v775, %v775
      %782 = vrot.lane.b32.xlu0 %v675, 120
      %v783 = vpop.permute.xlu0 %782
      %785 = vrot.lane.b32.xlu0 %v669, 120
      %v786 = vpop.permute.xlu0 %785
      %v788 = vsel %vm676, %v783, 0
      %v791 = vsel %vm676, %v786, 0
      %793 = vmatprep.subr.bf16.mxu0 0
      %794 = vmatpush1.bf16.xpose.msra.mxu0 %v791
      %795 = vmatprep.subr.bf16.mxu0 0
      %796 = vmatpush1.bf16.xpose.msra.mxu0 0
      %797 = vmatprep.subr.bf16.mxu0 0
      %798 = vmatpush1.bf16.xpose.msra.mxu0 0
      %799 = vmatprep.subr.bf16.mxu0 0
      %800 = vmatpush1.bf16.xpose.msra.mxu0 0
      %801 = vmatprep.subr.bf16.mxu0 0
      %802 = vmatpush1.bf16.xpose.msra.mxu0 0
      %803 = vmatprep.subr.bf16.mxu0 0
      %804 = vmatpush1.bf16.xpose.msra.mxu0 0
      %805 = vmatprep.subr.bf16.mxu0 0
      %806 = vmatpush1.bf16.xpose.msra.mxu0 0
      %807 = vmatprep.subr.bf16.mxu0 0
      %808 = vmatpush1.bf16.xpose.msra.mxu0 0
      %809 = vmatprep.subr.bf16.mxu0 0
      %810 = vmatpush1.bf16.xpose.msra.mxu0 0
      %811 = vmatprep.subr.bf16.mxu0 0
      %812 = vmatpush1.bf16.xpose.msra.mxu0 0
      %813 = vmatprep.subr.bf16.mxu0 0
      %814 = vmatpush1.bf16.xpose.msra.mxu0 0
      %815 = vmatprep.subr.bf16.mxu0 0
      %816 = vmatpush1.bf16.xpose.msra.mxu0 0
      %817 = vmatprep.subr.bf16.mxu0 0
      %818 = vmatpush1.bf16.xpose.msra.mxu0 0
      %819 = vmatprep.subr.bf16.mxu0 0
      %820 = vmatpush1.bf16.xpose.msra.mxu0 0
      %821 = vmatprep.subr.bf16.mxu0 0
      %822 = vmatpush1.bf16.xpose.msra.mxu0 0
      %823 = vmatprep.subr.bf16.mxu0 0
      %824 = vmatpush1.bf16.xpose.msra.mxu0 0
      %825 = vmatprep.mubr.bf16.mxu0 0
      %826 = vmatmul.mubr.bf16.gmra.mrb[0].mxu0 %v788
      %v827 = vpop.f32.mrb[0].mxu0
      %v828 = vadd.f32 0.0, %v827
      %v829 = vpop.f32.mrb[0].mxu0
      %v830 = vpop.f32.mrb[0].mxu0
      %v831 = vpop.f32.mrb[0].mxu0
      %832 = vdwg.mxu0
      %v833 = vsel %vm668, %v828, -1e+09
      %v834 = vsel %vm724, %v833, -inf
      %835 = vmax.xlane.f32.xlu0 %v834
      %v836 = vpop.xlane.xlu0 %835
      %v837 = vsub.f32 %v833, %v836
      %v838 = vmul.f32 %v837, 1.442695
      %v839 = vpow.pop %v838
      %v840 = vsel %vm724, %v839, 0.0
      %841 = vadd.xlane.f32.xlu0 %v840
      %v842 = vpop.xlane.xlu0 %841
      %v843 = vrcp.pop %v842
      %v844 = vmul.f32 %v839, %v843
      %v845 = vpack.c.bf16 %v844, %v844
      %847 = vrot.lane.b32.xlu0 %v670, 120
      %v848 = vpop.permute.xlu0 %847
      %v851 = vsel %vm724, %v845, 0
      %853 = vmatprep.subr.bf16.mxu0 0
      %854 = vmatpush1.bf16.msra.mxu0 %v848
      %855 = vmatprep.subr.bf16.mxu0 0
      %856 = vmatpush1.bf16.msra.mxu0 0
      %857 = vmatprep.subr.bf16.mxu0 0
      %858 = vmatpush1.bf16.msra.mxu0 0
      %859 = vmatprep.subr.bf16.mxu0 0
      %860 = vmatpush1.bf16.msra.mxu0 0
      %861 = vmatprep.subr.bf16.mxu0 0
      %862 = vmatpush1.bf16.msra.mxu0 0
      %863 = vmatprep.subr.bf16.mxu0 0
      %864 = vmatpush1.bf16.msra.mxu0 0
      %865 = vmatprep.subr.bf16.mxu0 0
      %866 = vmatpush1.bf16.msra.mxu0 0
      %867 = vmatprep.subr.bf16.mxu0 0
      %868 = vmatpush1.bf16.msra.mxu0 0
      %869 = vmatprep.subr.bf16.mxu0 0
      %870 = vmatpush1.bf16.msra.mxu0 0
      %871 = vmatprep.subr.bf16.mxu0 0
      %872 = vmatpush1.bf16.msra.mxu0 0
      %873 = vmatprep.subr.bf16.mxu0 0
      %874 = vmatpush1.bf16.msra.mxu0 0
      %875 = vmatprep.subr.bf16.mxu0 0
      %876 = vmatpush1.bf16.msra.mxu0 0
      %877 = vmatprep.subr.bf16.mxu0 0
      %878 = vmatpush1.bf16.msra.mxu0 0
      %879 = vmatprep.subr.bf16.mxu0 0
      %880 = vmatpush1.bf16.msra.mxu0 0
      %881 = vmatprep.subr.bf16.mxu0 0
      %882 = vmatpush1.bf16.msra.mxu0 0
      %883 = vmatprep.subr.bf16.mxu0 0
      %884 = vmatpush1.bf16.msra.mxu0 0
      %885 = vmatprep.mubr.bf16.mxu0 0
      %886 = vmatmul.mubr.bf16.gmra.mrb[0].mxu0 %v851
      %v887 = vpop.f32.mrb[0].mxu0
      %v888 = vadd.f32 0.0, %v887
      %v889 = vpop.f32.mrb[0].mxu0
      %v890 = vpop.f32.mrb[0].mxu0
      %v891 = vpop.f32.mrb[0].mxu0
      %892 = vdwg.mxu0
      %v893 = vpack.c.bf16 %v888, %v888
      %v895 = vsel %vm676, %v893, 0
      %vm897 = vcmask 1043456
      %v899 = vsel %vm897, %v672, 0
      %901 = vmatprep.subr.bf16.mxu0 0
      %902 = vmatpush1.bf16.msra.mxu0 %v899
      %903 = vmatprep.subr.bf16.mxu0 0
      %904 = vmatpush1.bf16.msra.mxu0 0
      %905 = vmatprep.subr.bf16.mxu0 0
      %906 = vmatpush1.bf16.msra.mxu0 0
      %907 = vmatprep.subr.bf16.mxu0 0
      %908 = vmatpush1.bf16.msra.mxu0 0
      %909 = vmatprep.subr.bf16.mxu0 0
      %910 = vmatpush1.bf16.msra.mxu0 0
      %911 = vmatprep.subr.bf16.mxu0 0
      %912 = vmatpush1.bf16.msra.mxu0 0
      %913 = vmatprep.subr.bf16.mxu0 0
      %914 = vmatpush1.bf16.msra.mxu0 0
      %915 = vmatprep.subr.bf16.mxu0 0
      %916 = vmatpush1.bf16.msra.mxu0 0
      %917 = vmatprep.subr.bf16.mxu0 0
      %918 = vmatpush1.bf16.msra.mxu0 0
      %919 = vmatprep.subr.bf16.mxu0 0
      %920 = vmatpush1.bf16.msra.mxu0 0
      %921 = vmatprep.subr.bf16.mxu0 0
      %922 = vmatpush1.bf16.msra.mxu0 0
      %923 = vmatprep.subr.bf16.mxu0 0
      %924 = vmatpush1.bf16.msra.mxu0 0
      %925 = vmatprep.subr.bf16.mxu0 0
      %926 = vmatpush1.bf16.msra.mxu0 0
      %927 = vmatprep.subr.bf16.mxu0 0
      %928 = vmatpush1.bf16.msra.mxu0 0
      %929 = vmatprep.subr.bf16.mxu0 0
      %930 = vmatpush1.bf16.msra.mxu0 0
      %931 = vmatprep.subr.bf16.mxu0 0
      %932 = vmatpush1.bf16.msra.mxu0 0
      %933 = vmatprep.mubr.bf16.mxu0 0
      %934 = vmatmul.mubr.bf16.gmra.mrb[0].mxu0 %v895
      %v935 = vpop.f32.mrb[0].mxu0
      %v936 = vadd.f32 0.0, %v935
      %v937 = vpop.f32.mrb[0].mxu0
      %v938 = vpop.f32.mrb[0].mxu0
      %v939 = vpop.f32.mrb[0].mxu0
      %940 = vdwg.mxu0
      %v942 = vsel %vm676, %v780, 0
      %v945 = vsel %vm897, %v671, 0
      %947 = vmatprep.subr.bf16.mxu0 0
      %948 = vmatpush1.bf16.msra.mxu0 %v945
      %949 = vmatprep.subr.bf16.mxu0 0
      %950 = vmatpush1.bf16.msra.mxu0 0
      %951 = vmatprep.subr.bf16.mxu0 0
      %952 = vmatpush1.bf16.msra.mxu0 0
      %953 = vmatprep.subr.bf16.mxu0 0
      %954 = vmatpush1.bf16.msra.mxu0 0
      %955 = vmatprep.subr.bf16.mxu0 0
      %956 = vmatpush1.bf16.msra.mxu0 0
      %957 = vmatprep.subr.bf16.mxu0 0
      %958 = vmatpush1.bf16.msra.mxu0 0
      %959 = vmatprep.subr.bf16.mxu0 0
      %960 = vmatpush1.bf16.msra.mxu0 0
      %961 = vmatprep.subr.bf16.mxu0 0
      %962 = vmatpush1.bf16.msra.mxu0 0
      %963 = vmatprep.subr.bf16.mxu0 0
      %964 = vmatpush1.bf16.msra.mxu0 0
      %965 = vmatprep.subr.bf16.mxu0 0
      %966 = vmatpush1.bf16.msra.mxu0 0
      %967 = vmatprep.subr.bf16.mxu0 0
      %968 = vmatpush1.bf16.msra.mxu0 0
      %969 = vmatprep.subr.bf16.mxu0 0
      %970 = vmatpush1.bf16.msra.mxu0 0
      %971 = vmatprep.subr.bf16.mxu0 0
      %972 = vmatpush1.bf16.msra.mxu0 0
      %973 = vmatprep.subr.bf16.mxu0 0
      %974 = vmatpush1.bf16.msra.mxu0 0
      %975 = vmatprep.subr.bf16.mxu0 0
      %976 = vmatpush1.bf16.msra.mxu0 0
      %977 = vmatprep.subr.bf16.mxu0 0
      %978 = vmatpush1.bf16.msra.mxu0 0
      %979 = vmatprep.mubr.bf16.mxu0 0
      %980 = vmatmul.mubr.bf16.gmra.mrb[0].mxu0 %v942
      %v981 = vpop.f32.mrb[0].mxu0
      %v982 = vadd.f32 %v936, %v981
      %v983 = vpop.f32.mrb[0].mxu0
      %v984 = vpop.f32.mrb[0].mxu0
      %v985 = vpop.f32.mrb[0].mxu0
      %986 = vdwg.mxu0
      %987 = vrot.lane.b32.xlu0 %v675, 112
      %v988 = vpop.permute.xlu0 %987
      %989 = vrot.lane.b32.xlu0 %v669, 112
      %v990 = vpop.permute.xlu0 %989
      %v992 = vsel %vm676, %v988, 0
      %v995 = vsel %vm676, %v990, 0
      %997 = vmatprep.subr.bf16.mxu0 0
      %998 = vmatpush1.bf16.xpose.msra.mxu0 %v995
      %999 = vmatprep.subr.bf16.mxu0 0
      %1000 = vmatpush1.bf16.xpose.msra.mxu0 0
      %1001 = vmatprep.subr.bf16.mxu0 0
      %1002 = vmatpush1.bf16.xpose.msra.mxu0 0
      %1003 = vmatprep.subr.bf16.mxu0 0
      %1004 = vmatpush1.bf16.xpose.msra.mxu0 0
      %1005 = vmatprep.subr.bf16.mxu0 0
      %1006 = vmatpush1.bf16.xpose.msra.mxu0 0
      %1007 = vmatprep.subr.bf16.mxu0 0
      %1008 = vmatpush1.bf16.xpose.msra.mxu0 0
      %1009 = vmatprep.subr.bf16.mxu0 0
      %1010 = vmatpush1.bf16.xpose.msra.mxu0 0
      %1011 = vmatprep.subr.bf16.mxu0 0
      %1012 = vmatpush1.bf16.xpose.msra.mxu0 0
      %1013 = vmatprep.subr.bf16.mxu0 0
      %1014 = vmatpush1.bf16.xpose.msra.mxu0 0
      %1015 = vmatprep.subr.bf16.mxu0 0
      %1016 = vmatpush1.bf16.xpose.msra.mxu0 0
      %1017 = vmatprep.subr.bf16.mxu0 0
      %1018 = vmatpush1.bf16.xpose.msra.mxu0 0
      %1019 = vmatprep.subr.bf16.mxu0 0
      %1020 = vmatpush1.bf16.xpose.msra.mxu0 0
      %1021 = vmatprep.subr.bf16.mxu0 0
      %1022 = vmatpush1.bf16.xpose.msra.mxu0 0
      %1023 = vmatprep.subr.bf16.mxu0 0
      %1024 = vmatpush1.bf16.xpose.msra.mxu0 0
      %1025 = vmatprep.subr.bf16.mxu0 0
      %1026 = vmatpush1.bf16.xpose.msra.mxu0 0
      %1027 = vmatprep.subr.bf16.mxu0 0
      %1028 = vmatpush1.bf16.xpose.msra.mxu0 0
      %1029 = vmatprep.mubr.bf16.mxu0 0
      %1030 = vmatmul.mubr.bf16.gmra.mrb[0].mxu0 %v992
      %v1031 = vpop.f32.mrb[0].mxu0
      %v1032 = vadd.f32 0.0, %v1031
      %v1033 = vpop.f32.mrb[0].mxu0
      %v1034 = vpop.f32.mrb[0].mxu0
      %v1035 = vpop.f32.mrb[0].mxu0
      %1036 = vdwg.mxu0
      %v1037 = vsel %vm668, %v1032, -1e+09
      %v1038 = vsel %vm724, %v1037, -inf
      %1039 = vmax.xlane.f32.xlu0 %v1038
      %v1040 = vpop.xlane.xlu0 %1039
      %v1041 = vsub.f32 %v1037, %v1040
      %v1042 = vmul.f32 %v1041, 1.442695
      %v1043 = vpow.pop %v1042
      %v1044 = vsel %vm724, %v1043, 0.0
      %1045 = vadd.xlane.f32.xlu0 %v1044
      %v1046 = vpop.xlane.xlu0 %1045
      %v1047 = vrcp.pop %v1046
      %v1048 = vmul.f32 %v1043, %v1047
      %v1049 = vpack.c.bf16 %v1048, %v1048
      %1050 = vrot.lane.b32.xlu0 %v670, 112
      %v1051 = vpop.permute.xlu0 %1050
      %v1054 = vsel %vm724, %v1049, 0
      %1056 = vmatprep.subr.bf16.mxu0 0
      %1057 = vmatpush1.bf16.msra.mxu0 %v1051
      %1058 = vmatprep.subr.bf16.mxu0 0
      %1059 = vmatpush1.bf16.msra.mxu0 0
      %1060 = vmatprep.subr.bf16.mxu0 0
      %1061 = vmatpush1.bf16.msra.mxu0 0
      %1062 = vmatprep.subr.bf16.mxu0 0
      %1063 = vmatpush1.bf16.msra.mxu0 0
      %1064 = vmatprep.subr.bf16.mxu0 0
      %1065 = vmatpush1.bf16.msra.mxu0 0
      %1066 = vmatprep.subr.bf16.mxu0 0
      %1067 = vmatpush1.bf16.msra.mxu0 0
      %1068 = vmatprep.subr.bf16.mxu0 0
      %1069 = vmatpush1.bf16.msra.mxu0 0
      %1070 = vmatprep.subr.bf16.mxu0 0
      %1071 = vmatpush1.bf16.msra.mxu0 0
      %1072 = vmatprep.subr.bf16.mxu0 0
      %1073 = vmatpush1.bf16.msra.mxu0 0
      %1074 = vmatprep.subr.bf16.mxu0 0
      %1075 = vmatpush1.bf16.msra.mxu0 0
      %1076 = vmatprep.subr.bf16.mxu0 0
      %1077 = vmatpush1.bf16.msra.mxu0 0
      %1078 = vmatprep.subr.bf16.mxu0 0
      %1079 = vmatpush1.bf16.msra.mxu0 0
      %1080 = vmatprep.subr.bf16.mxu0 0
      %1081 = vmatpush1.bf16.msra.mxu0 0
      %1082 = vmatprep.subr.bf16.mxu0 0
      %1083 = vmatpush1.bf16.msra.mxu0 0
      %1084 = vmatprep.subr.bf16.mxu0 0
      %1085 = vmatpush1.bf16.msra.mxu0 0
      %1086 = vmatprep.subr.bf16.mxu0 0
      %1087 = vmatpush1.bf16.msra.mxu0 0
      %1088 = vmatprep.mubr.bf16.mxu0 0
      %1089 = vmatmul.mubr.bf16.gmra.mrb[0].mxu0 %v1054
      %v1090 = vpop.f32.mrb[0].mxu0
      %v1091 = vadd.f32 0.0, %v1090
      %v1092 = vpop.f32.mrb[0].mxu0
      %v1093 = vpop.f32.mrb[0].mxu0
      %v1094 = vpop.f32.mrb[0].mxu0
      %1095 = vdwg.mxu0
      %v1096 = vpack.c.bf16 %v1091, %v1091
      %v1098 = vsel %vm676, %v1096, 0
      %v1101 = vsel %vm897, %v673, 0
      %1103 = vmatprep.subr.bf16.mxu0 0
      %1104 = vmatpush1.bf16.msra.mxu0 %v1101
      %1105 = vmatprep.subr.bf16.mxu0 0
      %1106 = vmatpush1.bf16.msra.mxu0 0
      %1107 = vmatprep.subr.bf16.mxu0 0
      %1108 = vmatpush1.bf16.msra.mxu0 0
      %1109 = vmatprep.subr.bf16.mxu0 0
      %1110 = vmatpush1.bf16.msra.mxu0 0
      %1111 = vmatprep.subr.bf16.mxu0 0
      %1112 = vmatpush1.bf16.msra.mxu0 0
      %1113 = vmatprep.subr.bf16.mxu0 0
      %1114 = vmatpush1.bf16.msra.mxu0 0
      %1115 = vmatprep.subr.bf16.mxu0 0
      %1116 = vmatpush1.bf16.msra.mxu0 0
      %1117 = vmatprep.subr.bf16.mxu0 0
      %1118 = vmatpush1.bf16.msra.mxu0 0
      %1119 = vmatprep.subr.bf16.mxu0 0
      %1120 = vmatpush1.bf16.msra.mxu0 0
      %1121 = vmatprep.subr.bf16.mxu0 0
      %1122 = vmatpush1.bf16.msra.mxu0 0
      %1123 = vmatprep.subr.bf16.mxu0 0
      %1124 = vmatpush1.bf16.msra.mxu0 0
      %1125 = vmatprep.subr.bf16.mxu0 0
      %1126 = vmatpush1.bf16.msra.mxu0 0
      %1127 = vmatprep.subr.bf16.mxu0 0
      %1128 = vmatpush1.bf16.msra.mxu0 0
      %1129 = vmatprep.subr.bf16.mxu0 0
      %1130 = vmatpush1.bf16.msra.mxu0 0
      %1131 = vmatprep.subr.bf16.mxu0 0
      %1132 = vmatpush1.bf16.msra.mxu0 0
      %1133 = vmatprep.subr.bf16.mxu0 0
      %1134 = vmatpush1.bf16.msra.mxu0 0
      %1135 = vmatprep.mubr.bf16.mxu0 0
      %1136 = vmatmul.mubr.bf16.gmra.mrb[0].mxu0 %v1098
      %v1137 = vpop.f32.mrb[0].mxu0
      %v1138 = vadd.f32 0.0, %v1137
      %v1139 = vpop.f32.mrb[0].mxu0
      %v1140 = vpop.f32.mrb[0].mxu0
      %v1141 = vpop.f32.mrb[0].mxu0
      %1142 = vdwg.mxu0
      %v1143 = vadd.f32 %v982, %v1138
      %1144 = vrot.lane.b32.xlu0 %v675, 104
      %v1145 = vpop.permute.xlu0 %1144
      %1146 = vrot.lane.b32.xlu0 %v669, 104
      %v1147 = vpop.permute.xlu0 %1146
      %v1149 = vsel %vm676, %v1145, 0
      %v1152 = vsel %vm676, %v1147, 0
      %1154 = vmatprep.subr.bf16.mxu0 0
      %1155 = vmatpush1.bf16.xpose.msra.mxu0 %v1152
      %1156 = vmatprep.subr.bf16.mxu0 0
      %1157 = vmatpush1.bf16.xpose.msra.mxu0 0
      %1158 = vmatprep.subr.bf16.mxu0 0
      %1159 = vmatpush1.bf16.xpose.msra.mxu0 0
      %1160 = vmatprep.subr.bf16.mxu0 0
      %1161 = vmatpush1.bf16.xpose.msra.mxu0 0
      %1162 = vmatprep.subr.bf16.mxu0 0
      %1163 = vmatpush1.bf16.xpose.msra.mxu0 0
      %1164 = vmatprep.subr.bf16.mxu0 0
      %1165 = vmatpush1.bf16.xpose.msra.mxu0 0
      %1166 = vmatprep.subr.bf16.mxu0 0
      %1167 = vmatpush1.bf16.xpose.msra.mxu0 0
      %1168 = vmatprep.subr.bf16.mxu0 0
      %1169 = vmatpush1.bf16.xpose.msra.mxu0 0
      %1170 = vmatprep.subr.bf16.mxu0 0
      %1171 = vmatpush1.bf16.xpose.msra.mxu0 0
      %1172 = vmatprep.subr.bf16.mxu0 0
      %1173 = vmatpush1.bf16.xpose.msra.mxu0 0
      %1174 = vmatprep.subr.bf16.mxu0 0
      %1175 = vmatpush1.bf16.xpose.msra.mxu0 0
      %1176 = vmatprep.subr.bf16.mxu0 0
      %1177 = vmatpush1.bf16.xpose.msra.mxu0 0
      %1178 = vmatprep.subr.bf16.mxu0 0
      %1179 = vmatpush1.bf16.xpose.msra.mxu0 0
      %1180 = vmatprep.subr.bf16.mxu0 0
      %1181 = vmatpush1.bf16.xpose.msra.mxu0 0
      %1182 = vmatprep.subr.bf16.mxu0 0
      %1183 = vmatpush1.bf16.xpose.msra.mxu0 0
      %1184 = vmatprep.subr.bf16.mxu0 0
      %1185 = vmatpush1.bf16.xpose.msra.mxu0 0
      %1186 = vmatprep.mubr.bf16.mxu0 0
      %1187 = vmatmul.mubr.bf16.gmra.mrb[0].mxu0 %v1149
      %v1188 = vpop.f32.mrb[0].mxu0
      %v1189 = vadd.f32 0.0, %v1188
      %v1190 = vpop.f32.mrb[0].mxu0
      %v1191 = vpop.f32.mrb[0].mxu0
      %v1192 = vpop.f32.mrb[0].mxu0
      %1193 = vdwg.mxu0
      %v1194 = vsel %vm668, %v1189, -1e+09
      %v1195 = vsel %vm724, %v1194, -inf
      %1196 = vmax.xlane.f32.xlu0 %v1195
      %v1197 = vpop.xlane.xlu0 %1196
      %v1198 = vsub.f32 %v1194, %v1197
      %v1199 = vmul.f32 %v1198, 1.442695
      %v1200 = vpow.pop %v1199
      %v1201 = vsel %vm724, %v1200, 0.0
      %1202 = vadd.xlane.f32.xlu0 %v1201
      %v1203 = vpop.xlane.xlu0 %1202
      %v1204 = vrcp.pop %v1203
      %v1205 = vmul.f32 %v1200, %v1204
      %v1206 = vpack.c.bf16 %v1205, %v1205
      %1207 = vrot.lane.b32.xlu0 %v670, 104
      %v1208 = vpop.permute.xlu0 %1207
      %v1211 = vsel %vm724, %v1206, 0
      %1213 = vmatprep.subr.bf16.mxu0 0
      %1214 = vmatpush1.bf16.msra.mxu0 %v1208
      %1215 = vmatprep.subr.bf16.mxu0 0
      %1216 = vmatpush1.bf16.msra.mxu0 0
      %1217 = vmatprep.subr.bf16.mxu0 0
      %1218 = vmatpush1.bf16.msra.mxu0 0
      %1219 = vmatprep.subr.bf16.mxu0 0
      %1220 = vmatpush1.bf16.msra.mxu0 0
      %1221 = vmatprep.subr.bf16.mxu0 0
      %1222 = vmatpush1.bf16.msra.mxu0 0
      %1223 = vmatprep.subr.bf16.mxu0 0
      %1224 = vmatpush1.bf16.msra.mxu0 0
      %1225 = vmatprep.subr.bf16.mxu0 0
      %1226 = vmatpush1.bf16.msra.mxu0 0
      %1227 = vmatprep.subr.bf16.mxu0 0
      %1228 = vmatpush1.bf16.msra.mxu0 0
      %1229 = vmatprep.subr.bf16.mxu0 0
      %1230 = vmatpush1.bf16.msra.mxu0 0
      %1231 = vmatprep.subr.bf16.mxu0 0
      %1232 = vmatpush1.bf16.msra.mxu0 0
      %1233 = vmatprep.subr.bf16.mxu0 0
      %1234 = vmatpush1.bf16.msra.mxu0 0
      %1235 = vmatprep.subr.bf16.mxu0 0
      %1236 = vmatpush1.bf16.msra.mxu0 0
      %1237 = vmatprep.subr.bf16.mxu0 0
      %1238 = vmatpush1.bf16.msra.mxu0 0
      %1239 = vmatprep.subr.bf16.mxu0 0
      %1240 = vmatpush1.bf16.msra.mxu0 0
      %1241 = vmatprep.subr.bf16.mxu0 0
      %1242 = vmatpush1.bf16.msra.mxu0 0
      %1243 = vmatprep.subr.bf16.mxu0 0
      %1244 = vmatpush1.bf16.msra.mxu0 0
      %1245 = vmatprep.mubr.bf16.mxu0 0
      %1246 = vmatmul.mubr.bf16.gmra.mrb[0].mxu0 %v1211
      %v1247 = vpop.f32.mrb[0].mxu0
      %v1248 = vadd.f32 0.0, %v1247
      %v1249 = vpop.f32.mrb[0].mxu0
      %v1250 = vpop.f32.mrb[0].mxu0
      %v1251 = vpop.f32.mrb[0].mxu0
      %1252 = vdwg.mxu0
      %v1253 = vpack.c.bf16 %v1248, %v1248
      %v1255 = vsel %vm676, %v1253, 0
      %v1258 = vsel %vm897, %v674, 0
      %1260 = vmatprep.subr.bf16.mxu0 0
      %1261 = vmatpush1.bf16.msra.mxu0 %v1258
      %1262 = vmatprep.subr.bf16.mxu0 0
      %1263 = vmatpush1.bf16.msra.mxu0 0
      %1264 = vmatprep.subr.bf16.mxu0 0
      %1265 = vmatpush1.bf16.msra.mxu0 0
      %1266 = vmatprep.subr.bf16.mxu0 0
      %1267 = vmatpush1.bf16.msra.mxu0 0
      %1268 = vmatprep.subr.bf16.mxu0 0
      %1269 = vmatpush1.bf16.msra.mxu0 0
      %1270 = vmatprep.subr.bf16.mxu0 0
      %1271 = vmatpush1.bf16.msra.mxu0 0
      %1272 = vmatprep.subr.bf16.mxu0 0
      %1273 = vmatpush1.bf16.msra.mxu0 0
      %1274 = vmatprep.subr.bf16.mxu0 0
      %1275 = vmatpush1.bf16.msra.mxu0 0
      %1276 = vmatprep.subr.bf16.mxu0 0
      %1277 = vmatpush1.bf16.msra.mxu0 0
      %1278 = vmatprep.subr.bf16.mxu0 0
      %1279 = vmatpush1.bf16.msra.mxu0 0
      %1280 = vmatprep.subr.bf16.mxu0 0
      %1281 = vmatpush1.bf16.msra.mxu0 0
      %1282 = vmatprep.subr.bf16.mxu0 0
      %1283 = vmatpush1.bf16.msra.mxu0 0
      %1284 = vmatprep.subr.bf16.mxu0 0
      %1285 = vmatpush1.bf16.msra.mxu0 0
      %1286 = vmatprep.subr.bf16.mxu0 0
      %1287 = vmatpush1.bf16.msra.mxu0 0
      %1288 = vmatprep.subr.bf16.mxu0 0
      %1289 = vmatpush1.bf16.msra.mxu0 0
      %1290 = vmatprep.subr.bf16.mxu0 0
      %1291 = vmatpush1.bf16.msra.mxu0 0
      %1292 = vmatprep.mubr.bf16.mxu0 0
      %1293 = vmatmul.mubr.bf16.gmra.mrb[0].mxu0 %v1255
      %v1294 = vpop.f32.mrb[0].mxu0
      %v1295 = vadd.f32 0.0, %v1294
      %v1296 = vpop.f32.mrb[0].mxu0
      %v1297 = vpop.f32.mrb[0].mxu0
      %v1298 = vpop.f32.mrb[0].mxu0
      %1299 = vdwg.mxu0
      %v1300 = vadd.f32 %v1143, %v1295
      %v1301 = vld [vmem:[%s9] sm:$0x1]
      %v1303 = vlaneseq
      %v1304 = vshrl.u32 %v1303, 7
      %v1305 = vsub.s32 0, %v1304
      %v1306 = vrot.slane %v1301, %v1305
      %v1308 = vadd.f32 %v1300, %v1306
      %v1309 = vld [vmem:[%s508] sm:$0xff]
      %v1310 = vadd.f32 %v1309, %v1308
      %v1311 = vsel %vm623, %v1310, 0.0
      %1312 = vadd.xlane.f32.xlu0 %v1311
      %v1313 = vpop.xlane.xlu0 %1312
      %v1314 = vrcp.pop 32.0
      %v1315 = vmul.f32 %v1313, %v1314
      %v1316 = vsub.f32 %v1310, %v1315
      %v1317 = vmul.f32 %v1316, %v1316
      %v1318 = vsel %vm623, %v1317, 0.0
      %1319 = vadd.xlane.f32.xlu0 %v1318
      %v1320 = vpop.xlane.xlu0 %1319
      %v1321 = vmul.f32 %v1320, %v1314
      %v1322 = vadd.f32 %v1321, 1e-05
      %v1323 = vrsqrt.pop %v1322
      %v1324 = vmul.f32 %v1316, %v1323
      %v1325 = vld [vmem:[%s10] sm:$0x1]
      %v1327 = vlaneseq
      %v1328 = vshrl.u32 %v1327, 7
      %v1329 = vsub.s32 0, %v1328
      %v1330 = vrot.slane %v1325, %v1329
      %v1332 = vmul.f32 %v1324, %v1330
      %v1333 = vld [vmem:[%s11] sm:$0x1]
      %v1335 = vlaneseq
      %v1336 = vshrl.u32 %v1335, 7
      %v1337 = vsub.s32 0, %v1336
      %v1338 = vrot.slane %v1333, %v1337
      %v1340 = vadd.f32 %v1332, %v1338
      %1341 = vst.msk [vmem:[%s515] sm:$0xff] %vm623, %v1340
      %p1342 = scmp.lt.s32.totalorder %s27, 1
      %s1343 = scalar_select %p1342, %s27, 1
      %p1344 = scmp.lt.s32.totalorder %s28, 0
      %s1345 = scalar_select %p1344, %s28, 0
      %s1346 = sadd.s32 %s1345, %s1343
      %s1347 = smul.addr %s1346, 8
      %s1348 = scalar_lea.vmem %s12, %s1347
      // Predicated region
      $region73: #{decoder_layer_forward.4} parent=67 // pred_check
        %p1349 = pneg %p333
      $region74: #{decoder_layer_forward.4} parent=67 // pred_check_branch
        %1351 = sbr.rel (%p1349) target = $region76
      $region75: #{decoder_layer_forward.4} parent=67 // pred_region
        _
      $region76: #{decoder_layer_forward.4} parent=67 // pred_fallthru
        _
    $region68: #{decoder_layer_forward.4} parent=5 // pred_fallthru
      _
    %p1352 = scmp.le.s32.totalorder 2, %s18
    // Predicated region
    $region77: #{decoder_layer_forward.4} parent=5 // pred_check
      %p1353 = pneg %p1352
    $region78: #{decoder_layer_forward.4} parent=5 // pred_check_branch
      %1355 = sbr.rel (%p1353) target = $region80
    $region79: #{decoder_layer_forward.4} parent=5 // pred_region
      %s1356 = ssub.s32 %s18, 2
      // Predicated region
      $region81: #{decoder_layer_forward.4} parent=79 // pred_check
        %p1357 = pneg %p339
      $region82: #{decoder_layer_forward.4} parent=79 // pred_check_branch
        %1359 = sbr.rel (%p1357) target = $region84
      $region83: #{decoder_layer_forward.4} parent=79 // pred_region
        %p1360 = scmp.lt.s32.totalorder %s29, 1
        %s1361 = scalar_select %p1360, %s29, 1
        %p1362 = scmp.lt.s32.totalorder %s30, 0
        %s1363 = scalar_select %p1362, %s30, 0
        %s1364 = sadd.s32 %s1363, %s1361
        %s1365 = smul.addr %s1364, 8
        %s1366 = scalar_lea.vmem %s12, %s1365
      $region84: #{decoder_layer_forward.4} parent=79 // pred_fallthru
        _
    $region80: #{decoder_layer_forward.4} parent=5 // pred_fallthru
      _
  $region6: #{decoder_layer_forward.4} parent=0 // loop_footer
    %s22 = sadd.s32 1, %s18
  $region7: #{decoder_layer_forward.4} parent=0 // loop_footer_branch
    %17 = sbr.rel target = $region3
  $region8: #{decoder_layer_forward.4} parent=0 // loop_exit
    _

// kernel: decoder_layer_forward.3
$region0: #{decoder_layer_forward.3}
  #allocation0 [shape = 'u32[]', space=smem, size = 0x4, offset = 0x4, fixed_abs, tag = 'smem constant byte address 0x4 - core index']
  #allocation1 [shape = 'u32[144,128]{1,0:T(1,128)}', space=vmem, size = 0x12000, scoped, tag = 'internal scratch']
  #allocation2 [shape = 'bf16[8,32]{1,0:T(8,128)(2,1)}', space=vmem, size = 0x800, scoped, tag = 'scratch operand']
  #allocation3 [shape = 'bf16[8,32]{1,0:T(8,128)(2,1)}', space=vmem, size = 0x800, scoped, tag = 'scratch operand']
  %s0 = inlined_call_operand.vmem [shape: f32[2,8,32], index: 0, kind: input, shape index: {}, may-alias: {0,1}]
  %s1 = inlined_call_operand.vmem [shape: f32[2,8,32], index: 1, kind: input, shape index: {}, may-alias: {0,1}]
  %s2 = inlined_call_operand.vmem [shape: f32[2,8,8], index: 2, kind: input, shape index: {}]
  %s3 = inlined_call_operand.hbm [shape: bf16[32,32], index: 3, kind: input, shape index: {}]
  %s4 = inlined_call_operand.vmem [shape: f32[1,32], index: 4, kind: input, shape index: {}]
  %s5 = inlined_call_operand.hbm [shape: bf16[32,64], index: 5, kind: input, shape index: {}]
  %s6 = inlined_call_operand.hbm [shape: f32[1,64], index: 6, kind: input, shape index: {}]
  %s7 = inlined_call_operand.hbm [shape: bf16[32,32], index: 7, kind: input, shape index: {}]
  %s8 = inlined_call_operand.vmem [shape: f32[1,32], index: 8, kind: input, shape index: {}]
  %s9 = inlined_call_operand.vmem [shape: f32[1,32], index: 9, kind: input, shape index: {}]
  %s10 = inlined_call_operand.vmem [shape: f32[1,32], index: 10, kind: input, shape index: {}]
  %s11 = inlined_call_operand.vmem [shape: bf16[2,8,32], index: 11, kind: output, shape index: {0}]
  %s12 = inlined_call_operand.vmem [shape: f32[2,8,32], index: 12, kind: output, shape index: {1}]
  %13 = xla_tuple %s11, %s12
  %s14 = sld [smem:[#allocation0]]
  $region105: #{decoder_layer_forward.3} parent=0
    _
  %s16 = ssub.s32 1, %s14
  %s17 = scalar_select 0, %s16, %s14
  $region1: #{decoder_layer_forward.3} parent=0
    #allocation4 [shape = 'u8[8192]{0}', space=vmem, size = 0x2000, scoped, tag = 'input window, operand 3, single buffered']
    #allocation5 [shape = 's32[2]{0}', space=sflag, size = 0x8, scoped, tag = 'scoped memory for decoder_layer_forward.3']
    #allocation6 [shape = 'u8[8192]{0}', space=vmem, size = 0x2000, scoped, tag = 'input window, operand 5, single buffered']
    #allocation7 [shape = 's32[1]{0}', space=sflag, size = 0x4, scoped, tag = 'scoped memory for decoder_layer_forward.3']
    #allocation8 [shape = 'u8[512]{0}', space=vmem, size = 0x400, scoped, tag = 'input window, operand 6, single buffered']
    #allocation9 [shape = 'u8[8192]{0}', space=vmem, size = 0x2000, scoped, tag = 'input window, operand 7, single buffered']
    #allocation10 [shape = 's32[1]{0}', space=sflag, size = 0x4, scoped, tag = 'scoped memory for decoder_layer_forward.3']
    %18 = vsyncpa [#allocation5], 0
    %19 = vsyncpa [#allocation7], 0
    %20 = vsyncpa [#allocation10], 0
    loop: start=0, step=1, limit=4
    $region2: #{decoder_layer_forward.3} parent=1 // loop_pre_header
      _
    $region3: #{decoder_layer_forward.3} parent=1 // loop_header
      %s22 = sphi 0, %s26
      %p23 = scmp.ge.s32.totalorder %s22, 4
      %s29 = sphi 0, %s41
      %s30 = sphi 0, %s37
      %s31 = sphi 0, %s29
      %s32 = sphi 0, %s30
      %s33 = sphi 0, %s31
      %s34 = sphi 0, %s32
      %s46 = sphi 0, %s48
      %s49 = sphi 0, %s46
      %s50 = sphi 0, %s49
      %s66 = sphi 0, %s50
      %s72 = sphi 0, %s74
      %s75 = sphi 0, %s72
      %s76 = sphi 0, %s75
      %s92 = sphi 0, %s76
      %s100 = sphi 0, %s102
      %s103 = sphi 0, %s100
      %s104 = sphi 0, %s103
      %s120 = sphi 0, %s104
      %s124 = sphi 0, %s124
      %s126 = sphi 0, %s124
      %s127 = sphi 0, %s126
      %s141 = sphi 0, %s127
      %s145 = sphi 0, %s145
      %s147 = sphi 0, %s145
      %s148 = sphi 0, %s147
      %s162 = sphi 0, %s148
      %s166 = sphi 0, %s166
      %s168 = sphi 0, %s166
      %s169 = sphi 0, %s168
      %s183 = sphi 0, %s169
      %s187 = sphi 0, %s187
      %s189 = sphi 0, %s187
      %s190 = sphi 0, %s189
      %s204 = sphi 0, %s190
      %s208 = sphi 0, %s208
      %s210 = sphi 0, %s208
      %s211 = sphi 0, %s210
      %s225 = sphi 0, %s211
      %s229 = sphi 0, %s229
      %s231 = sphi 0, %s229
      %s232 = sphi 0, %s231
      %s246 = sphi 0, %s232
      %s250 = sphi 0, %s250
      %s252 = sphi 0, %s250
      %s253 = sphi 0, %s252
      %s267 = sphi 0, %s253
      %s271 = sphi 0, %s271
      %s273 = sphi 0, %s271
      %s274 = sphi 0, %s273
      %s288 = sphi 0, %s274
      %s296 = sphi 0, %s298
      %s299 = sphi 0, %s296
      %s300 = sphi 0, %s299
      %s316 = sphi 0, %s300
      %s324 = sphi 0, %s326
      %s327 = sphi 0, %s324
      %s328 = sphi 0, %s327
      %s344 = sphi 0, %s328
    $region4: #{decoder_layer_forward.3} parent=1 // loop_header_branch
      %25 = sbr.rel (%p23) target = $region8
    $region5: #{decoder_layer_forward.3} parent=1 // loop_body
      %s27 = ssub.s32 %s22, 1
      %s28 = ssub.s32 %s22, 2
      %s35 = sadd.s32 1, %s30
      %p36 = scmp.ge.s32.totalorder %s35, 1
      %s37 = scalar_select %p36, 0, %s35
      %s38 = sadd.s32 1, %s29
      %s39 = scalar_select %p36, %s38, %s29
      %p40 = scmp.ge.s32.totalorder %s39, 2
      %s41 = scalar_select %p40, 0, %s39
      %s42 = ssub.s32 %s29, %s41
      %s43 = ssub.s32 %s30, %s37
      %s44 = sor.u32 %s42, %s43
      %p45 = scmp.eq.s32.totalorder %s44, 0
      %s47 = sadd.s32 %s46, 1
      %s48 = scalar_select %p45, %s46, %s47
      %p51 = pneg %p45
      %p52 = scmp.eq.s32.totalorder %s22, 1
      %p53 = por %p51, %p52
      %p54 = scmp.ne.s32.totalorder %s46, %s49
      %p55 = scmp.eq.s32.totalorder %s22, 0
      %p56 = por %p54, %p55
      %p57 = scmp.ne.s32.totalorder %s46, %s49
      %p58 = scmp.eq.s32.totalorder %s27, 1
      %p59 = por %p57, %p58
      %p60 = scmp.ne.s32.totalorder %s49, %s50
      %p61 = scmp.eq.s32.totalorder %s27, 0
      %p62 = por %p60, %p61
      %p63 = scmp.ne.s32.totalorder %s49, %s50
      %p64 = scmp.eq.s32.totalorder %s28, 1
      %p65 = por %p63, %p64
      %p67 = scmp.ne.s32.totalorder %s50, %s66
      %p68 = scmp.eq.s32.totalorder %s28, 0
      %p69 = por %p67, %p68
      %s70 = ssub.s32 %s29, %s41
      %p71 = scmp.eq.s32.totalorder %s70, 0
      %s73 = sadd.s32 %s72, 1
      %s74 = scalar_select %p71, %s72, %s73
      %p77 = pneg %p71
      %p78 = scmp.eq.s32.totalorder %s22, 1
      %p79 = por %p77, %p78
      %p80 = scmp.ne.s32.totalorder %s72, %s75
      %p81 = scmp.eq.s32.totalorder %s22, 0
      %p82 = por %p80, %p81
      %p83 = scmp.ne.s32.totalorder %s72, %s75
      %p84 = scmp.eq.s32.totalorder %s27, 1
      %p85 = por %p83, %p84
      %p86 = scmp.ne.s32.totalorder %s75, %s76
      %p87 = scmp.eq.s32.totalorder %s27, 0
      %p88 = por %p86, %p87
      %p89 = scmp.ne.s32.totalorder %s75, %s76
      %p90 = scmp.eq.s32.totalorder %s28, 1
      %p91 = por %p89, %p90
      %p93 = scmp.ne.s32.totalorder %s76, %s92
      %p94 = scmp.eq.s32.totalorder %s28, 0
      %p95 = por %p93, %p94
      %s96 = ssub.s32 %s29, %s41
      %s97 = ssub.s32 %s30, %s37
      %s98 = sor.u32 %s96, %s97
      %p99 = scmp.eq.s32.totalorder %s98, 0
      %s101 = sadd.s32 %s100, 1
      %s102 = scalar_select %p99, %s100, %s101
      %p105 = pneg %p99
      %p106 = scmp.eq.s32.totalorder %s22, 1
      %p107 = por %p105, %p106
      %p108 = scmp.ne.s32.totalorder %s100, %s103
      %p109 = scmp.eq.s32.totalorder %s22, 0
      %p110 = por %p108, %p109
      %p111 = scmp.ne.s32.totalorder %s100, %s103
      %p112 = scmp.eq.s32.totalorder %s27, 1
      %p113 = por %p111, %p112
      %p114 = scmp.ne.s32.totalorder %s103, %s104
      %p115 = scmp.eq.s32.totalorder %s27, 0
      %p116 = por %p114, %p115
      %p117 = scmp.ne.s32.totalorder %s103, %s104
      %p118 = scmp.eq.s32.totalorder %s28, 1
      %p119 = por %p117, %p118
      %p121 = scmp.ne.s32.totalorder %s104, %s120
      %p122 = scmp.eq.s32.totalorder %s28, 0
      %p123 = por %p121, %p122
      %s125 = sadd.s32 %s124, 1
      %p128 = scmp.eq.s32.totalorder %s22, 1
      %p129 = scmp.ne.s32.totalorder %s124, %s126
      %p130 = scmp.eq.s32.totalorder %s22, 0
      %p131 = por %p129, %p130
      %p132 = scmp.ne.s32.totalorder %s124, %s126
      %p133 = scmp.eq.s32.totalorder %s27, 1
      %p134 = por %p132, %p133
      %p135 = scmp.ne.s32.totalorder %s126, %s127
      %p136 = scmp.eq.s32.totalorder %s27, 0
      %p137 = por %p135, %p136
      %p138 = scmp.ne.s32.totalorder %s126, %s127
      %p139 = scmp.eq.s32.totalorder %s28, 1
      %p140 = por %p138, %p139
      %p142 = scmp.ne.s32.totalorder %s127, %s141
      %p143 = scmp.eq.s32.totalorder %s28, 0
      %p144 = por %p142, %p143
      %s146 = sadd.s32 %s145, 1
      %p149 = scmp.eq.s32.totalorder %s22, 1
      %p150 = scmp.ne.s32.totalorder %s145, %s147
      %p151 = scmp.eq.s32.totalorder %s22, 0
      %p152 = por %p150, %p151
      %p153 = scmp.ne.s32.totalorder %s145, %s147
      %p154 = scmp.eq.s32.totalorder %s27, 1
      %p155 = por %p153, %p154
      %p156 = scmp.ne.s32.totalorder %s147, %s148
      %p157 = scmp.eq.s32.totalorder %s27, 0
      %p158 = por %p156, %p157
      %p159 = scmp.ne.s32.totalorder %s147, %s148
      %p160 = scmp.eq.s32.totalorder %s28, 1
      %p161 = por %p159, %p160
      %p163 = scmp.ne.s32.totalorder %s148, %s162
      %p164 = scmp.eq.s32.totalorder %s28, 0
      %p165 = por %p163, %p164
      %s167 = sadd.s32 %s166, 1
      %p170 = scmp.eq.s32.totalorder %s22, 1
      %p171 = scmp.ne.s32.totalorder %s166, %s168
      %p172 = scmp.eq.s32.totalorder %s22, 0
      %p173 = por %p171, %p172
      %p174 = scmp.ne.s32.totalorder %s166, %s168
      %p175 = scmp.eq.s32.totalorder %s27, 1
      %p176 = por %p174, %p175
      %p177 = scmp.ne.s32.totalorder %s168, %s169
      %p178 = scmp.eq.s32.totalorder %s27, 0
      %p179 = por %p177, %p178
      %p180 = scmp.ne.s32.totalorder %s168, %s169
      %p181 = scmp.eq.s32.totalorder %s28, 1
      %p182 = por %p180, %p181
      %p184 = scmp.ne.s32.totalorder %s169, %s183
      %p185 = scmp.eq.s32.totalorder %s28, 0
      %p186 = por %p184, %p185
      %s188 = sadd.s32 %s187, 1
      %p191 = scmp.eq.s32.totalorder %s22, 1
      %p192 = scmp.ne.s32.totalorder %s187, %s189
      %p193 = scmp.eq.s32.totalorder %s22, 0
      %p194 = por %p192, %p193
      %p195 = scmp.ne.s32.totalorder %s187, %s189
      %p196 = scmp.eq.s32.totalorder %s27, 1
      %p197 = por %p195, %p196
      %p198 = scmp.ne.s32.totalorder %s189, %s190
      %p199 = scmp.eq.s32.totalorder %s27, 0
      %p200 = por %p198, %p199
      %p201 = scmp.ne.s32.totalorder %s189, %s190
      %p202 = scmp.eq.s32.totalorder %s28, 1
      %p203 = por %p201, %p202
      %p205 = scmp.ne.s32.totalorder %s190, %s204
      %p206 = scmp.eq.s32.totalorder %s28, 0
      %p207 = por %p205, %p206
      %s209 = sadd.s32 %s208, 1
      %p212 = scmp.eq.s32.totalorder %s22, 1
      %p213 = scmp.ne.s32.totalorder %s208, %s210
      %p214 = scmp.eq.s32.totalorder %s22, 0
      %p215 = por %p213, %p214
      %p216 = scmp.ne.s32.totalorder %s208, %s210
      %p217 = scmp.eq.s32.totalorder %s27, 1
      %p218 = por %p216, %p217
      %p219 = scmp.ne.s32.totalorder %s210, %s211
      %p220 = scmp.eq.s32.totalorder %s27, 0
      %p221 = por %p219, %p220
      %p222 = scmp.ne.s32.totalorder %s210, %s211
      %p223 = scmp.eq.s32.totalorder %s28, 1
      %p224 = por %p222, %p223
      %p226 = scmp.ne.s32.totalorder %s211, %s225
      %p227 = scmp.eq.s32.totalorder %s28, 0
      %p228 = por %p226, %p227
      %s230 = sadd.s32 %s229, 1
      %p233 = scmp.eq.s32.totalorder %s22, 1
      %p234 = scmp.ne.s32.totalorder %s229, %s231
      %p235 = scmp.eq.s32.totalorder %s22, 0
      %p236 = por %p234, %p235
      %p237 = scmp.ne.s32.totalorder %s229, %s231
      %p238 = scmp.eq.s32.totalorder %s27, 1
      %p239 = por %p237, %p238
      %p240 = scmp.ne.s32.totalorder %s231, %s232
      %p241 = scmp.eq.s32.totalorder %s27, 0
      %p242 = por %p240, %p241
      %p243 = scmp.ne.s32.totalorder %s231, %s232
      %p244 = scmp.eq.s32.totalorder %s28, 1
      %p245 = por %p243, %p244
      %p247 = scmp.ne.s32.totalorder %s232, %s246
      %p248 = scmp.eq.s32.totalorder %s28, 0
      %p249 = por %p247, %p248
      %s251 = sadd.s32 %s250, 1
      %p254 = scmp.eq.s32.totalorder %s22, 1
      %p255 = scmp.ne.s32.totalorder %s250, %s252
      %p256 = scmp.eq.s32.totalorder %s22, 0
      %p257 = por %p255, %p256
      %p258 = scmp.ne.s32.totalorder %s250, %s252
      %p259 = scmp.eq.s32.totalorder %s27, 1
      %p260 = por %p258, %p259
      %p261 = scmp.ne.s32.totalorder %s252, %s253
      %p262 = scmp.eq.s32.totalorder %s27, 0
      %p263 = por %p261, %p262
      %p264 = scmp.ne.s32.totalorder %s252, %s253
      %p265 = scmp.eq.s32.totalorder %s28, 1
      %p266 = por %p264, %p265
      %p268 = scmp.ne.s32.totalorder %s253, %s267
      %p269 = scmp.eq.s32.totalorder %s28, 0
      %p270 = por %p268, %p269
      %s272 = sadd.s32 %s271, 1
      %p275 = scmp.eq.s32.totalorder %s22, 1
      %p276 = scmp.ne.s32.totalorder %s271, %s273
      %p277 = scmp.eq.s32.totalorder %s22, 0
      %p278 = por %p276, %p277
      %p279 = scmp.ne.s32.totalorder %s271, %s273
      %p280 = scmp.eq.s32.totalorder %s27, 1
      %p281 = por %p279, %p280
      %p282 = scmp.ne.s32.totalorder %s273, %s274
      %p283 = scmp.eq.s32.totalorder %s27, 0
      %p284 = por %p282, %p283
      %p285 = scmp.ne.s32.totalorder %s273, %s274
      %p286 = scmp.eq.s32.totalorder %s28, 1
      %p287 = por %p285, %p286
      %p289 = scmp.ne.s32.totalorder %s274, %s288
      %p290 = scmp.eq.s32.totalorder %s28, 0
      %p291 = por %p289, %p290
      %s292 = ssub.s32 %s29, %s41
      %s293 = ssub.s32 %s30, %s37
      %s294 = sor.u32 %s292, %s293
      %p295 = scmp.eq.s32.totalorder %s294, 0
      %s297 = sadd.s32 %s296, 1
      %s298 = scalar_select %p295, %s296, %s297
      %p301 = pneg %p295
      %p302 = scmp.eq.s32.totalorder %s22, 1
      %p303 = por %p301, %p302
      %p304 = scmp.ne.s32.totalorder %s296, %s299
      %p305 = scmp.eq.s32.totalorder %s22, 0
      %p306 = por %p304, %p305
      %p307 = scmp.ne.s32.totalorder %s296, %s299
      %p308 = scmp.eq.s32.totalorder %s27, 1
      %p309 = por %p307, %p308
      %p310 = scmp.ne.s32.totalorder %s299, %s300
      %p311 = scmp.eq.s32.totalorder %s27, 0
      %p312 = por %p310, %p311
      %p313 = scmp.ne.s32.totalorder %s299, %s300
      %p314 = scmp.eq.s32.totalorder %s28, 1
      %p315 = por %p313, %p314
      %p317 = scmp.ne.s32.totalorder %s300, %s316
      %p318 = scmp.eq.s32.totalorder %s28, 0
      %p319 = por %p317, %p318
      %s320 = ssub.s32 %s29, %s41
      %s321 = ssub.s32 %s30, %s37
      %s322 = sor.u32 %s320, %s321
      %p323 = scmp.eq.s32.totalorder %s322, 0
      %s325 = sadd.s32 %s324, 1
      %s326 = scalar_select %p323, %s324, %s325
      %p329 = pneg %p323
      %p330 = scmp.eq.s32.totalorder %s22, 1
      %p331 = por %p329, %p330
      %p332 = scmp.ne.s32.totalorder %s324, %s327
      %p333 = scmp.eq.s32.totalorder %s22, 0
      %p334 = por %p332, %p333
      %p335 = scmp.ne.s32.totalorder %s324, %s327
      %p336 = scmp.eq.s32.totalorder %s27, 1
      %p337 = por %p335, %p336
      %p338 = scmp.ne.s32.totalorder %s327, %s328
      %p339 = scmp.eq.s32.totalorder %s27, 0
      %p340 = por %p338, %p339
      %p341 = scmp.ne.s32.totalorder %s327, %s328
      %p342 = scmp.eq.s32.totalorder %s28, 1
      %p343 = por %p341, %p342
      %p345 = scmp.ne.s32.totalorder %s328, %s344
      %p346 = scmp.eq.s32.totalorder %s28, 0
      %p347 = por %p345, %p346
      %p348 = scmp.le.s32.totalorder 1, %s22
      %p349 = scmp.lt.s32.totalorder %s22, 3
      %p350 = pnand %p348, %p349
      %p351 = pneg %p350
      // Predicated region
      $region9: #{decoder_layer_forward.3} parent=5 // pred_check
        _
      $region10: #{decoder_layer_forward.3} parent=5 // pred_check_branch
        %353 = sbr.rel (%p350) target = $region12
      $region11: #{decoder_layer_forward.3} parent=5 // pred_region
        %s354 = ssub.s32 %s22, 1
        // Predicated region
        $region13: #{decoder_layer_forward.3} parent=11 // pred_check
          %p355 = pneg %p137
        $region14: #{decoder_layer_forward.3} parent=11 // pred_check_branch
          %357 = sbr.rel (%p355) target = $region16
        $region15: #{decoder_layer_forward.3} parent=11 // pred_region
          %s359 = ssub.s32 256, 256
          %360 = vsyncadd [#allocation5], %s359
          %s361 = sshll.u32 [#allocation4], 4
          %s362 = int_to_ptr.vmem [resolvable:$true] %s361
          %367 = dma.hbm_to_vmem [thread:$0]  %s3, 256, %s362, [#allocation5], 64, 64, 4
        $region16: #{decoder_layer_forward.3} parent=11 // pred_fallthru
          _
        // Predicated region
        $region17: #{decoder_layer_forward.3} parent=11 // pred_check
          %p368 = pneg %p158
        $region18: #{decoder_layer_forward.3} parent=11 // pred_check_branch
          %370 = sbr.rel (%p368) target = $region20
        $region19: #{decoder_layer_forward.3} parent=11 // pred_region
          _
        $region20: #{decoder_layer_forward.3} parent=11 // pred_fallthru
          _
        // Predicated region
        $region21: #{decoder_layer_forward.3} parent=11 // pred_check
          %p371 = pneg %p179
        $region22: #{decoder_layer_forward.3} parent=11 // pred_check_branch
          %373 = sbr.rel (%p371) target = $region24
        $region23: #{decoder_layer_forward.3} parent=11 // pred_region
          %s375 = ssub.s32 256, 256
          %376 = vsyncadd [#allocation7], %s375
          %s377 = sshll.u32 [#allocation6], 4
          %s378 = int_to_ptr.vmem [resolvable:$true] %s377
          %383 = dma.hbm_to_vmem [thread:$0]  %s5, 256, %s378, [#allocation7], 64, 64, 4
        $region24: #{decoder_layer_forward.3} parent=11 // pred_fallthru
          _
        // Predicated region
        $region25: #{decoder_layer_forward.3} parent=11 // pred_check
          %p384 = pneg %p200
        $region26: #{decoder_layer_forward.3} parent=11 // pred_check_branch
          %386 = sbr.rel (%p384) target = $region28
        $region27: #{decoder_layer_forward.3} parent=11 // pred_region
          %s388 = ssub.s32 16, 16
          %389 = vsyncadd [#allocation7], %s388
          %s391 = sshll.u32 [#allocation8], 4
          %s392 = int_to_ptr.vmem [resolvable:$true] %s391
          %394 = dma.hbm_to_vmem [thread:$0]  %s6, 16, %s392, [#allocation7]
        $region28: #{decoder_layer_forward.3} parent=11 // pred_fallthru
          _
        // Predicated region
        $region29: #{decoder_layer_forward.3} parent=11 // pred_check
          %p395 = pneg %p221
        $region30: #{decoder_layer_forward.3} parent=11 // pred_check_branch
          %397 = sbr.rel (%p395) target = $region32
        $region31: #{decoder_layer_forward.3} parent=11 // pred_region
          %s399 = ssub.s32 256, 256
          %400 = vsyncadd [#allocation10], %s399
          %s401 = sshll.u32 [#allocation9], 4
          %s402 = int_to_ptr.vmem [resolvable:$true] %s401
          %407 = dma.hbm_to_vmem [thread:$0]  %s7, 256, %s402, [#allocation10], 64, 64, 4
        $region32: #{decoder_layer_forward.3} parent=11 // pred_fallthru
          _
        // Predicated region
        $region33: #{decoder_layer_forward.3} parent=11 // pred_check
          %p408 = pneg %p242
        $region34: #{decoder_layer_forward.3} parent=11 // pred_check_branch
          %410 = sbr.rel (%p408) target = $region36
        $region35: #{decoder_layer_forward.3} parent=11 // pred_region
          _
        $region36: #{decoder_layer_forward.3} parent=11 // pred_fallthru
          _
        // Predicated region
        $region37: #{decoder_layer_forward.3} parent=11 // pred_check
          %p411 = pneg %p263
        $region38: #{decoder_layer_forward.3} parent=11 // pred_check_branch
          %413 = sbr.rel (%p411) target = $region40
        $region39: #{decoder_layer_forward.3} parent=11 // pred_region
          _
        $region40: #{decoder_layer_forward.3} parent=11 // pred_fallthru
          _
        // Predicated region
        $region41: #{decoder_layer_forward.3} parent=11 // pred_check
          %p414 = pneg %p284
        $region42: #{decoder_layer_forward.3} parent=11 // pred_check_branch
          %416 = sbr.rel (%p414) target = $region44
        $region43: #{decoder_layer_forward.3} parent=11 // pred_region
          _
        $region44: #{decoder_layer_forward.3} parent=11 // pred_fallthru
          _
      $region12: #{decoder_layer_forward.3} parent=5 // pred_fallthru
        _
      %p417 = scmp.lt.s32.totalorder %s22, 2
      // Predicated region
      $region45: #{decoder_layer_forward.3} parent=5 // pred_check
        %p418 = pneg %p417
      $region46: #{decoder_layer_forward.3} parent=5 // pred_check_branch
        %420 = sbr.rel (%p418) target = $region48
      $region47: #{decoder_layer_forward.3} parent=5 // pred_region
        // Predicated region
        $region49: #{decoder_layer_forward.3} parent=47 // pred_check
          %p421 = pneg %p56
        $region50: #{decoder_layer_forward.3} parent=47 // pred_check_branch
          %423 = sbr.rel (%p421) target = $region52
        $region51: #{decoder_layer_forward.3} parent=47 // pred_region
          %p424 = scmp.lt.s32.totalorder %s29, 1
          %s425 = scalar_select %p424, %s29, 1
          %p426 = scmp.lt.s32.totalorder %s30, 0
          %s427 = scalar_select %p426, %s30, 0
          %s428 = sadd.s32 %s427, %s425
          %s429 = smul.addr %s428, 8
          %s430 = scalar_lea.vmem %s0, %s429
        $region52: #{decoder_layer_forward.3} parent=47 // pred_fallthru
          _
        // Predicated region
        $region53: #{decoder_layer_forward.3} parent=47 // pred_check
          %p431 = pneg %p82
        $region54: #{decoder_layer_forward.3} parent=47 // pred_check_branch
          %433 = sbr.rel (%p431) target = $region56
        $region55: #{decoder_layer_forward.3} parent=47 // pred_region
          %p434 = scmp.lt.s32.totalorder %s29, 1
          %s435 = scalar_select %p434, %s29, 1
          %s436 = smul.addr %s435, 8
          %s437 = scalar_lea.vmem %s1, %s436
        $region56: #{decoder_layer_forward.3} parent=47 // pred_fallthru
          _
        // Predicated region
        $region57: #{decoder_layer_forward.3} parent=47 // pred_check
          %p438 = pneg %p110
        $region58: #{decoder_layer_forward.3} parent=47 // pred_check_branch
          %440 = sbr.rel (%p438) target = $region60
        $region59: #{decoder_layer_forward.3} parent=47 // pred_region
          %p441 = scmp.lt.s32.totalorder %s29, 1
          %s442 = scalar_select %p441, %s29, 1
          %p443 = scmp.lt.s32.totalorder %s30, 0
          %s444 = scalar_select %p443, %s30, 0
          %s445 = sadd.s32 %s444, %s442
          %s446 = smul.addr %s445, 8
          %s447 = scalar_lea.vmem %s2, %s446
        $region60: #{decoder_layer_forward.3} parent=47 // pred_fallthru
          _
      $region48: #{decoder_layer_forward.3} parent=5 // pred_fallthru
        _
      %p448 = scmp.le.s32.totalorder 1, %s22
      %p449 = scmp.lt.s32.totalorder %s22, 3
      %p450 = pnand %p448, %p449
      %p451 = pneg %p450
      // Predicated region
      $region61: #{decoder_layer_forward.3} parent=5 // pred_check
        _
      $region62: #{decoder_layer_forward.3} parent=5 // pred_check_branch
        %453 = sbr.rel (%p450) target = $region64
      $region63: #{decoder_layer_forward.3} parent=5 // pred_region
        %s454 = ssub.s32 %s22, 1
        // Predicated region
        $region65: #{decoder_layer_forward.3} parent=63 // pred_check
          %p455 = pneg %p137
        $region66: #{decoder_layer_forward.3} parent=63 // pred_check_branch
          %457 = sbr.rel (%p455) target = $region68
        $region67: #{decoder_layer_forward.3} parent=63 // pred_region
          %458 = dma.done [#allocation5], 256
        $region68: #{decoder_layer_forward.3} parent=63 // pred_fallthru
          _
        // Predicated region
        $region69: #{decoder_layer_forward.3} parent=63 // pred_check
          %p459 = pneg %p179
        $region70: #{decoder_layer_forward.3} parent=63 // pred_check_branch
          %461 = sbr.rel (%p459) target = $region72
        $region71: #{decoder_layer_forward.3} parent=63 // pred_region
          %462 = dma.done [#allocation7], 256
        $region72: #{decoder_layer_forward.3} parent=63 // pred_fallthru
          _
        // Predicated region
        $region73: #{decoder_layer_forward.3} parent=63 // pred_check
          %p463 = pneg %p200
        $region74: #{decoder_layer_forward.3} parent=63 // pred_check_branch
          %465 = sbr.rel (%p463) target = $region76
        $region75: #{decoder_layer_forward.3} parent=63 // pred_region
          %466 = dma.done [#allocation7], 16
        $region76: #{decoder_layer_forward.3} parent=63 // pred_fallthru
          _
        // Predicated region
        $region77: #{decoder_layer_forward.3} parent=63 // pred_check
          %p467 = pneg %p221
        $region78: #{decoder_layer_forward.3} parent=63 // pred_check_branch
          %469 = sbr.rel (%p467) target = $region80
        $region79: #{decoder_layer_forward.3} parent=63 // pred_region
          %470 = dma.done [#allocation10], 256
        $region80: #{decoder_layer_forward.3} parent=63 // pred_fallthru
          _
        %p471 = scmp.lt.s32.totalorder %s31, 1
        %s472 = scalar_select %p471, %s31, 1
        %p473 = scmp.lt.s32.totalorder %s32, 0
        %s474 = scalar_select %p473, %s32, 0
        %s475 = sadd.s32 %s474, %s472
        %s476 = smul.addr %s475, 8
        %s477 = scalar_lea.vmem %s0, %s476
        %p478 = pneg %p62
        %p479 = pneg %p59
        %p480 = scmp.lt.s32.totalorder %s31, 1
        %s481 = scalar_select %p480, %s31, 1
        %s482 = smul.addr %s481, 8
        %s483 = scalar_lea.vmem %s1, %s482
        %p484 = pneg %p88
        %p485 = pneg %p85
        %p486 = scmp.lt.s32.totalorder %s31, 1
        %s487 = scalar_select %p486, %s31, 1
        %p488 = scmp.lt.s32.totalorder %s32, 0
        %s489 = scalar_select %p488, %s32, 0
        %s490 = sadd.s32 %s489, %s487
        %s491 = smul.addr %s490, 8
        %s492 = scalar_lea.vmem %s2, %s491
        %p493 = pneg %p116
        %p494 = pneg %p113
        %p495 = pneg %p137
        %p496 = pneg %p134
        %p497 = pneg %p158
        %p498 = pneg %p155
        %p499 = pneg %p179
        %p500 = pneg %p176
        %p501 = pneg %p200
        %p502 = pneg %p197
        %p503 = pneg %p221
        %p504 = pneg %p218
        %p505 = pneg %p242
        %p506 = pneg %p239
        %p507 = pneg %p263
        %p508 = pneg %p260
        %p509 = pneg %p284
        %p510 = pneg %p281
        %p511 = pneg %p312
        %p512 = pneg %p309
        %p513 = scmp.lt.s32.totalorder %s31, 1
        %s514 = scalar_select %p513, %s31, 1
        %p515 = scmp.lt.s32.totalorder %s32, 0
        %s516 = scalar_select %p515, %s32, 0
        %s517 = sadd.s32 %s516, %s514
        %s518 = smul.addr %s517, 4
        %s519 = scalar_lea.vmem %s11, %s518
        %p520 = pneg %p340
        %p521 = pneg %p337
        %p522 = scmp.lt.s32.totalorder %s31, 1
        %s523 = scalar_select %p522, %s31, 1
        %p524 = scmp.lt.s32.totalorder %s32, 0
        %s525 = scalar_select %p524, %s32, 0
        %s526 = sadd.s32 %s525, %s523
        %s527 = smul.addr %s526, 8
        %s528 = scalar_lea.vmem %s12, %s527
        %p529 = scmp.lt.s32.totalorder %s31, 1
        %s530 = scalar_select %p529, %s31, 1
        %p531 = scmp.lt.s32.totalorder %s32, 0
        %s532 = scalar_select %p531, %s32, 0
        %s533 = sadd.s32 %s532, %s530
        %s534 = smul.addr %s533, 8
        %s535 = scalar_lea.vmem %s0, %s534
        %p536 = scmp.lt.s32.totalorder %s31, 1
        %s537 = scalar_select %p536, %s31, 1
        %s538 = smul.addr %s537, 8
        %s539 = scalar_lea.vmem %s1, %s538
        %p540 = scmp.lt.s32.totalorder %s31, 1
        %s541 = scalar_select %p540, %s31, 1
        %p542 = scmp.lt.s32.totalorder %s32, 0
        %s543 = scalar_select %p542, %s32, 0
        %s544 = sadd.s32 %s543, %s541
        %s545 = smul.addr %s544, 8
        %s546 = scalar_lea.vmem %s2, %s545
        %p547 = scmp.lt.s32.totalorder %s31, 1
        %s548 = scalar_select %p547, %s31, 1
        %p549 = scmp.lt.s32.totalorder %s32, 0
        %s550 = scalar_select %p549, %s32, 0
        %s551 = sadd.s32 %s550, %s548
        %s552 = smul.addr %s551, 4
        %s553 = scalar_lea.vmem %s11, %s552
        %p554 = scmp.lt.s32.totalorder %s31, 1
        %s555 = scalar_select %p554, %s31, 1
        %p556 = scmp.lt.s32.totalorder %s32, 0
        %s557 = scalar_select %p556, %s32, 0
        %s558 = sadd.s32 %s557, %s555
        %s559 = smul.addr %s558, 8
        %s560 = scalar_lea.vmem %s12, %s559
        %p562 = scmp.eq.s32.totalorder %s32, 0
        // Predicated region
        $region81: #{decoder_layer_forward.3} parent=63 // pred_check
          %p563 = pneg %p562
        $region82: #{decoder_layer_forward.3} parent=63 // pred_check_branch
          %565 = sbr.rel (%p563) target = $region84
        $region83: #{decoder_layer_forward.3} parent=63 // pred_region
          %v566 = vld [vmem:[%s539] sm:$0xff]
          %v567 = vpack.c.bf16 %v566, %v566
          %v568 = vld [vmem:[#allocation6] sm:$0xf]
          %v569 = vld [vmem:[#allocation6 + $0x4] sm:$0xf]
          %v570 = vld [vmem:[#allocation6 + $0x8] sm:$0xf]
          %v571 = vld [vmem:[#allocation6 + $0xc] sm:$0xf]
          %v572 = vld [vmem:[#allocation8] sm:$0x1]
          %v574 = vlaneseq
          %v575 = vshrl.u32 %v574, 7
          %v576 = vsub.s32 0, %v575
          %v577 = vrot.slane %v572, %v576
          %v583 = vunpack.c.l.b16 %v568
          %v584 = vunpack.c.l.b16 %v569
          %v585 = vunpack.c.l.b16 %v570
          %v586 = vunpack.c.l.b16 %v571
          %v587 = vpack.c.b16 %v584, %v583
          %v588 = vpack.c.b16 %v586, %v585
          %vm591 = vcmask 261120
          %v593 = vsel %vm591, %v567, 0
          %595 = vmatprep.subr.bf16.mxu0 0
          %596 = vmatpush1.bf16.msra.mxu0 %v587
          %597 = vmatprep.subr.bf16.mxu0 0
          %598 = vmatpush1.bf16.msra.mxu0 %v588
          %599 = vmatprep.subr.bf16.mxu0 0
          %600 = vmatpush1.bf16.msra.mxu0 0
          %601 = vmatprep.subr.bf16.mxu0 0
          %602 = vmatpush1.bf16.msra.mxu0 0
          %603 = vmatprep.subr.bf16.mxu0 0
          %604 = vmatpush1.bf16.msra.mxu0 0
          %605 = vmatprep.subr.bf16.mxu0 0
          %606 = vmatpush1.bf16.msra.mxu0 0
          %607 = vmatprep.subr.bf16.mxu0 0
          %608 = vmatpush1.bf16.msra.mxu0 0
          %609 = vmatprep.subr.bf16.mxu0 0
          %610 = vmatpush1.bf16.msra.mxu0 0
          %611 = vmatprep.subr.bf16.mxu0 0
          %612 = vmatpush1.bf16.msra.mxu0 0
          %613 = vmatprep.subr.bf16.mxu0 0
          %614 = vmatpush1.bf16.msra.mxu0 0
          %615 = vmatprep.subr.bf16.mxu0 0
          %616 = vmatpush1.bf16.msra.mxu0 0
          %617 = vmatprep.subr.bf16.mxu0 0
          %618 = vmatpush1.bf16.msra.mxu0 0
          %619 = vmatprep.subr.bf16.mxu0 0
          %620 = vmatpush1.bf16.msra.mxu0 0
          %621 = vmatprep.subr.bf16.mxu0 0
          %622 = vmatpush1.bf16.msra.mxu0 0
          %623 = vmatprep.subr.bf16.mxu0 0
          %624 = vmatpush1.bf16.msra.mxu0 0
          %625 = vmatprep.subr.bf16.mxu0 0
          %626 = vmatpush1.bf16.msra.mxu0 0
          %627 = vmatprep.mubr.bf16.mxu0 0
          %628 = vmatmul.mubr.bf16.gmra.mrb[0].mxu0 %v593
          %v629 = vpop.f32.mrb[0].mxu0
          %v630 = vadd.f32 %v577, %v629
          %v631 = vpop.f32.mrb[0].mxu0
          %v632 = vpop.f32.mrb[0].mxu0
          %v633 = vpop.f32.mrb[0].mxu0
          %634 = vdwg.mxu0
          %v635 = vpack.c.bf16 %v630, %v630
          %vm636 = vcmask 257024
          %637 = vst.msk [vmem:[#allocation2] sm:$0xf] %vm636, %v635
          %v639 = vunpack.c.l.b16 %v635
          %v640 = vpack.c.b16 %v639, %v639
          %641 = vrot.lane.b32.xlu0 %v640, 96
          %v642 = vpop.permute.xlu0 %641
          %644 = vst.msk [vmem:[#allocation3] sm:$0xf] %vm636, %v642
        $region84: #{decoder_layer_forward.3} parent=63 // pred_fallthru
          _
        %v645 = vld [vmem:[%s535] sm:$0xff]
        %v646 = vpack.c.bf16 %v645, %v645
        %v647 = vld [vmem:[#allocation4] sm:$0xf]
        %v648 = vld [vmem:[#allocation4 + $0x4] sm:$0xf]
        %v649 = vld [vmem:[#allocation4 + $0x8] sm:$0xf]
        %v650 = vld [vmem:[#allocation4 + $0xc] sm:$0xf]
        %v651 = vld [vmem:[%s4] sm:$0x1]
        %v653 = vlaneseq
        %v654 = vshrl.u32 %v653, 7
        %v655 = vsub.s32 0, %v654
        %v656 = vrot.slane %v651, %v655
        %v662 = vunpack.c.l.b16 %v647
        %v663 = vunpack.c.l.b16 %v648
        %v664 = vunpack.c.l.b16 %v649
        %v665 = vunpack.c.l.b16 %v650
        %v666 = vpack.c.b16 %v663, %v662
        %v667 = vpack.c.b16 %v665, %v664
        %vm670 = vcmask 261120
        %v672 = vsel %vm670, %v646, 0
        %674 = vmatprep.subr.bf16.mxu0 0
        %675 = vmatpush1.bf16.msra.mxu0 %v666
        %676 = vmatprep.subr.bf16.mxu0 0
        %677 = vmatpush1.bf16.msra.mxu0 %v667
        %678 = vmatprep.subr.bf16.mxu0 0
        %679 = vmatpush1.bf16.msra.mxu0 0
        %680 = vmatprep.subr.bf16.mxu0 0
        %681 = vmatpush1.bf16.msra.mxu0 0
        %682 = vmatprep.subr.bf16.mxu0 0
        %683 = vmatpush1.bf16.msra.mxu0 0
        %684 = vmatprep.subr.bf16.mxu0 0
        %685 = vmatpush1.bf16.msra.mxu0 0
        %686 = vmatprep.subr.bf16.mxu0 0
        %687 = vmatpush1.bf16.msra.mxu0 0
        %688 = vmatprep.subr.bf16.mxu0 0
        %689 = vmatpush1.bf16.msra.mxu0 0
        %690 = vmatprep.subr.bf16.mxu0 0
        %691 = vmatpush1.bf16.msra.mxu0 0
        %692 = vmatprep.subr.bf16.mxu0 0
        %693 = vmatpush1.bf16.msra.mxu0 0
        %694 = vmatprep.subr.bf16.mxu0 0
        %695 = vmatpush1.bf16.msra.mxu0 0
        %696 = vmatprep.subr.bf16.mxu0 0
        %697 = vmatpush1.bf16.msra.mxu0 0
        %698 = vmatprep.subr.bf16.mxu0 0
        %699 = vmatpush1.bf16.msra.mxu0 0
        %700 = vmatprep.subr.bf16.mxu0 0
        %701 = vmatpush1.bf16.msra.mxu0 0
        %702 = vmatprep.subr.bf16.mxu0 0
        %703 = vmatpush1.bf16.msra.mxu0 0
        %704 = vmatprep.subr.bf16.mxu0 0
        %705 = vmatpush1.bf16.msra.mxu0 0
        %706 = vmatprep.mubr.bf16.mxu0 0
        %707 = vmatmul.mubr.bf16.gmra.mrb[0].mxu0 %v672
        %v708 = vpop.f32.mrb[0].mxu0
        %v709 = vadd.f32 %v656, %v708
        %v710 = vpop.f32.mrb[0].mxu0
        %v711 = vpop.f32.mrb[0].mxu0
        %v712 = vpop.f32.mrb[0].mxu0
        %713 = vdwg.mxu0
        %v714 = vld [vmem:[%s546] sm:$0xff]
        %vm715 = vcmp.gt.f32.partialorder %v714, 0.0
        %v716 = vld [vmem:[#allocation2] sm:$0xf]
        %v717 = vld [vmem:[#allocation3] sm:$0xf]
        %v718 = vld [vmem:[#allocation9] sm:$0xf]
        %v719 = vld [vmem:[#allocation9 + $0x4] sm:$0xf]
        %v720 = vld [vmem:[#allocation9 + $0x8] sm:$0xf]
        %v721 = vld [vmem:[#allocation9 + $0xc] sm:$0xf]
        %v722 = vpack.c.bf16 %v709, %v709
        %vm723 = vcmask 64512
        %v725 = vsel %vm723, %v722, 0
        %v728 = vsel %vm723, %v716, 0
        %730 = vmatprep.subr.bf16.mxu0 0
        %731 = vmatpush1.bf16.xpose.msra.mxu0 %v728
        %732 = vmatprep.subr.bf16.mxu0 0
        %733 = vmatpush1.bf16.xpose.msra.mxu0 0
        %734 = vmatprep.subr.bf16.mxu0 0
        %735 = vmatpush1.bf16.xpose.msra.mxu0 0
        %736 = vmatprep.subr.bf16.mxu0 0
        %737 = vmatpush1.bf16.xpose.msra.mxu0 0
        %738 = vmatprep.subr.bf16.mxu0 0
        %739 = vmatpush1.bf16.xpose.msra.mxu0 0
        %740 = vmatprep.subr.bf16.mxu0 0
        %741 = vmatpush1.bf16.xpose.msra.mxu0 0
        %742 = vmatprep.subr.bf16.mxu0 0
        %743 = vmatpush1.bf16.xpose.msra.mxu0 0
        %744 = vmatprep.subr.bf16.mxu0 0
        %745 = vmatpush1.bf16.xpose.msra.mxu0 0
        %746 = vmatprep.subr.bf16.mxu0 0
        %747 = vmatpush1.bf16.xpose.msra.mxu0 0
        %748 = vmatprep.subr.bf16.mxu0 0
        %749 = vmatpush1.bf16.xpose.msra.mxu0 0
        %750 = vmatprep.subr.bf16.mxu0 0
        %751 = vmatpush1.bf16.xpose.msra.mxu0 0
        %752 = vmatprep.subr.bf16.mxu0 0
        %753 = vmatpush1.bf16.xpose.msra.mxu0 0
        %754 = vmatprep.subr.bf16.mxu0 0
        %755 = vmatpush1.bf16.xpose.msra.mxu0 0
        %756 = vmatprep.subr.bf16.mxu0 0
        %757 = vmatpush1.bf16.xpose.msra.mxu0 0
        %758 = vmatprep.subr.bf16.mxu0 0
        %759 = vmatpush1.bf16.xpose.msra.mxu0 0
        %760 = vmatprep.subr.bf16.mxu0 0
        %761 = vmatpush1.bf16.xpose.msra.mxu0 0
        %762 = vmatprep.mubr.bf16.mxu0 0
        %763 = vmatmul.mubr.bf16.gmra.mrb[0].mxu0 %v725
        %v764 = vpop.f32.mrb[0].mxu0
        %v765 = vadd.f32 0.0, %v764
        %v766 = vpop.f32.mrb[0].mxu0
        %v767 = vpop.f32.mrb[0].mxu0
        %v768 = vpop.f32.mrb[0].mxu0
        %769 = vdwg.mxu0
        %v770 = vsel %vm715, %v765, -1e+09
        %v771 = vsel %vm723, %v770, -inf
        %772 = vmax.xlane.f32.xlu0 %v771
        %v773 = vpop.xlane.xlu0 %772
        %v774 = vsub.f32 %v770, %v773
        %v775 = vmul.f32 %v774, 1.442695
        %v776 = vpow.pop %v775
        %v777 = vsel %vm723, %v776, 0.0
        %778 = vadd.xlane.f32.xlu0 %v777
        %v779 = vpop.xlane.xlu0 %778
        %v780 = vrcp.pop %v779
        %v781 = vmul.f32 %v776, %v780
        %v782 = vpack.c.bf16 %v781, %v781
        %v784 = vsel %vm723, %v782, 0
        %vm786 = vcmask 1043456
        %v788 = vsel %vm786, %v717, 0
        %790 = vmatprep.subr.bf16.mxu0 0
        %791 = vmatpush1.bf16.msra.mxu0 %v788
        %792 = vmatprep.subr.bf16.mxu0 0
        %793 = vmatpush1.bf16.msra.mxu0 0
        %794 = vmatprep.subr.bf16.mxu0 0
        %795 = vmatpush1.bf16.msra.mxu0 0
        %796 = vmatprep.subr.bf16.mxu0 0
        %797 = vmatpush1.bf16.msra.mxu0 0
        %798 = vmatprep.subr.bf16.mxu0 0
        %799 = vmatpush1.bf16.msra.mxu0 0
        %800 = vmatprep.subr.bf16.mxu0 0
        %801 = vmatpush1.bf16.msra.mxu0 0
        %802 = vmatprep.subr.bf16.mxu0 0
        %803 = vmatpush1.bf16.msra.mxu0 0
        %804 = vmatprep.subr.bf16.mxu0 0
        %805 = vmatpush1.bf16.msra.mxu0 0
        %806 = vmatprep.subr.bf16.mxu0 0
        %807 = vmatpush1.bf16.msra.mxu0 0
        %808 = vmatprep.subr.bf16.mxu0 0
        %809 = vmatpush1.bf16.msra.mxu0 0
        %810 = vmatprep.subr.bf16.mxu0 0
        %811 = vmatpush1.bf16.msra.mxu0 0
        %812 = vmatprep.subr.bf16.mxu0 0
        %813 = vmatpush1.bf16.msra.mxu0 0
        %814 = vmatprep.subr.bf16.mxu0 0
        %815 = vmatpush1.bf16.msra.mxu0 0
        %816 = vmatprep.subr.bf16.mxu0 0
        %817 = vmatpush1.bf16.msra.mxu0 0
        %818 = vmatprep.subr.bf16.mxu0 0
        %819 = vmatpush1.bf16.msra.mxu0 0
        %820 = vmatprep.subr.bf16.mxu0 0
        %821 = vmatpush1.bf16.msra.mxu0 0
        %822 = vmatprep.mubr.bf16.mxu0 0
        %823 = vmatmul.mubr.bf16.gmra.mrb[0].mxu0 %v784
        %v824 = vpop.f32.mrb[0].mxu0
        %v825 = vadd.f32 0.0, %v824
        %v826 = vpop.f32.mrb[0].mxu0
        %v827 = vpop.f32.mrb[0].mxu0
        %v828 = vpop.f32.mrb[0].mxu0
        %829 = vdwg.mxu0
        %v830 = vpack.c.bf16 %v825, %v825
        %832 = vrot.lane.b32.xlu0 %v722, 120
        %v833 = vpop.permute.xlu0 %832
        %v835 = vunpack.c.l.b16 %v716
        %v836 = vpack.c.b16 %v835, %v835
        %837 = vrot.lane.b32.xlu0 %v836, 120
        %v838 = vpop.permute.xlu0 %837
        %v840 = vsel %vm723, %v833, 0
        %v843 = vsel %vm723, %v838, 0
        %845 = vmatprep.subr.bf16.mxu0 0
        %846 = vmatpush1.bf16.xpose.msra.mxu0 %v843
        %847 = vmatprep.subr.bf16.mxu0 0
        %848 = vmatpush1.bf16.xpose.msra.mxu0 0
        %849 = vmatprep.subr.bf16.mxu0 0
        %850 = vmatpush1.bf16.xpose.msra.mxu0 0
        %851 = vmatprep.subr.bf16.mxu0 0
        %852 = vmatpush1.bf16.xpose.msra.mxu0 0
        %853 = vmatprep.subr.bf16.mxu0 0
        %854 = vmatpush1.bf16.xpose.msra.mxu0 0
        %855 = vmatprep.subr.bf16.mxu0 0
        %856 = vmatpush1.bf16.xpose.msra.mxu0 0
        %857 = vmatprep.subr.bf16.mxu0 0
        %858 = vmatpush1.bf16.xpose.msra.mxu0 0
        %859 = vmatprep.subr.bf16.mxu0 0
        %860 = vmatpush1.bf16.xpose.msra.mxu0 0
        %861 = vmatprep.subr.bf16.mxu0 0
        %862 = vmatpush1.bf16.xpose.msra.mxu0 0
        %863 = vmatprep.subr.bf16.mxu0 0
        %864 = vmatpush1.bf16.xpose.msra.mxu0 0
        %865 = vmatprep.subr.bf16.mxu0 0
        %866 = vmatpush1.bf16.xpose.msra.mxu0 0
        %867 = vmatprep.subr.bf16.mxu0 0
        %868 = vmatpush1.bf16.xpose.msra.mxu0 0
        %869 = vmatprep.subr.bf16.mxu0 0
        %870 = vmatpush1.bf16.xpose.msra.mxu0 0
        %871 = vmatprep.subr.bf16.mxu0 0
        %872 = vmatpush1.bf16.xpose.msra.mxu0 0
        %873 = vmatprep.subr.bf16.mxu0 0
        %874 = vmatpush1.bf16.xpose.msra.mxu0 0
        %875 = vmatprep.subr.bf16.mxu0 0
        %876 = vmatpush1.bf16.xpose.msra.mxu0 0
        %877 = vmatprep.mubr.bf16.mxu0 0
        %878 = vmatmul.mubr.bf16.gmra.mrb[0].mxu0 %v840
        %v879 = vpop.f32.mrb[0].mxu0
        %v880 = vadd.f32 0.0, %v879
        %v881 = vpop.f32.mrb[0].mxu0
        %v882 = vpop.f32.mrb[0].mxu0
        %v883 = vpop.f32.mrb[0].mxu0
        %884 = vdwg.mxu0
        %v885 = vsel %vm715, %v880, -1e+09
        %v886 = vsel %vm723, %v885, -inf
        %887 = vmax.xlane.f32.xlu0 %v886
        %v888 = vpop.xlane.xlu0 %887
        %v889 = vsub.f32 %v885, %v888
        %v890 = vmul.f32 %v889, 1.442695
        %v891 = vpow.pop %v890
        %v892 = vsel %vm723, %v891, 0.0
        %893 = vadd.xlane.f32.xlu0 %v892
        %v894 = vpop.xlane.xlu0 %893
        %v895 = vrcp.pop %v894
        %v896 = vmul.f32 %v891, %v895
        %v897 = vpack.c.bf16 %v896, %v896
        %v899 = vunpack.c.l.b16 %v717
        %v900 = vpack.c.b16 %v899, %v899
        %901 = vrot.lane.b32.xlu0 %v900, 120
        %v902 = vpop.permute.xlu0 %901
        %v904 = vsel %vm723, %v897, 0
        %v907 = vsel %vm786, %v902, 0
        %909 = vmatprep.subr.bf16.mxu0 0
        %910 = vmatpush1.bf16.msra.mxu0 %v907
        %911 = vmatprep.subr.bf16.mxu0 0
        %912 = vmatpush1.bf16.msra.mxu0 0
        %913 = vmatprep.subr.bf16.mxu0 0
        %914 = vmatpush1.bf16.msra.mxu0 0
        %915 = vmatprep.subr.bf16.mxu0 0
        %916 = vmatpush1.bf16.msra.mxu0 0
        %917 = vmatprep.subr.bf16.mxu0 0
        %918 = vmatpush1.bf16.msra.mxu0 0
        %919 = vmatprep.subr.bf16.mxu0 0
        %920 = vmatpush1.bf16.msra.mxu0 0
        %921 = vmatprep.subr.bf16.mxu0 0
        %922 = vmatpush1.bf16.msra.mxu0 0
        %923 = vmatprep.subr.bf16.mxu0 0
        %924 = vmatpush1.bf16.msra.mxu0 0
        %925 = vmatprep.subr.bf16.mxu0 0
        %926 = vmatpush1.bf16.msra.mxu0 0
        %927 = vmatprep.subr.bf16.mxu0 0
        %928 = vmatpush1.bf16.msra.mxu0 0
        %929 = vmatprep.subr.bf16.mxu0 0
        %930 = vmatpush1.bf16.msra.mxu0 0
        %931 = vmatprep.subr.bf16.mxu0 0
        %932 = vmatpush1.bf16.msra.mxu0 0
        %933 = vmatprep.subr.bf16.mxu0 0
        %934 = vmatpush1.bf16.msra.mxu0 0
        %935 = vmatprep.subr.bf16.mxu0 0
        %936 = vmatpush1.bf16.msra.mxu0 0
        %937 = vmatprep.subr.bf16.mxu0 0
        %938 = vmatpush1.bf16.msra.mxu0 0
        %939 = vmatprep.subr.bf16.mxu0 0
        %940 = vmatpush1.bf16.msra.mxu0 0
        %941 = vmatprep.mubr.bf16.mxu0 0
        %942 = vmatmul.mubr.bf16.gmra.mrb[0].mxu0 %v904
        %v943 = vpop.f32.mrb[0].mxu0
        %v944 = vadd.f32 0.0, %v943
        %v945 = vpop.f32.mrb[0].mxu0
        %v946 = vpop.f32.mrb[0].mxu0
        %v947 = vpop.f32.mrb[0].mxu0
        %948 = vdwg.mxu0
        %v949 = vpack.c.bf16 %v944, %v944
        %v951 = vsel %vm723, %v949, 0
        %v954 = vsel %vm786, %v719, 0
        %956 = vmatprep.subr.bf16.mxu0 0
        %957 = vmatpush1.bf16.msra.mxu0 %v954
        %958 = vmatprep.subr.bf16.mxu0 0
        %959 = vmatpush1.bf16.msra.mxu0 0
        %960 = vmatprep.subr.bf16.mxu0 0
        %961 = vmatpush1.bf16.msra.mxu0 0
        %962 = vmatprep.subr.bf16.mxu0 0
        %963 = vmatpush1.bf16.msra.mxu0 0
        %964 = vmatprep.subr.bf16.mxu0 0
        %965 = vmatpush1.bf16.msra.mxu0 0
        %966 = vmatprep.subr.bf16.mxu0 0
        %967 = vmatpush1.bf16.msra.mxu0 0
        %968 = vmatprep.subr.bf16.mxu0 0
        %969 = vmatpush1.bf16.msra.mxu0 0
        %970 = vmatprep.subr.bf16.mxu0 0
        %971 = vmatpush1.bf16.msra.mxu0 0
        %972 = vmatprep.subr.bf16.mxu0 0
        %973 = vmatpush1.bf16.msra.mxu0 0
        %974 = vmatprep.subr.bf16.mxu0 0
        %975 = vmatpush1.bf16.msra.mxu0 0
        %976 = vmatprep.subr.bf16.mxu0 0
        %977 = vmatpush1.bf16.msra.mxu0 0
        %978 = vmatprep.subr.bf16.mxu0 0
        %979 = vmatpush1.bf16.msra.mxu0 0
        %980 = vmatprep.subr.bf16.mxu0 0
        %981 = vmatpush1.bf16.msra.mxu0 0
        %982 = vmatprep.subr.bf16.mxu0 0
        %983 = vmatpush1.bf16.msra.mxu0 0
        %984 = vmatprep.subr.bf16.mxu0 0
        %985 = vmatpush1.bf16.msra.mxu0 0
        %986 = vmatprep.subr.bf16.mxu0 0
        %987 = vmatpush1.bf16.msra.mxu0 0
        %988 = vmatprep.mubr.bf16.mxu0 0
        %989 = vmatmul.mubr.bf16.gmra.mrb[0].mxu0 %v951
        %v990 = vpop.f32.mrb[0].mxu0
        %v991 = vadd.f32 0.0, %v990
        %v992 = vpop.f32.mrb[0].mxu0
        %v993 = vpop.f32.mrb[0].mxu0
        %v994 = vpop.f32.mrb[0].mxu0
        %995 = vdwg.mxu0
        %v997 = vsel %vm723, %v830, 0
        %v1000 = vsel %vm786, %v718, 0
        %1002 = vmatprep.subr.bf16.mxu0 0
        %1003 = vmatpush1.bf16.msra.mxu0 %v1000
        %1004 = vmatprep.subr.bf16.mxu0 0
        %1005 = vmatpush1.bf16.msra.mxu0 0
        %1006 = vmatprep.subr.bf16.mxu0 0
        %1007 = vmatpush1.bf16.msra.mxu0 0
        %1008 = vmatprep.subr.bf16.mxu0 0
        %1009 = vmatpush1.bf16.msra.mxu0 0
        %1010 = vmatprep.subr.bf16.mxu0 0
        %1011 = vmatpush1.bf16.msra.mxu0 0
        %1012 = vmatprep.subr.bf16.mxu0 0
        %1013 = vmatpush1.bf16.msra.mxu0 0
        %1014 = vmatprep.subr.bf16.mxu0 0
        %1015 = vmatpush1.bf16.msra.mxu0 0
        %1016 = vmatprep.subr.bf16.mxu0 0
        %1017 = vmatpush1.bf16.msra.mxu0 0
        %1018 = vmatprep.subr.bf16.mxu0 0
        %1019 = vmatpush1.bf16.msra.mxu0 0
        %1020 = vmatprep.subr.bf16.mxu0 0
        %1021 = vmatpush1.bf16.msra.mxu0 0
        %1022 = vmatprep.subr.bf16.mxu0 0
        %1023 = vmatpush1.bf16.msra.mxu0 0
        %1024 = vmatprep.subr.bf16.mxu0 0
        %1025 = vmatpush1.bf16.msra.mxu0 0
        %1026 = vmatprep.subr.bf16.mxu0 0
        %1027 = vmatpush1.bf16.msra.mxu0 0
        %1028 = vmatprep.subr.bf16.mxu0 0
        %1029 = vmatpush1.bf16.msra.mxu0 0
        %1030 = vmatprep.subr.bf16.mxu0 0
        %1031 = vmatpush1.bf16.msra.mxu0 0
        %1032 = vmatprep.subr.bf16.mxu0 0
        %1033 = vmatpush1.bf16.msra.mxu0 0
        %1034 = vmatprep.mubr.bf16.mxu0 0
        %1035 = vmatmul.mubr.bf16.gmra.mrb[0].mxu0 %v997
        %v1036 = vpop.f32.mrb[0].mxu0
        %v1037 = vadd.f32 %v991, %v1036
        %v1038 = vpop.f32.mrb[0].mxu0
        %v1039 = vpop.f32.mrb[0].mxu0
        %v1040 = vpop.f32.mrb[0].mxu0
        %1041 = vdwg.mxu0
        %1042 = vrot.lane.b32.xlu0 %v722, 112
        %v1043 = vpop.permute.xlu0 %1042
        %1044 = vrot.lane.b32.xlu0 %v836, 112
        %v1045 = vpop.permute.xlu0 %1044
        %v1047 = vsel %vm723, %v1043, 0
        %v1050 = vsel %vm723, %v1045, 0
        %1052 = vmatprep.subr.bf16.mxu0 0
        %1053 = vmatpush1.bf16.xpose.msra.mxu0 %v1050
        %1054 = vmatprep.subr.bf16.mxu0 0
        %1055 = vmatpush1.bf16.xpose.msra.mxu0 0
        %1056 = vmatprep.subr.bf16.mxu0 0
        %1057 = vmatpush1.bf16.xpose.msra.mxu0 0
        %1058 = vmatprep.subr.bf16.mxu0 0
        %1059 = vmatpush1.bf16.xpose.msra.mxu0 0
        %1060 = vmatprep.subr.bf16.mxu0 0
        %1061 = vmatpush1.bf16.xpose.msra.mxu0 0
        %1062 = vmatprep.subr.bf16.mxu0 0
        %1063 = vmatpush1.bf16.xpose.msra.mxu0 0
        %1064 = vmatprep.subr.bf16.mxu0 0
        %1065 = vmatpush1.bf16.xpose.msra.mxu0 0
        %1066 = vmatprep.subr.bf16.mxu0 0
        %1067 = vmatpush1.bf16.xpose.msra.mxu0 0
        %1068 = vmatprep.subr.bf16.mxu0 0
        %1069 = vmatpush1.bf16.xpose.msra.mxu0 0
        %1070 = vmatprep.subr.bf16.mxu0 0
        %1071 = vmatpush1.bf16.xpose.msra.mxu0 0
        %1072 = vmatprep.subr.bf16.mxu0 0
        %1073 = vmatpush1.bf16.xpose.msra.mxu0 0
        %1074 = vmatprep.subr.bf16.mxu0 0
        %1075 = vmatpush1.bf16.xpose.msra.mxu0 0
        %1076 = vmatprep.subr.bf16.mxu0 0
        %1077 = vmatpush1.bf16.xpose.msra.mxu0 0
        %1078 = vmatprep.subr.bf16.mxu0 0
        %1079 = vmatpush1.bf16.xpose.msra.mxu0 0
        %1080 = vmatprep.subr.bf16.mxu0 0
        %1081 = vmatpush1.bf16.xpose.msra.mxu0 0
        %1082 = vmatprep.subr.bf16.mxu0 0
        %1083 = vmatpush1.bf16.xpose.msra.mxu0 0
        %1084 = vmatprep.mubr.bf16.mxu0 0
        %1085 = vmatmul.mubr.bf16.gmra.mrb[0].mxu0 %v1047
        %v1086 = vpop.f32.mrb[0].mxu0
        %v1087 = vadd.f32 0.0, %v1086
        %v1088 = vpop.f32.mrb[0].mxu0
        %v1089 = vpop.f32.mrb[0].mxu0
        %v1090 = vpop.f32.mrb[0].mxu0
        %1091 = vdwg.mxu0
        %v1092 = vsel %vm715, %v1087, -1e+09
        %v1093 = vsel %vm723, %v1092, -inf
        %1094 = vmax.xlane.f32.xlu0 %v1093
        %v1095 = vpop.xlane.xlu0 %1094
        %v1096 = vsub.f32 %v1092, %v1095
        %v1097 = vmul.f32 %v1096, 1.442695
        %v1098 = vpow.pop %v1097
        %v1099 = vsel %vm723, %v1098, 0.0
        %1100 = vadd.xlane.f32.xlu0 %v1099
        %v1101 = vpop.xlane.xlu0 %1100
        %v1102 = vrcp.pop %v1101
        %v1103 = vmul.f32 %v1098, %v1102
        %v1104 = vpack.c.bf16 %v1103, %v1103
        %1105 = vrot.lane.b32.xlu0 %v900, 112
        %v1106 = vpop.permute.xlu0 %1105
        %v1108 = vsel %vm723, %v1104, 0
        %v1111 = vsel %vm786, %v1106, 0
        %1113 = vmatprep.subr.bf16.mxu0 0
        %1114 = vmatpush1.bf16.msra.mxu0 %v1111
        %1115 = vmatprep.subr.bf16.mxu0 0
        %1116 = vmatpush1.bf16.msra.mxu0 0
        %1117 = vmatprep.subr.bf16.mxu0 0
        %1118 = vmatpush1.bf16.msra.mxu0 0
        %1119 = vmatprep.subr.bf16.mxu0 0
        %1120 = vmatpush1.bf16.msra.mxu0 0
        %1121 = vmatprep.subr.bf16.mxu0 0
        %1122 = vmatpush1.bf16.msra.mxu0 0
        %1123 = vmatprep.subr.bf16.mxu0 0
        %1124 = vmatpush1.bf16.msra.mxu0 0
        %1125 = vmatprep.subr.bf16.mxu0 0
        %1126 = vmatpush1.bf16.msra.mxu0 0
        %1127 = vmatprep.subr.bf16.mxu0 0
        %1128 = vmatpush1.bf16.msra.mxu0 0
        %1129 = vmatprep.subr.bf16.mxu0 0
        %1130 = vmatpush1.bf16.msra.mxu0 0
        %1131 = vmatprep.subr.bf16.mxu0 0
        %1132 = vmatpush1.bf16.msra.mxu0 0
        %1133 = vmatprep.subr.bf16.mxu0 0
        %1134 = vmatpush1.bf16.msra.mxu0 0
        %1135 = vmatprep.subr.bf16.mxu0 0
        %1136 = vmatpush1.bf16.msra.mxu0 0
        %1137 = vmatprep.subr.bf16.mxu0 0
        %1138 = vmatpush1.bf16.msra.mxu0 0
        %1139 = vmatprep.subr.bf16.mxu0 0
        %1140 = vmatpush1.bf16.msra.mxu0 0
        %1141 = vmatprep.subr.bf16.mxu0 0
        %1142 = vmatpush1.bf16.msra.mxu0 0
        %1143 = vmatprep.subr.bf16.mxu0 0
        %1144 = vmatpush1.bf16.msra.mxu0 0
        %1145 = vmatprep.mubr.bf16.mxu0 0
        %1146 = vmatmul.mubr.bf16.gmra.mrb[0].mxu0 %v1108
        %v1147 = vpop.f32.mrb[0].mxu0
        %v1148 = vadd.f32 0.0, %v1147
        %v1149 = vpop.f32.mrb[0].mxu0
        %v1150 = vpop.f32.mrb[0].mxu0
        %v1151 = vpop.f32.mrb[0].mxu0
        %1152 = vdwg.mxu0
        %v1153 = vpack.c.bf16 %v1148, %v1148
        %v1155 = vsel %vm723, %v1153, 0
        %v1158 = vsel %vm786, %v720, 0
        %1160 = vmatprep.subr.bf16.mxu0 0
        %1161 = vmatpush1.bf16.msra.mxu0 %v1158
        %1162 = vmatprep.subr.bf16.mxu0 0
        %1163 = vmatpush1.bf16.msra.mxu0 0
        %1164 = vmatprep.subr.bf16.mxu0 0
        %1165 = vmatpush1.bf16.msra.mxu0 0
        %1166 = vmatprep.subr.bf16.mxu0 0
        %1167 = vmatpush1.bf16.msra.mxu0 0
        %1168 = vmatprep.subr.bf16.mxu0 0
        %1169 = vmatpush1.bf16.msra.mxu0 0
        %1170 = vmatprep.subr.bf16.mxu0 0
        %1171 = vmatpush1.bf16.msra.mxu0 0
        %1172 = vmatprep.subr.bf16.mxu0 0
        %1173 = vmatpush1.bf16.msra.mxu0 0
        %1174 = vmatprep.subr.bf16.mxu0 0
        %1175 = vmatpush1.bf16.msra.mxu0 0
        %1176 = vmatprep.subr.bf16.mxu0 0
        %1177 = vmatpush1.bf16.msra.mxu0 0
        %1178 = vmatprep.subr.bf16.mxu0 0
        %1179 = vmatpush1.bf16.msra.mxu0 0
        %1180 = vmatprep.subr.bf16.mxu0 0
        %1181 = vmatpush1.bf16.msra.mxu0 0
        %1182 = vmatprep.subr.bf16.mxu0 0
        %1183 = vmatpush1.bf16.msra.mxu0 0
        %1184 = vmatprep.subr.bf16.mxu0 0
        %1185 = vmatpush1.bf16.msra.mxu0 0
        %1186 = vmatprep.subr.bf16.mxu0 0
        %1187 = vmatpush1.bf16.msra.mxu0 0
        %1188 = vmatprep.subr.bf16.mxu0 0
        %1189 = vmatpush1.bf16.msra.mxu0 0
        %1190 = vmatprep.subr.bf16.mxu0 0
        %1191 = vmatpush1.bf16.msra.mxu0 0
        %1192 = vmatprep.mubr.bf16.mxu0 0
        %1193 = vmatmul.mubr.bf16.gmra.mrb[0].mxu0 %v1155
        %v1194 = vpop.f32.mrb[0].mxu0
        %v1195 = vadd.f32 0.0, %v1194
        %v1196 = vpop.f32.mrb[0].mxu0
        %v1197 = vpop.f32.mrb[0].mxu0
        %v1198 = vpop.f32.mrb[0].mxu0
        %1199 = vdwg.mxu0
        %v1200 = vadd.f32 %v1037, %v1195
        %1201 = vrot.lane.b32.xlu0 %v722, 104
        %v1202 = vpop.permute.xlu0 %1201
        %1203 = vrot.lane.b32.xlu0 %v836, 104
        %v1204 = vpop.permute.xlu0 %1203
        %v1206 = vsel %vm723, %v1202, 0
        %v1209 = vsel %vm723, %v1204, 0
        %1211 = vmatprep.subr.bf16.mxu0 0
        %1212 = vmatpush1.bf16.xpose.msra.mxu0 %v1209
        %1213 = vmatprep.subr.bf16.mxu0 0
        %1214 = vmatpush1.bf16.xpose.msra.mxu0 0
        %1215 = vmatprep.subr.bf16.mxu0 0
        %1216 = vmatpush1.bf16.xpose.msra.mxu0 0
        %1217 = vmatprep.subr.bf16.mxu0 0
        %1218 = vmatpush1.bf16.xpose.msra.mxu0 0
        %1219 = vmatprep.subr.bf16.mxu0 0
        %1220 = vmatpush1.bf16.xpose.msra.mxu0 0
        %1221 = vmatprep.subr.bf16.mxu0 0
        %1222 = vmatpush1.bf16.xpose.msra.mxu0 0
        %1223 = vmatprep.subr.bf16.mxu0 0
        %1224 = vmatpush1.bf16.xpose.msra.mxu0 0
        %1225 = vmatprep.subr.bf16.mxu0 0
        %1226 = vmatpush1.bf16.xpose.msra.mxu0 0
        %1227 = vmatprep.subr.bf16.mxu0 0
        %1228 = vmatpush1.bf16.xpose.msra.mxu0 0
        %1229 = vmatprep.subr.bf16.mxu0 0
        %1230 = vmatpush1.bf16.xpose.msra.mxu0 0
        %1231 = vmatprep.subr.bf16.mxu0 0
        %1232 = vmatpush1.bf16.xpose.msra.mxu0 0
        %1233 = vmatprep.subr.bf16.mxu0 0
        %1234 = vmatpush1.bf16.xpose.msra.mxu0 0
        %1235 = vmatprep.subr.bf16.mxu0 0
        %1236 = vmatpush1.bf16.xpose.msra.mxu0 0
        %1237 = vmatprep.subr.bf16.mxu0 0
        %1238 = vmatpush1.bf16.xpose.msra.mxu0 0
        %1239 = vmatprep.subr.bf16.mxu0 0
        %1240 = vmatpush1.bf16.xpose.msra.mxu0 0
        %1241 = vmatprep.subr.bf16.mxu0 0
        %1242 = vmatpush1.bf16.xpose.msra.mxu0 0
        %1243 = vmatprep.mubr.bf16.mxu0 0
        %1244 = vmatmul.mubr.bf16.gmra.mrb[0].mxu0 %v1206
        %v1245 = vpop.f32.mrb[0].mxu0
        %v1246 = vadd.f32 0.0, %v1245
        %v1247 = vpop.f32.mrb[0].mxu0
        %v1248 = vpop.f32.mrb[0].mxu0
        %v1249 = vpop.f32.mrb[0].mxu0
        %1250 = vdwg.mxu0
        %v1251 = vsel %vm715, %v1246, -1e+09
        %v1252 = vsel %vm723, %v1251, -inf
        %1253 = vmax.xlane.f32.xlu0 %v1252
        %v1254 = vpop.xlane.xlu0 %1253
        %v1255 = vsub.f32 %v1251, %v1254
        %v1256 = vmul.f32 %v1255, 1.442695
        %v1257 = vpow.pop %v1256
        %v1258 = vsel %vm723, %v1257, 0.0
        %1259 = vadd.xlane.f32.xlu0 %v1258
        %v1260 = vpop.xlane.xlu0 %1259
        %v1261 = vrcp.pop %v1260
        %v1262 = vmul.f32 %v1257, %v1261
        %v1263 = vpack.c.bf16 %v1262, %v1262
        %1264 = vrot.lane.b32.xlu0 %v900, 104
        %v1265 = vpop.permute.xlu0 %1264
        %v1267 = vsel %vm723, %v1263, 0
        %v1270 = vsel %vm786, %v1265, 0
        %1272 = vmatprep.subr.bf16.mxu0 0
        %1273 = vmatpush1.bf16.msra.mxu0 %v1270
        %1274 = vmatprep.subr.bf16.mxu0 0
        %1275 = vmatpush1.bf16.msra.mxu0 0
        %1276 = vmatprep.subr.bf16.mxu0 0
        %1277 = vmatpush1.bf16.msra.mxu0 0
        %1278 = vmatprep.subr.bf16.mxu0 0
        %1279 = vmatpush1.bf16.msra.mxu0 0
        %1280 = vmatprep.subr.bf16.mxu0 0
        %1281 = vmatpush1.bf16.msra.mxu0 0
        %1282 = vmatprep.subr.bf16.mxu0 0
        %1283 = vmatpush1.bf16.msra.mxu0 0
        %1284 = vmatprep.subr.bf16.mxu0 0
        %1285 = vmatpush1.bf16.msra.mxu0 0
        %1286 = vmatprep.subr.bf16.mxu0 0
        %1287 = vmatpush1.bf16.msra.mxu0 0
        %1288 = vmatprep.subr.bf16.mxu0 0
        %1289 = vmatpush1.bf16.msra.mxu0 0
        %1290 = vmatprep.subr.bf16.mxu0 0
        %1291 = vmatpush1.bf16.msra.mxu0 0
        %1292 = vmatprep.subr.bf16.mxu0 0
        %1293 = vmatpush1.bf16.msra.mxu0 0
        %1294 = vmatprep.subr.bf16.mxu0 0
        %1295 = vmatpush1.bf16.msra.mxu0 0
        %1296 = vmatprep.subr.bf16.mxu0 0
        %1297 = vmatpush1.bf16.msra.mxu0 0
        %1298 = vmatprep.subr.bf16.mxu0 0
        %1299 = vmatpush1.bf16.msra.mxu0 0
        %1300 = vmatprep.subr.bf16.mxu0 0
        %1301 = vmatpush1.bf16.msra.mxu0 0
        %1302 = vmatprep.subr.bf16.mxu0 0
        %1303 = vmatpush1.bf16.msra.mxu0 0
        %1304 = vmatprep.mubr.bf16.mxu0 0
        %1305 = vmatmul.mubr.bf16.gmra.mrb[0].mxu0 %v1267
        %v1306 = vpop.f32.mrb[0].mxu0
        %v1307 = vadd.f32 0.0, %v1306
        %v1308 = vpop.f32.mrb[0].mxu0
        %v1309 = vpop.f32.mrb[0].mxu0
        %v1310 = vpop.f32.mrb[0].mxu0
        %1311 = vdwg.mxu0
        %v1312 = vpack.c.bf16 %v1307, %v1307
        %v1314 = vsel %vm723, %v1312, 0
        %v1317 = vsel %vm786, %v721, 0
        %1319 = vmatprep.subr.bf16.mxu0 0
        %1320 = vmatpush1.bf16.msra.mxu0 %v1317
        %1321 = vmatprep.subr.bf16.mxu0 0
        %1322 = vmatpush1.bf16.msra.mxu0 0
        %1323 = vmatprep.subr.bf16.mxu0 0
        %1324 = vmatpush1.bf16.msra.mxu0 0
        %1325 = vmatprep.subr.bf16.mxu0 0
        %1326 = vmatpush1.bf16.msra.mxu0 0
        %1327 = vmatprep.subr.bf16.mxu0 0
        %1328 = vmatpush1.bf16.msra.mxu0 0
        %1329 = vmatprep.subr.bf16.mxu0 0
        %1330 = vmatpush1.bf16.msra.mxu0 0
        %1331 = vmatprep.subr.bf16.mxu0 0
        %1332 = vmatpush1.bf16.msra.mxu0 0
        %1333 = vmatprep.subr.bf16.mxu0 0
        %1334 = vmatpush1.bf16.msra.mxu0 0
        %1335 = vmatprep.subr.bf16.mxu0 0
        %1336 = vmatpush1.bf16.msra.mxu0 0
        %1337 = vmatprep.subr.bf16.mxu0 0
        %1338 = vmatpush1.bf16.msra.mxu0 0
        %1339 = vmatprep.subr.bf16.mxu0 0
        %1340 = vmatpush1.bf16.msra.mxu0 0
        %1341 = vmatprep.subr.bf16.mxu0 0
        %1342 = vmatpush1.bf16.msra.mxu0 0
        %1343 = vmatprep.subr.bf16.mxu0 0
        %1344 = vmatpush1.bf16.msra.mxu0 0
        %1345 = vmatprep.subr.bf16.mxu0 0
        %1346 = vmatpush1.bf16.msra.mxu0 0
        %1347 = vmatprep.subr.bf16.mxu0 0
        %1348 = vmatpush1.bf16.msra.mxu0 0
        %1349 = vmatprep.subr.bf16.mxu0 0
        %1350 = vmatpush1.bf16.msra.mxu0 0
        %1351 = vmatprep.mubr.bf16.mxu0 0
        %1352 = vmatmul.mubr.bf16.gmra.mrb[0].mxu0 %v1314
        %v1353 = vpop.f32.mrb[0].mxu0
        %v1354 = vadd.f32 0.0, %v1353
        %v1355 = vpop.f32.mrb[0].mxu0
        %v1356 = vpop.f32.mrb[0].mxu0
        %v1357 = vpop.f32.mrb[0].mxu0
        %1358 = vdwg.mxu0
        %v1359 = vadd.f32 %v1200, %v1354
        %v1360 = vld [vmem:[%s8] sm:$0x1]
        %v1362 = vlaneseq
        %v1363 = vshrl.u32 %v1362, 7
        %v1364 = vsub.s32 0, %v1363
        %v1365 = vrot.slane %v1360, %v1364
        %v1367 = vadd.f32 %v1359, %v1365
        %v1368 = vpack.c.bf16 %v1367, %v1367
        %vm1369 = vcmask 257024
        %1370 = vst.msk [vmem:[%s553] sm:$0xf] %vm1369, %v1368
        %v1371 = vld [vmem:[%s535] sm:$0xff]
        %v1372 = vadd.f32 %v1371, %v1367
        %v1373 = vsel %vm670, %v1372, 0.0
        %1374 = vadd.xlane.f32.xlu0 %v1373
        %v1375 = vpop.xlane.xlu0 %1374
        %v1376 = vrcp.pop 32.0
        %v1377 = vmul.f32 %v1375, %v1376
        %v1378 = vsub.f32 %v1372, %v1377
        %v1379 = vmul.f32 %v1378, %v1378
        %v1380 = vsel %vm670, %v1379, 0.0
        %1381 = vadd.xlane.f32.xlu0 %v1380
        %v1382 = vpop.xlane.xlu0 %1381
        %v1383 = vmul.f32 %v1382, %v1376
        %v1384 = vadd.f32 %v1383, 1e-05
        %v1385 = vrsqrt.pop %v1384
        %v1386 = vmul.f32 %v1378, %v1385
        %v1387 = vld [vmem:[%s9] sm:$0x1]
        %v1389 = vlaneseq
        %v1390 = vshrl.u32 %v1389, 7
        %v1391 = vsub.s32 0, %v1390
        %v1392 = vrot.slane %v1387, %v1391
        %v1394 = vmul.f32 %v1386, %v1392
        %v1395 = vld [vmem:[%s10] sm:$0x1]
        %v1397 = vlaneseq
        %v1398 = vshrl.u32 %v1397, 7
        %v1399 = vsub.s32 0, %v1398
        %v1400 = vrot.slane %v1395, %v1399
        %v1402 = vadd.f32 %v1394, %v1400
        %1403 = vst.msk [vmem:[%s560] sm:$0xff] %vm670, %v1402
        %p1404 = scmp.lt.s32.totalorder %s31, 1
        %s1405 = scalar_select %p1404, %s31, 1
        %p1406 = scmp.lt.s32.totalorder %s32, 0
        %s1407 = scalar_select %p1406, %s32, 0
        %s1408 = sadd.s32 %s1407, %s1405
        %s1409 = smul.addr %s1408, 4
        %s1410 = scalar_lea.vmem %s11, %s1409
        %p1411 = scmp.lt.s32.totalorder %s31, 1
        %s1412 = scalar_select %p1411, %s31, 1
        %p1413 = scmp.lt.s32.totalorder %s32, 0
        %s1414 = scalar_select %p1413, %s32, 0
        %s1415 = sadd.s32 %s1414, %s1412
        %s1416 = smul.addr %s1415, 8
        %s1417 = scalar_lea.vmem %s12, %s1416
        // Predicated region
        $region85: #{decoder_layer_forward.3} parent=63 // pred_check
          %p1418 = pneg %p309
        $region86: #{decoder_layer_forward.3} parent=63 // pred_check_branch
          %1420 = sbr.rel (%p1418) target = $region88
        $region87: #{decoder_layer_forward.3} parent=63 // pred_region
          _
        $region88: #{decoder_layer_forward.3} parent=63 // pred_fallthru
          _
        // Predicated region
        $region89: #{decoder_layer_forward.3} parent=63 // pred_check
          %p1421 = pneg %p337
        $region90: #{decoder_layer_forward.3} parent=63 // pred_check_branch
          %1423 = sbr.rel (%p1421) target = $region92
        $region91: #{decoder_layer_forward.3} parent=63 // pred_region
          _
        $region92: #{decoder_layer_forward.3} parent=63 // pred_fallthru
          _
      $region64: #{decoder_layer_forward.3} parent=5 // pred_fallthru
        _
      %p1424 = scmp.le.s32.totalorder 2, %s22
      // Predicated region
      $region93: #{decoder_layer_forward.3} parent=5 // pred_check
        %p1425 = pneg %p1424
      $region94: #{decoder_layer_forward.3} parent=5 // pred_check_branch
        %1427 = sbr.rel (%p1425) target = $region96
      $region95: #{decoder_layer_forward.3} parent=5 // pred_region
        %s1428 = ssub.s32 %s22, 2
        // Predicated region
        $region97: #{decoder_layer_forward.3} parent=95 // pred_check
          %p1429 = pneg %p315
        $region98: #{decoder_layer_forward.3} parent=95 // pred_check_branch
          %1431 = sbr.rel (%p1429) target = $region100
        $region99: #{decoder_layer_forward.3} parent=95 // pred_region
          %p1432 = scmp.lt.s32.totalorder %s33, 1
          %s1433 = scalar_select %p1432, %s33, 1
          %p1434 = scmp.lt.s32.totalorder %s34, 0
          %s1435 = scalar_select %p1434, %s34, 0
          %s1436 = sadd.s32 %s1435, %s1433
          %s1437 = smul.addr %s1436, 4
          %s1438 = scalar_lea.vmem %s11, %s1437
        $region100: #{decoder_layer_forward.3} parent=95 // pred_fallthru
          _
        // Predicated region
        $region101: #{decoder_layer_forward.3} parent=95 // pred_check
          %p1439 = pneg %p343
        $region102: #{decoder_layer_forward.3} parent=95 // pred_check_branch
          %1441 = sbr.rel (%p1439) target = $region104
        $region103: #{decoder_layer_forward.3} parent=95 // pred_region
          %p1442 = scmp.lt.s32.totalorder %s33, 1
          %s1443 = scalar_select %p1442, %s33, 1
          %p1444 = scmp.lt.s32.totalorder %s34, 0
          %s1445 = scalar_select %p1444, %s34, 0
          %s1446 = sadd.s32 %s1445, %s1443
          %s1447 = smul.addr %s1446, 8
          %s1448 = scalar_lea.vmem %s12, %s1447
        $region104: #{decoder_layer_forward.3} parent=95 // pred_fallthru
          _
      $region96: #{decoder_layer_forward.3} parent=5 // pred_fallthru
        _
    $region6: #{decoder_layer_forward.3} parent=1 // loop_footer
      %s26 = sadd.s32 1, %s22
    $region7: #{decoder_layer_forward.3} parent=1 // loop_footer_branch
      %21 = sbr.rel target = $region3
    $region8: #{decoder_layer_forward.3} parent=1 // loop_exit
      _
    %1449 = vsyncpa [#allocation5], 1
    %s1450 = scalar_lea.sflag [#allocation5], 1
    %1451 = vsyncpa %s1450, 1
    %1452 = vsyncpa [#allocation7], 1
    %1453 = vsyncpa [#allocation10], 1

</llo_original>
